<compile_context>
chip_gen: v6e
topology: v6e:2x2x1
jax: 0.10.0
libtpu: 0.0.40
codegen_flags: <defaults>
</compile_context>

<pallas_src>
import functools
import math

import jax
import jax.numpy as jnp
import numpy as np
from jax.experimental import pallas as pl
from jax.experimental.pallas import tpu as pltpu


# ---------------------------------------------------------------------------
# In-kernel building blocks (all operate on 2-D (rows, C) values).
# ---------------------------------------------------------------------------
def _time_conv(a, w_ref, b_ref, group):
    """relu(conv1 + sigmoid(conv2) + conv3), Conv2d kernel (1, 3) over time.

    a     : (T*G, Cin) rows ordered (t, batch, node); group == G == N*V.
    w_ref : (3, Cin, 3*Cout)  tap k, in-channel, [conv1 | conv2 | conv3] cols.
    b_ref : (1, 3*Cout)       [bias1 | bias2 | bias3].
    returns ((T-2)*G, Cout).
    """
    cout = w_ref.shape[2] // 3
    rows = a.shape[0] - 2 * group
    # Tap shifts are 8-aligned row windows of `a` (G = 16): pure register views.
    y = b_ref[...] + jnp.dot(a[0:rows], w_ref[0],
                             preferred_element_type=jnp.float32)
    y = y + jnp.dot(a[group:group + rows], w_ref[1],
                    preferred_element_type=jnp.float32)
    y = y + jnp.dot(a[2 * group:2 * group + rows], w_ref[2],
                    preferred_element_type=jnp.float32)
    c1 = y[:, :cout]
    c2 = y[:, cout:2 * cout]
    c3 = y[:, 2 * cout:]
    sig = pl.reciprocal(1.0 + jnp.exp(-c2), approx=True)  # sigmoid on the EUP
    return jnp.maximum(c1 + sig + c3, 0.0)


def _graph_mix(a, theta_ref, p_ref):
    """relu(node-mix(a @ Theta)).  Theta first shrinks channels 64 -> 16; the
    node mix over V is P = kron(I_{T*N}, adj) acting on the row space."""
    z = jnp.dot(a, theta_ref[...], preferred_element_type=jnp.float32)
    z = jnp.dot(p_ref[...], z, preferred_element_type=jnp.float32)
    return jnp.maximum(z, 0.0)


def _batch_norm(a, s_ref, st_ref, g_ref, b_ref):
    """BatchNorm2d(num_nodes): per-node batch statistics over (batch, time,
    channel), biased variance, eps=1e-5, affine gamma/beta."""
    # TODO(synk): running_mean/running_var buffer updates (stateful training
    # bookkeeping of nn.BatchNorm2d) are not replicated; only the forward
    # normalization with batch statistics is.
    rows, chans = a.shape
    nodes = st_ref.shape[0]
    count = (rows // nodes) * chans                      # N * T * C per node
    sums = jnp.dot(st_ref[...], a, preferred_element_type=jnp.float32)
    sums_sq = jnp.dot(st_ref[...], a * a, preferred_element_type=jnp.float32)
    mean_v = jnp.sum(sums, axis=1, keepdims=True) / count          # (V, 1)
    ex2_v = jnp.sum(sums_sq, axis=1, keepdims=True) / count
    var_v = jnp.maximum(ex2_v - mean_v * mean_v, 0.0)              # biased
    scale_v = jax.lax.rsqrt(var_v + 1e-5) * g_ref[...]
    shift_v = b_ref[...] - mean_v * scale_v
    scale_vc = jnp.broadcast_to(scale_v, (nodes, chans))
    shift_vc = jnp.broadcast_to(shift_v, (nodes, chans))
    scale_r = jnp.dot(s_ref[...], scale_vc, preferred_element_type=jnp.float32)
    shift_r = jnp.dot(s_ref[...], shift_vc, preferred_element_type=jnp.float32)
    return a * scale_r + shift_r


def _head(a, pool_ref, w_ref, b_ref):
    """AdaptiveAvgPool1d(1) over nodes fused with the final Linear."""
    t_final = pool_ref.shape[0]
    n_out = w_ref.shape[2]
    acc = jnp.zeros((pool_ref.shape[1], n_out), jnp.float32)
    for t in range(t_final):                              # static unroll (== 2)
        pooled = jnp.dot(pool_ref[t], a, preferred_element_type=jnp.float32)
        acc = acc + jnp.dot(pooled, w_ref[t], preferred_element_type=jnp.float32)
    return acc + b_ref[...]


# ---------------------------------------------------------------------------
# The single fused forward kernel.
# ---------------------------------------------------------------------------
def _forward_kernel(x_ref,
                    w11_ref, b11_ref, th1_ref, p1_ref, w12_ref, b12_ref,
                    s1_ref, st1_ref, g1_ref, be1_ref,
                    w21_ref, b21_ref, th2_ref, p2_ref, w22_ref, b22_ref,
                    s2_ref, st2_ref, g2_ref, be2_ref,
                    wtf_ref, btf_ref, pool_ref, fcw_ref, fcb_ref,
                    out_ref, *, batch, num_nodes):
    group = batch * num_nodes
    h = x_ref[...]                                        # (T*G, F)
    # ---- block 1 ----
    h = _time_conv(h, w11_ref, b11_ref, group)
    h = _graph_mix(h, th1_ref, p1_ref)
    h = _time_conv(h, w12_ref, b12_ref, group)
    h = _batch_norm(h, s1_ref, st1_ref, g1_ref, be1_ref)
    # ---- block 2 ----
    h = _time_conv(h, w21_ref, b21_ref, group)
    h = _graph_mix(h, th2_ref, p2_ref)
    h = _time_conv(h, w22_ref, b22_ref, group)
    h = _batch_norm(h, s2_ref, st2_ref, g2_ref, be2_ref)
    # ---- final TimeConv + pooled linear head ----
    h = _time_conv(h, wtf_ref, btf_ref, group)
    out_ref[...] = _head(h, pool_ref, fcw_ref, fcb_ref)


# ---------------------------------------------------------------------------
# Wrapper: only parameter-sized prep (selector / kron matrices) in XLA.
# ---------------------------------------------------------------------------
def asl_stgcn_forward(X, params):
    # X: (N, num_timesteps, num_nodes, num_features), as in the PyTorch module.
    N, T, V, F = X.shape
    G = N * V
    adj = params["adj"]

    # Row-major (t, n, v) flattening of the input (one tiny transpose); every
    # later layout change happens inside the fused kernel as register views.
    x_rows = jnp.transpose(X, (1, 0, 2, 3)).reshape(T * G, F)

    def node_selector(t_cur):                 # static constants (folded)
        s = np.tile(np.eye(V, dtype=np.float32), (t_cur * N, 1))   # (t*G, V)
        return jnp.asarray(s), jnp.asarray(np.ascontiguousarray(s.T))

    def mix_matrix(t_cur):                    # P = I_{T*N} (x) adj
        return jnp.kron(jnp.eye(t_cur * N, dtype=jnp.float32), adj)

    p1 = mix_matrix(T - 2)
    s1, st1 = node_selector(T - 4)
    p2 = mix_matrix(T - 6)
    s2, st2 = node_selector(T - 8)

    t3 = T - 10
    pool = np.zeros((t3, N, t3 * G), np.float32)
    for t in range(t3):
        for n in range(N):
            pool[t, n, t * G + n * V: t * G + (n + 1) * V] = 1.0 / V
    pool = jnp.asarray(pool)

    b1p, b2p = params["block1"], params["block2"]
    nc = params["fc_b"].shape[-1]

    vmem = pl.BlockSpec(memory_space=pltpu.MemorySpace.VMEM)
    kernel = functools.partial(_forward_kernel, batch=N, num_nodes=V)
    # All operands (<1 MB total) fit in VMEM on v5e/v6e/v7x; a scaled-up model
    # would need tiled BlockSpecs + vmem_limit_bytes instead of whole-array VMEM.
    return pl.pallas_call(
        kernel,
        out_shape=jax.ShapeDtypeStruct((N, nc), jnp.float32),
        in_specs=[vmem] * 26,
        out_specs=vmem,
    )(x_rows,
      b1p["tw1"], b1p["tb1"], b1p["theta"], p1, b1p["tw2"], b1p["tb2"],
      s1, st1, b1p["gamma"], b1p["beta"],
      b2p["tw1"], b2p["tb1"], b2p["theta"], p2, b2p["tw2"], b2p["tb2"],
      s2, st2, b2p["gamma"], b2p["beta"],
      params["time_w"], params["time_b"], pool, params["fc_w"], params["fc_b"])


# ---------------------------------------------------------------------------
# Deterministic parameter init (shapes/dists match the module's __init__).
# ---------------------------------------------------------------------------
def init_params(key, num_classes, num_features, num_timesteps, num_nodes):
    keys = iter(jax.random.split(key, 32))

    def u(shape, scale):
        return jax.random.uniform(next(keys), shape, jnp.float32, -scale, scale)

    def time_conv_params(cin, cout=64):
        # Fused layout: w[k, c, br*cout + o] == torch conv{br+1}.weight[o, c, 0, k]
        # and b[0, br*cout + o] == torch conv{br+1}.bias[o].
        s = 1.0 / math.sqrt(cin * 3)
        return u((3, cin, 3 * cout), s), u((1, 3 * cout), s)

    def block_params(cin):
        w1, b1 = time_conv_params(cin)
        w2, b2 = time_conv_params(16)
        return dict(tw1=w1, tb1=b1,
                    theta=u((64, 16), 1.0 / math.sqrt(16)),
                    tw2=w2, tb2=b2,
                    gamma=jnp.ones((num_nodes, 1), jnp.float32),
                    beta=jnp.zeros((num_nodes, 1), jnp.float32))

    wtf, btf = time_conv_params(64)
    t_final = num_timesteps - 2 * 5
    d = t_final * 64
    return dict(
        adj=jnp.ones((num_nodes, num_nodes), jnp.float32),   # FC graph of ones
        block1=block_params(num_features),
        block2=block_params(64),
        time_w=wtf, time_b=btf,
        # fc_w[t, c, o] == torch fc.weight[o, t*64 + c]  (flatten order (t, c)).
        fc_w=u((t_final, 64, num_classes), 1.0 / math.sqrt(d)),
        fc_b=u((1, num_classes), 1.0 / math.sqrt(d)),
    )


if __name__ == "__main__":
    num_classes, num_features, num_timesteps, num_nodes = 5, 4, 12, 8
    batch = 2
    root = jax.random.PRNGKey(0)
    pkey, xkey = jax.random.split(root)
    params = init_params(pkey, num_classes, num_features, num_timesteps,
                         num_nodes)
    X = jax.random.normal(
        xkey, (batch, num_timesteps, num_nodes, num_features), jnp.float32)

    out = jax.jit(asl_stgcn_forward)(X, params)
    jax.block_until_ready(out)
    assert out.shape == (batch, num_classes), out.shape
    assert bool(jnp.all(jnp.isfinite(out)))
    print("KERNEL_OK")
</pallas_src>

<mosaic_0001>
module attributes {stable_mosaic.version = 11 : i64} {
  func.func @_forward_kernel(%arg0: memref<192x4xf32, #tpu.memory_space<vmem>>, %arg1: memref<3x4x192xf32, #tpu.memory_space<vmem>>, %arg2: memref<1x192xf32, #tpu.memory_space<vmem>>, %arg3: memref<64x16xf32, #tpu.memory_space<vmem>>, %arg4: memref<160x160xf32, #tpu.memory_space<vmem>>, %arg5: memref<3x16x192xf32, #tpu.memory_space<vmem>>, %arg6: memref<1x192xf32, #tpu.memory_space<vmem>>, %arg7: memref<128x8xf32, #tpu.memory_space<vmem>>, %arg8: memref<8x128xf32, #tpu.memory_space<vmem>>, %arg9: memref<8x1xf32, #tpu.memory_space<vmem>>, %arg10: memref<8x1xf32, #tpu.memory_space<vmem>>, %arg11: memref<3x64x192xf32, #tpu.memory_space<vmem>>, %arg12: memref<1x192xf32, #tpu.memory_space<vmem>>, %arg13: memref<64x16xf32, #tpu.memory_space<vmem>>, %arg14: memref<96x96xf32, #tpu.memory_space<vmem>>, %arg15: memref<3x16x192xf32, #tpu.memory_space<vmem>>, %arg16: memref<1x192xf32, #tpu.memory_space<vmem>>, %arg17: memref<64x8xf32, #tpu.memory_space<vmem>>, %arg18: memref<8x64xf32, #tpu.memory_space<vmem>>, %arg19: memref<8x1xf32, #tpu.memory_space<vmem>>, %arg20: memref<8x1xf32, #tpu.memory_space<vmem>>, %arg21: memref<3x64x192xf32, #tpu.memory_space<vmem>>, %arg22: memref<1x192xf32, #tpu.memory_space<vmem>>, %arg23: memref<2x2x32xf32, #tpu.memory_space<vmem>>, %arg24: memref<2x64x5xf32, #tpu.memory_space<vmem>>, %arg25: memref<1x5xf32, #tpu.memory_space<vmem>>, %arg26: memref<2x5xf32, #tpu.memory_space<vmem>>) attributes {dimension_semantics = [], scalar_prefetch = 0 : i64, scratch_operands = 0 : i64, tpu.core_type = #tpu.core_type<tc>} {
    %c0 = arith.constant 0 : index
    %c0_0 = arith.constant 0 : index
    %0 = vector.load %arg0[%c0, %c0_0] : memref<192x4xf32, #tpu.memory_space<vmem>>, vector<192x4xf32>
    %c0_1 = arith.constant 0 : index
    %c0_2 = arith.constant 0 : index
    %1 = vector.load %arg2[%c0_1, %c0_2] : memref<1x192xf32, #tpu.memory_space<vmem>>, vector<1x192xf32>
    %2 = vector.extract_strided_slice %0 {offsets = [0, 0], sizes = [160, 4], strides = [1, 1]} : vector<192x4xf32> to vector<160x4xf32>
    %c0_3 = arith.constant 0 : index
    %c0_4 = arith.constant 0 : index
    %c0_5 = arith.constant 0 : index
    %3 = vector.load %arg1[%c0_3, %c0_4, %c0_5] : memref<3x4x192xf32, #tpu.memory_space<vmem>>, vector<1x4x192xf32>
    %4 = vector.shape_cast %3 : vector<1x4x192xf32> to vector<4x192xf32>
    %cst = arith.constant dense<0.000000e+00> : vector<160x192xf32>
    %5 = tpu.matmul %2, %4, %cst {dimension_numbers = #tpu.dot_dimension_numbers<[1], [0], [0], [1], [0, 0, 1, 1], [], []>} : vector<160x4xf32>, vector<4x192xf32>, vector<160x192xf32> -> vector<160x192xf32>
    %6 = vector.broadcast %1 : vector<1x192xf32> to vector<160x192xf32>
    %7 = arith.addf %6, %5 : vector<160x192xf32>
    %8 = vector.extract_strided_slice %0 {offsets = [16, 0], sizes = [160, 4], strides = [1, 1]} : vector<192x4xf32> to vector<160x4xf32>
    %c1 = arith.constant 1 : index
    %c0_6 = arith.constant 0 : index
    %c0_7 = arith.constant 0 : index
    %9 = vector.load %arg1[%c1, %c0_6, %c0_7] : memref<3x4x192xf32, #tpu.memory_space<vmem>>, vector<1x4x192xf32>
    %10 = vector.shape_cast %9 : vector<1x4x192xf32> to vector<4x192xf32>
    %cst_8 = arith.constant dense<0.000000e+00> : vector<160x192xf32>
    %11 = tpu.matmul %8, %10, %cst_8 {dimension_numbers = #tpu.dot_dimension_numbers<[1], [0], [0], [1], [0, 0, 1, 1], [], []>} : vector<160x4xf32>, vector<4x192xf32>, vector<160x192xf32> -> vector<160x192xf32>
    %12 = arith.addf %7, %11 : vector<160x192xf32>
    %13 = vector.extract_strided_slice %0 {offsets = [32, 0], sizes = [160, 4], strides = [1, 1]} : vector<192x4xf32> to vector<160x4xf32>
    %c2 = arith.constant 2 : index
    %c0_9 = arith.constant 0 : index
    %c0_10 = arith.constant 0 : index
    %14 = vector.load %arg1[%c2, %c0_9, %c0_10] : memref<3x4x192xf32, #tpu.memory_space<vmem>>, vector<1x4x192xf32>
    %15 = vector.shape_cast %14 : vector<1x4x192xf32> to vector<4x192xf32>
    %cst_11 = arith.constant dense<0.000000e+00> : vector<160x192xf32>
    %16 = tpu.matmul %13, %15, %cst_11 {dimension_numbers = #tpu.dot_dimension_numbers<[1], [0], [0], [1], [0, 0, 1, 1], [], []>} : vector<160x4xf32>, vector<4x192xf32>, vector<160x192xf32> -> vector<160x192xf32>
    %17 = arith.addf %12, %16 : vector<160x192xf32>
    %18 = vector.extract_strided_slice %17 {offsets = [0, 0], sizes = [160, 64], strides = [1, 1]} : vector<160x192xf32> to vector<160x64xf32>
    %19 = vector.extract_strided_slice %17 {offsets = [0, 64], sizes = [160, 64], strides = [1, 1]} : vector<160x192xf32> to vector<160x64xf32>
    %20 = vector.extract_strided_slice %17 {offsets = [0, 128], sizes = [160, 64], strides = [1, 1]} : vector<160x192xf32> to vector<160x64xf32>
    %cst_12 = arith.constant 0.000000e+00 : f32
    %21 = vector.broadcast %cst_12 : f32 to vector<160x64xf32>
    %22 = arith.subf %21, %19 : vector<160x64xf32>
    %23 = math.exp %22 : vector<160x64xf32>
    %cst_13 = arith.constant 1.000000e+00 : f32
    %24 = vector.broadcast %cst_13 : f32 to vector<160x64xf32>
    %25 = arith.addf %24, %23 : vector<160x64xf32>
    %26 = tpu.reciprocal %25 {approx = true} : vector<160x64xf32> -> vector<160x64xf32>
    %27 = arith.addf %18, %26 : vector<160x64xf32>
    %28 = arith.addf %27, %20 : vector<160x64xf32>
    %cst_14 = arith.constant 0.000000e+00 : f32
    %29 = vector.broadcast %cst_14 : f32 to vector<160x64xf32>
    %30 = arith.maximumf %28, %29 : vector<160x64xf32>
    %c0_15 = arith.constant 0 : index
    %c0_16 = arith.constant 0 : index
    %31 = vector.load %arg3[%c0_15, %c0_16] : memref<64x16xf32, #tpu.memory_space<vmem>>, vector<64x16xf32>
    %cst_17 = arith.constant dense<0.000000e+00> : vector<160x16xf32>
    %32 = tpu.matmul %30, %31, %cst_17 {dimension_numbers = #tpu.dot_dimension_numbers<[1], [0], [0], [1], [0, 0, 1, 1], [], []>} : vector<160x64xf32>, vector<64x16xf32>, vector<160x16xf32> -> vector<160x16xf32>
    %c0_18 = arith.constant 0 : index
    %c0_19 = arith.constant 0 : index
    %33 = vector.load %arg4[%c0_18, %c0_19] : memref<160x160xf32, #tpu.memory_space<vmem>>, vector<160x160xf32>
    %cst_20 = arith.constant dense<0.000000e+00> : vector<160x16xf32>
    %34 = tpu.matmul %33, %32, %cst_20 {dimension_numbers = #tpu.dot_dimension_numbers<[1], [0], [0], [1], [0, 0, 1, 1], [], []>} : vector<160x160xf32>, vector<160x16xf32>, vector<160x16xf32> -> vector<160x16xf32>
    %cst_21 = arith.constant 0.000000e+00 : f32
    %35 = vector.broadcast %cst_21 : f32 to vector<160x16xf32>
    %36 = arith.maximumf %34, %35 : vector<160x16xf32>
    %c0_22 = arith.constant 0 : index
    %c0_23 = arith.constant 0 : index
    %37 = vector.load %arg6[%c0_22, %c0_23] : memref<1x192xf32, #tpu.memory_space<vmem>>, vector<1x192xf32>
    %38 = vector.extract_strided_slice %36 {offsets = [0, 0], sizes = [128, 16], strides = [1, 1]} : vector<160x16xf32> to vector<128x16xf32>
    %c0_24 = arith.constant 0 : index
    %c0_25 = arith.constant 0 : index
    %c0_26 = arith.constant 0 : index
    %39 = vector.load %arg5[%c0_24, %c0_25, %c0_26] : memref<3x16x192xf32, #tpu.memory_space<vmem>>, vector<1x16x192xf32>
    %40 = vector.shape_cast %39 : vector<1x16x192xf32> to vector<16x192xf32>
    %cst_27 = arith.constant dense<0.000000e+00> : vector<128x192xf32>
    %41 = tpu.matmul %38, %40, %cst_27 {dimension_numbers = #tpu.dot_dimension_numbers<[1], [0], [0], [1], [0, 0, 1, 1], [], []>} : vector<128x16xf32>, vector<16x192xf32>, vector<128x192xf32> -> vector<128x192xf32>
    %42 = vector.broadcast %37 : vector<1x192xf32> to vector<128x192xf32>
    %43 = arith.addf %42, %41 : vector<128x192xf32>
    %44 = vector.extract_strided_slice %36 {offsets = [16, 0], sizes = [128, 16], strides = [1, 1]} : vector<160x16xf32> to vector<128x16xf32>
    %c1_28 = arith.constant 1 : index
    %c0_29 = arith.constant 0 : index
    %c0_30 = arith.constant 0 : index
    %45 = vector.load %arg5[%c1_28, %c0_29, %c0_30] : memref<3x16x192xf32, #tpu.memory_space<vmem>>, vector<1x16x192xf32>
    %46 = vector.shape_cast %45 : vector<1x16x192xf32> to vector<16x192xf32>
    %cst_31 = arith.constant dense<0.000000e+00> : vector<128x192xf32>
    %47 = tpu.matmul %44, %46, %cst_31 {dimension_numbers = #tpu.dot_dimension_numbers<[1], [0], [0], [1], [0, 0, 1, 1], [], []>} : vector<128x16xf32>, vector<16x192xf32>, vector<128x192xf32> -> vector<128x192xf32>
    %48 = arith.addf %43, %47 : vector<128x192xf32>
    %49 = vector.extract_strided_slice %36 {offsets = [32, 0], sizes = [128, 16], strides = [1, 1]} : vector<160x16xf32> to vector<128x16xf32>
    %c2_32 = arith.constant 2 : index
    %c0_33 = arith.constant 0 : index
    %c0_34 = arith.constant 0 : index
    %50 = vector.load %arg5[%c2_32, %c0_33, %c0_34] : memref<3x16x192xf32, #tpu.memory_space<vmem>>, vector<1x16x192xf32>
    %51 = vector.shape_cast %50 : vector<1x16x192xf32> to vector<16x192xf32>
    %cst_35 = arith.constant dense<0.000000e+00> : vector<128x192xf32>
    %52 = tpu.matmul %49, %51, %cst_35 {dimension_numbers = #tpu.dot_dimension_numbers<[1], [0], [0], [1], [0, 0, 1, 1], [], []>} : vector<128x16xf32>, vector<16x192xf32>, vector<128x192xf32> -> vector<128x192xf32>
    %53 = arith.addf %48, %52 : vector<128x192xf32>
    %54 = vector.extract_strided_slice %53 {offsets = [0, 0], sizes = [128, 64], strides = [1, 1]} : vector<128x192xf32> to vector<128x64xf32>
    %55 = vector.extract_strided_slice %53 {offsets = [0, 64], sizes = [128, 64], strides = [1, 1]} : vector<128x192xf32> to vector<128x64xf32>
    %56 = vector.extract_strided_slice %53 {offsets = [0, 128], sizes = [128, 64], strides = [1, 1]} : vector<128x192xf32> to vector<128x64xf32>
    %cst_36 = arith.constant 0.000000e+00 : f32
    %57 = vector.broadcast %cst_36 : f32 to vector<128x64xf32>
    %58 = arith.subf %57, %55 : vector<128x64xf32>
    %59 = math.exp %58 : vector<128x64xf32>
    %cst_37 = arith.constant 1.000000e+00 : f32
    %60 = vector.broadcast %cst_37 : f32 to vector<128x64xf32>
    %61 = arith.addf %60, %59 : vector<128x64xf32>
    %62 = tpu.reciprocal %61 {approx = true} : vector<128x64xf32> -> vector<128x64xf32>
    %63 = arith.addf %54, %62 : vector<128x64xf32>
    %64 = arith.addf %63, %56 : vector<128x64xf32>
    %cst_38 = arith.constant 0.000000e+00 : f32
    %65 = vector.broadcast %cst_38 : f32 to vector<128x64xf32>
    %66 = arith.maximumf %64, %65 : vector<128x64xf32>
    %c0_39 = arith.constant 0 : index
    %c0_40 = arith.constant 0 : index
    %67 = vector.load %arg8[%c0_39, %c0_40] : memref<8x128xf32, #tpu.memory_space<vmem>>, vector<8x128xf32>
    %cst_41 = arith.constant dense<0.000000e+00> : vector<8x64xf32>
    %68 = tpu.matmul %67, %66, %cst_41 {dimension_numbers = #tpu.dot_dimension_numbers<[1], [0], [0], [1], [0, 0, 1, 1], [], []>} : vector<8x128xf32>, vector<128x64xf32>, vector<8x64xf32> -> vector<8x64xf32>
    %c0_42 = arith.constant 0 : index
    %c0_43 = arith.constant 0 : index
    %69 = vector.load %arg8[%c0_42, %c0_43] : memref<8x128xf32, #tpu.memory_space<vmem>>, vector<8x128xf32>
    %70 = arith.mulf %66, %66 : vector<128x64xf32>
    %cst_44 = arith.constant dense<0.000000e+00> : vector<8x64xf32>
    %71 = tpu.matmul %69, %70, %cst_44 {dimension_numbers = #tpu.dot_dimension_numbers<[1], [0], [0], [1], [0, 0, 1, 1], [], []>} : vector<8x128xf32>, vector<128x64xf32>, vector<8x64xf32> -> vector<8x64xf32>
    %cst_45 = arith.constant dense<0.000000e+00> : vector<8xf32>
    %72 = vector.multi_reduction <add>, %68, %cst_45 [1] : vector<8x64xf32> to vector<8xf32>
    %73 = vector.shape_cast %72 : vector<8xf32> to vector<8x1xf32>
    %cst_46 = arith.constant 1.024000e+03 : f32
    %74 = vector.broadcast %cst_46 : f32 to vector<8x1xf32>
    %75 = arith.divf %73, %74 : vector<8x1xf32>
    %cst_47 = arith.constant dense<0.000000e+00> : vector<8xf32>
    %76 = vector.multi_reduction <add>, %71, %cst_47 [1] : vector<8x64xf32> to vector<8xf32>
    %77 = vector.shape_cast %76 : vector<8xf32> to vector<8x1xf32>
    %cst_48 = arith.constant 1.024000e+03 : f32
    %78 = vector.broadcast %cst_48 : f32 to vector<8x1xf32>
    %79 = arith.divf %77, %78 : vector<8x1xf32>
    %80 = arith.mulf %75, %75 : vector<8x1xf32>
    %81 = arith.subf %79, %80 : vector<8x1xf32>
    %cst_49 = arith.constant 0.000000e+00 : f32
    %82 = vector.broadcast %cst_49 : f32 to vector<8x1xf32>
    %83 = arith.maximumf %81, %82 : vector<8x1xf32>
    %cst_50 = arith.constant 9.99999974E-6 : f32
    %84 = vector.broadcast %cst_50 : f32 to vector<8x1xf32>
    %85 = arith.addf %83, %84 : vector<8x1xf32>
    %86 = math.rsqrt %85 : vector<8x1xf32>
    %c0_51 = arith.constant 0 : index
    %c0_52 = arith.constant 0 : index
    %87 = vector.load %arg9[%c0_51, %c0_52] : memref<8x1xf32, #tpu.memory_space<vmem>>, vector<8x1xf32>
    %88 = arith.mulf %86, %87 : vector<8x1xf32>
    %c0_53 = arith.constant 0 : index
    %c0_54 = arith.constant 0 : index
    %89 = vector.load %arg10[%c0_53, %c0_54] : memref<8x1xf32, #tpu.memory_space<vmem>>, vector<8x1xf32>
    %90 = arith.mulf %75, %88 : vector<8x1xf32>
    %91 = arith.subf %89, %90 : vector<8x1xf32>
    %92 = vector.shape_cast %88 : vector<8x1xf32> to vector<8x1xf32>
    %93 = vector.broadcast %92 : vector<8x1xf32> to vector<8x64xf32>
    %94 = vector.shape_cast %91 : vector<8x1xf32> to vector<8x1xf32>
    %95 = vector.broadcast %94 : vector<8x1xf32> to vector<8x64xf32>
    %c0_55 = arith.constant 0 : index
    %c0_56 = arith.constant 0 : index
    %96 = vector.load %arg7[%c0_55, %c0_56] : memref<128x8xf32, #tpu.memory_space<vmem>>, vector<128x8xf32>
    %cst_57 = arith.constant dense<0.000000e+00> : vector<128x64xf32>
    %97 = tpu.matmul %96, %93, %cst_57 {dimension_numbers = #tpu.dot_dimension_numbers<[1], [0], [0], [1], [0, 0, 1, 1], [], []>} : vector<128x8xf32>, vector<8x64xf32>, vector<128x64xf32> -> vector<128x64xf32>
    %c0_58 = arith.constant 0 : index
    %c0_59 = arith.constant 0 : index
    %98 = vector.load %arg7[%c0_58, %c0_59] : memref<128x8xf32, #tpu.memory_space<vmem>>, vector<128x8xf32>
    %cst_60 = arith.constant dense<0.000000e+00> : vector<128x64xf32>
    %99 = tpu.matmul %98, %95, %cst_60 {dimension_numbers = #tpu.dot_dimension_numbers<[1], [0], [0], [1], [0, 0, 1, 1], [], []>} : vector<128x8xf32>, vector<8x64xf32>, vector<128x64xf32> -> vector<128x64xf32>
    %100 = arith.mulf %66, %97 : vector<128x64xf32>
    %101 = arith.addf %100, %99 : vector<128x64xf32>
    %c0_61 = arith.constant 0 : index
    %c0_62 = arith.constant 0 : index
    %102 = vector.load %arg12[%c0_61, %c0_62] : memref<1x192xf32, #tpu.memory_space<vmem>>, vector<1x192xf32>
    %103 = vector.extract_strided_slice %101 {offsets = [0, 0], sizes = [96, 64], strides = [1, 1]} : vector<128x64xf32> to vector<96x64xf32>
    %c0_63 = arith.constant 0 : index
    %c0_64 = arith.constant 0 : index
    %c0_65 = arith.constant 0 : index
    %104 = vector.load %arg11[%c0_63, %c0_64, %c0_65] : memref<3x64x192xf32, #tpu.memory_space<vmem>>, vector<1x64x192xf32>
    %105 = vector.shape_cast %104 : vector<1x64x192xf32> to vector<64x192xf32>
    %cst_66 = arith.constant dense<0.000000e+00> : vector<96x192xf32>
    %106 = tpu.matmul %103, %105, %cst_66 {dimension_numbers = #tpu.dot_dimension_numbers<[1], [0], [0], [1], [0, 0, 1, 1], [], []>} : vector<96x64xf32>, vector<64x192xf32>, vector<96x192xf32> -> vector<96x192xf32>
    %107 = vector.broadcast %102 : vector<1x192xf32> to vector<96x192xf32>
    %108 = arith.addf %107, %106 : vector<96x192xf32>
    %109 = vector.extract_strided_slice %101 {offsets = [16, 0], sizes = [96, 64], strides = [1, 1]} : vector<128x64xf32> to vector<96x64xf32>
    %c1_67 = arith.constant 1 : index
    %c0_68 = arith.constant 0 : index
    %c0_69 = arith.constant 0 : index
    %110 = vector.load %arg11[%c1_67, %c0_68, %c0_69] : memref<3x64x192xf32, #tpu.memory_space<vmem>>, vector<1x64x192xf32>
    %111 = vector.shape_cast %110 : vector<1x64x192xf32> to vector<64x192xf32>
    %cst_70 = arith.constant dense<0.000000e+00> : vector<96x192xf32>
    %112 = tpu.matmul %109, %111, %cst_70 {dimension_numbers = #tpu.dot_dimension_numbers<[1], [0], [0], [1], [0, 0, 1, 1], [], []>} : vector<96x64xf32>, vector<64x192xf32>, vector<96x192xf32> -> vector<96x192xf32>
    %113 = arith.addf %108, %112 : vector<96x192xf32>
    %114 = vector.extract_strided_slice %101 {offsets = [32, 0], sizes = [96, 64], strides = [1, 1]} : vector<128x64xf32> to vector<96x64xf32>
    %c2_71 = arith.constant 2 : index
    %c0_72 = arith.constant 0 : index
    %c0_73 = arith.constant 0 : index
    %115 = vector.load %arg11[%c2_71, %c0_72, %c0_73] : memref<3x64x192xf32, #tpu.memory_space<vmem>>, vector<1x64x192xf32>
    %116 = vector.shape_cast %115 : vector<1x64x192xf32> to vector<64x192xf32>
    %cst_74 = arith.constant dense<0.000000e+00> : vector<96x192xf32>
    %117 = tpu.matmul %114, %116, %cst_74 {dimension_numbers = #tpu.dot_dimension_numbers<[1], [0], [0], [1], [0, 0, 1, 1], [], []>} : vector<96x64xf32>, vector<64x192xf32>, vector<96x192xf32> -> vector<96x192xf32>
    %118 = arith.addf %113, %117 : vector<96x192xf32>
    %119 = vector.extract_strided_slice %118 {offsets = [0, 0], sizes = [96, 64], strides = [1, 1]} : vector<96x192xf32> to vector<96x64xf32>
    %120 = vector.extract_strided_slice %118 {offsets = [0, 64], sizes = [96, 64], strides = [1, 1]} : vector<96x192xf32> to vector<96x64xf32>
    %121 = vector.extract_strided_slice %118 {offsets = [0, 128], sizes = [96, 64], strides = [1, 1]} : vector<96x192xf32> to vector<96x64xf32>
    %cst_75 = arith.constant 0.000000e+00 : f32
    %122 = vector.broadcast %cst_75 : f32 to vector<96x64xf32>
    %123 = arith.subf %122, %120 : vector<96x64xf32>
    %124 = math.exp %123 : vector<96x64xf32>
    %cst_76 = arith.constant 1.000000e+00 : f32
    %125 = vector.broadcast %cst_76 : f32 to vector<96x64xf32>
    %126 = arith.addf %125, %124 : vector<96x64xf32>
    %127 = tpu.reciprocal %126 {approx = true} : vector<96x64xf32> -> vector<96x64xf32>
    %128 = arith.addf %119, %127 : vector<96x64xf32>
    %129 = arith.addf %128, %121 : vector<96x64xf32>
    %cst_77 = arith.constant 0.000000e+00 : f32
    %130 = vector.broadcast %cst_77 : f32 to vector<96x64xf32>
    %131 = arith.maximumf %129, %130 : vector<96x64xf32>
    %c0_78 = arith.constant 0 : index
    %c0_79 = arith.constant 0 : index
    %132 = vector.load %arg13[%c0_78, %c0_79] : memref<64x16xf32, #tpu.memory_space<vmem>>, vector<64x16xf32>
    %cst_80 = arith.constant dense<0.000000e+00> : vector<96x16xf32>
    %133 = tpu.matmul %131, %132, %cst_80 {dimension_numbers = #tpu.dot_dimension_numbers<[1], [0], [0], [1], [0, 0, 1, 1], [], []>} : vector<96x64xf32>, vector<64x16xf32>, vector<96x16xf32> -> vector<96x16xf32>
    %c0_81 = arith.constant 0 : index
    %c0_82 = arith.constant 0 : index
    %134 = vector.load %arg14[%c0_81, %c0_82] : memref<96x96xf32, #tpu.memory_space<vmem>>, vector<96x96xf32>
    %cst_83 = arith.constant dense<0.000000e+00> : vector<96x16xf32>
    %135 = tpu.matmul %134, %133, %cst_83 {dimension_numbers = #tpu.dot_dimension_numbers<[1], [0], [0], [1], [0, 0, 1, 1], [], []>} : vector<96x96xf32>, vector<96x16xf32>, vector<96x16xf32> -> vector<96x16xf32>
    %cst_84 = arith.constant 0.000000e+00 : f32
    %136 = vector.broadcast %cst_84 : f32 to vector<96x16xf32>
    %137 = arith.maximumf %135, %136 : vector<96x16xf32>
    %c0_85 = arith.constant 0 : index
    %c0_86 = arith.constant 0 : index
    %138 = vector.load %arg16[%c0_85, %c0_86] : memref<1x192xf32, #tpu.memory_space<vmem>>, vector<1x192xf32>
    %139 = vector.extract_strided_slice %137 {offsets = [0, 0], sizes = [64, 16], strides = [1, 1]} : vector<96x16xf32> to vector<64x16xf32>
    %c0_87 = arith.constant 0 : index
    %c0_88 = arith.constant 0 : index
    %c0_89 = arith.constant 0 : index
    %140 = vector.load %arg15[%c0_87, %c0_88, %c0_89] : memref<3x16x192xf32, #tpu.memory_space<vmem>>, vector<1x16x192xf32>
    %141 = vector.shape_cast %140 : vector<1x16x192xf32> to vector<16x192xf32>
    %cst_90 = arith.constant dense<0.000000e+00> : vector<64x192xf32>
    %142 = tpu.matmul %139, %141, %cst_90 {dimension_numbers = #tpu.dot_dimension_numbers<[1], [0], [0], [1], [0, 0, 1, 1], [], []>} : vector<64x16xf32>, vector<16x192xf32>, vector<64x192xf32> -> vector<64x192xf32>
    %143 = vector.broadcast %138 : vector<1x192xf32> to vector<64x192xf32>
    %144 = arith.addf %143, %142 : vector<64x192xf32>
    %145 = vector.extract_strided_slice %137 {offsets = [16, 0], sizes = [64, 16], strides = [1, 1]} : vector<96x16xf32> to vector<64x16xf32>
    %c1_91 = arith.constant 1 : index
    %c0_92 = arith.constant 0 : index
    %c0_93 = arith.constant 0 : index
    %146 = vector.load %arg15[%c1_91, %c0_92, %c0_93] : memref<3x16x192xf32, #tpu.memory_space<vmem>>, vector<1x16x192xf32>
    %147 = vector.shape_cast %146 : vector<1x16x192xf32> to vector<16x192xf32>
    %cst_94 = arith.constant dense<0.000000e+00> : vector<64x192xf32>
    %148 = tpu.matmul %145, %147, %cst_94 {dimension_numbers = #tpu.dot_dimension_numbers<[1], [0], [0], [1], [0, 0, 1, 1], [], []>} : vector<64x16xf32>, vector<16x192xf32>, vector<64x192xf32> -> vector<64x192xf32>
    %149 = arith.addf %144, %148 : vector<64x192xf32>
    %150 = vector.extract_strided_slice %137 {offsets = [32, 0], sizes = [64, 16], strides = [1, 1]} : vector<96x16xf32> to vector<64x16xf32>
    %c2_95 = arith.constant 2 : index
    %c0_96 = arith.constant 0 : index
    %c0_97 = arith.constant 0 : index
    %151 = vector.load %arg15[%c2_95, %c0_96, %c0_97] : memref<3x16x192xf32, #tpu.memory_space<vmem>>, vector<1x16x192xf32>
    %152 = vector.shape_cast %151 : vector<1x16x192xf32> to vector<16x192xf32>
    %cst_98 = arith.constant dense<0.000000e+00> : vector<64x192xf32>
    %153 = tpu.matmul %150, %152, %cst_98 {dimension_numbers = #tpu.dot_dimension_numbers<[1], [0], [0], [1], [0, 0, 1, 1], [], []>} : vector<64x16xf32>, vector<16x192xf32>, vector<64x192xf32> -> vector<64x192xf32>
    %154 = arith.addf %149, %153 : vector<64x192xf32>
    %155 = vector.extract_strided_slice %154 {offsets = [0, 0], sizes = [64, 64], strides = [1, 1]} : vector<64x192xf32> to vector<64x64xf32>
    %156 = vector.extract_strided_slice %154 {offsets = [0, 64], sizes = [64, 64], strides = [1, 1]} : vector<64x192xf32> to vector<64x64xf32>
    %157 = vector.extract_strided_slice %154 {offsets = [0, 128], sizes = [64, 64], strides = [1, 1]} : vector<64x192xf32> to vector<64x64xf32>
    %cst_99 = arith.constant 0.000000e+00 : f32
    %158 = vector.broadcast %cst_99 : f32 to vector<64x64xf32>
    %159 = arith.subf %158, %156 : vector<64x64xf32>
    %160 = math.exp %159 : vector<64x64xf32>
    %cst_100 = arith.constant 1.000000e+00 : f32
    %161 = vector.broadcast %cst_100 : f32 to vector<64x64xf32>
    %162 = arith.addf %161, %160 : vector<64x64xf32>
    %163 = tpu.reciprocal %162 {approx = true} : vector<64x64xf32> -> vector<64x64xf32>
    %164 = arith.addf %155, %163 : vector<64x64xf32>
    %165 = arith.addf %164, %157 : vector<64x64xf32>
    %cst_101 = arith.constant 0.000000e+00 : f32
    %166 = vector.broadcast %cst_101 : f32 to vector<64x64xf32>
    %167 = arith.maximumf %165, %166 : vector<64x64xf32>
    %c0_102 = arith.constant 0 : index
    %c0_103 = arith.constant 0 : index
    %168 = vector.load %arg18[%c0_102, %c0_103] : memref<8x64xf32, #tpu.memory_space<vmem>>, vector<8x64xf32>
    %cst_104 = arith.constant dense<0.000000e+00> : vector<8x64xf32>
    %169 = tpu.matmul %168, %167, %cst_104 {dimension_numbers = #tpu.dot_dimension_numbers<[1], [0], [0], [1], [0, 0, 1, 1], [], []>} : vector<8x64xf32>, vector<64x64xf32>, vector<8x64xf32> -> vector<8x64xf32>
    %c0_105 = arith.constant 0 : index
    %c0_106 = arith.constant 0 : index
    %170 = vector.load %arg18[%c0_105, %c0_106] : memref<8x64xf32, #tpu.memory_space<vmem>>, vector<8x64xf32>
    %171 = arith.mulf %167, %167 : vector<64x64xf32>
    %cst_107 = arith.constant dense<0.000000e+00> : vector<8x64xf32>
    %172 = tpu.matmul %170, %171, %cst_107 {dimension_numbers = #tpu.dot_dimension_numbers<[1], [0], [0], [1], [0, 0, 1, 1], [], []>} : vector<8x64xf32>, vector<64x64xf32>, vector<8x64xf32> -> vector<8x64xf32>
    %cst_108 = arith.constant dense<0.000000e+00> : vector<8xf32>
    %173 = vector.multi_reduction <add>, %169, %cst_108 [1] : vector<8x64xf32> to vector<8xf32>
    %174 = vector.shape_cast %173 : vector<8xf32> to vector<8x1xf32>
    %cst_109 = arith.constant 5.120000e+02 : f32
    %175 = vector.broadcast %cst_109 : f32 to vector<8x1xf32>
    %176 = arith.divf %174, %175 : vector<8x1xf32>
    %cst_110 = arith.constant dense<0.000000e+00> : vector<8xf32>
    %177 = vector.multi_reduction <add>, %172, %cst_110 [1] : vector<8x64xf32> to vector<8xf32>
    %178 = vector.shape_cast %177 : vector<8xf32> to vector<8x1xf32>
    %cst_111 = arith.constant 5.120000e+02 : f32
    %179 = vector.broadcast %cst_111 : f32 to vector<8x1xf32>
    %180 = arith.divf %178, %179 : vector<8x1xf32>
    %181 = arith.mulf %176, %176 : vector<8x1xf32>
    %182 = arith.subf %180, %181 : vector<8x1xf32>
    %cst_112 = arith.constant 0.000000e+00 : f32
    %183 = vector.broadcast %cst_112 : f32 to vector<8x1xf32>
    %184 = arith.maximumf %182, %183 : vector<8x1xf32>
    %cst_113 = arith.constant 9.99999974E-6 : f32
    %185 = vector.broadcast %cst_113 : f32 to vector<8x1xf32>
    %186 = arith.addf %184, %185 : vector<8x1xf32>
    %187 = math.rsqrt %186 : vector<8x1xf32>
    %c0_114 = arith.constant 0 : index
    %c0_115 = arith.constant 0 : index
    %188 = vector.load %arg19[%c0_114, %c0_115] : memref<8x1xf32, #tpu.memory_space<vmem>>, vector<8x1xf32>
    %189 = arith.mulf %187, %188 : vector<8x1xf32>
    %c0_116 = arith.constant 0 : index
    %c0_117 = arith.constant 0 : index
    %190 = vector.load %arg20[%c0_116, %c0_117] : memref<8x1xf32, #tpu.memory_space<vmem>>, vector<8x1xf32>
    %191 = arith.mulf %176, %189 : vector<8x1xf32>
    %192 = arith.subf %190, %191 : vector<8x1xf32>
    %193 = vector.shape_cast %189 : vector<8x1xf32> to vector<8x1xf32>
    %194 = vector.broadcast %193 : vector<8x1xf32> to vector<8x64xf32>
    %195 = vector.shape_cast %192 : vector<8x1xf32> to vector<8x1xf32>
    %196 = vector.broadcast %195 : vector<8x1xf32> to vector<8x64xf32>
    %c0_118 = arith.constant 0 : index
    %c0_119 = arith.constant 0 : index
    %197 = vector.load %arg17[%c0_118, %c0_119] : memref<64x8xf32, #tpu.memory_space<vmem>>, vector<64x8xf32>
    %cst_120 = arith.constant dense<0.000000e+00> : vector<64x64xf32>
    %198 = tpu.matmul %197, %194, %cst_120 {dimension_numbers = #tpu.dot_dimension_numbers<[1], [0], [0], [1], [0, 0, 1, 1], [], []>} : vector<64x8xf32>, vector<8x64xf32>, vector<64x64xf32> -> vector<64x64xf32>
    %c0_121 = arith.constant 0 : index
    %c0_122 = arith.constant 0 : index
    %199 = vector.load %arg17[%c0_121, %c0_122] : memref<64x8xf32, #tpu.memory_space<vmem>>, vector<64x8xf32>
    %cst_123 = arith.constant dense<0.000000e+00> : vector<64x64xf32>
    %200 = tpu.matmul %199, %196, %cst_123 {dimension_numbers = #tpu.dot_dimension_numbers<[1], [0], [0], [1], [0, 0, 1, 1], [], []>} : vector<64x8xf32>, vector<8x64xf32>, vector<64x64xf32> -> vector<64x64xf32>
    %201 = arith.mulf %167, %198 : vector<64x64xf32>
    %202 = arith.addf %201, %200 : vector<64x64xf32>
    %c0_124 = arith.constant 0 : index
    %c0_125 = arith.constant 0 : index
    %203 = vector.load %arg22[%c0_124, %c0_125] : memref<1x192xf32, #tpu.memory_space<vmem>>, vector<1x192xf32>
    %204 = vector.extract_strided_slice %202 {offsets = [0, 0], sizes = [32, 64], strides = [1, 1]} : vector<64x64xf32> to vector<32x64xf32>
    %c0_126 = arith.constant 0 : index
    %c0_127 = arith.constant 0 : index
    %c0_128 = arith.constant 0 : index
    %205 = vector.load %arg21[%c0_126, %c0_127, %c0_128] : memref<3x64x192xf32, #tpu.memory_space<vmem>>, vector<1x64x192xf32>
    %206 = vector.shape_cast %205 : vector<1x64x192xf32> to vector<64x192xf32>
    %cst_129 = arith.constant dense<0.000000e+00> : vector<32x192xf32>
    %207 = tpu.matmul %204, %206, %cst_129 {dimension_numbers = #tpu.dot_dimension_numbers<[1], [0], [0], [1], [0, 0, 1, 1], [], []>} : vector<32x64xf32>, vector<64x192xf32>, vector<32x192xf32> -> vector<32x192xf32>
    %208 = vector.broadcast %203 : vector<1x192xf32> to vector<32x192xf32>
    %209 = arith.addf %208, %207 : vector<32x192xf32>
    %210 = vector.extract_strided_slice %202 {offsets = [16, 0], sizes = [32, 64], strides = [1, 1]} : vector<64x64xf32> to vector<32x64xf32>
    %c1_130 = arith.constant 1 : index
    %c0_131 = arith.constant 0 : index
    %c0_132 = arith.constant 0 : index
    %211 = vector.load %arg21[%c1_130, %c0_131, %c0_132] : memref<3x64x192xf32, #tpu.memory_space<vmem>>, vector<1x64x192xf32>
    %212 = vector.shape_cast %211 : vector<1x64x192xf32> to vector<64x192xf32>
    %cst_133 = arith.constant dense<0.000000e+00> : vector<32x192xf32>
    %213 = tpu.matmul %210, %212, %cst_133 {dimension_numbers = #tpu.dot_dimension_numbers<[1], [0], [0], [1], [0, 0, 1, 1], [], []>} : vector<32x64xf32>, vector<64x192xf32>, vector<32x192xf32> -> vector<32x192xf32>
    %214 = arith.addf %209, %213 : vector<32x192xf32>
    %215 = vector.extract_strided_slice %202 {offsets = [32, 0], sizes = [32, 64], strides = [1, 1]} : vector<64x64xf32> to vector<32x64xf32>
    %c2_134 = arith.constant 2 : index
    %c0_135 = arith.constant 0 : index
    %c0_136 = arith.constant 0 : index
    %216 = vector.load %arg21[%c2_134, %c0_135, %c0_136] : memref<3x64x192xf32, #tpu.memory_space<vmem>>, vector<1x64x192xf32>
    %217 = vector.shape_cast %216 : vector<1x64x192xf32> to vector<64x192xf32>
    %cst_137 = arith.constant dense<0.000000e+00> : vector<32x192xf32>
    %218 = tpu.matmul %215, %217, %cst_137 {dimension_numbers = #tpu.dot_dimension_numbers<[1], [0], [0], [1], [0, 0, 1, 1], [], []>} : vector<32x64xf32>, vector<64x192xf32>, vector<32x192xf32> -> vector<32x192xf32>
    %219 = arith.addf %214, %218 : vector<32x192xf32>
    %220 = vector.extract_strided_slice %219 {offsets = [0, 0], sizes = [32, 64], strides = [1, 1]} : vector<32x192xf32> to vector<32x64xf32>
    %221 = vector.extract_strided_slice %219 {offsets = [0, 64], sizes = [32, 64], strides = [1, 1]} : vector<32x192xf32> to vector<32x64xf32>
    %222 = vector.extract_strided_slice %219 {offsets = [0, 128], sizes = [32, 64], strides = [1, 1]} : vector<32x192xf32> to vector<32x64xf32>
    %cst_138 = arith.constant 0.000000e+00 : f32
    %223 = vector.broadcast %cst_138 : f32 to vector<32x64xf32>
    %224 = arith.subf %223, %221 : vector<32x64xf32>
    %225 = math.exp %224 : vector<32x64xf32>
    %cst_139 = arith.constant 1.000000e+00 : f32
    %226 = vector.broadcast %cst_139 : f32 to vector<32x64xf32>
    %227 = arith.addf %226, %225 : vector<32x64xf32>
    %228 = tpu.reciprocal %227 {approx = true} : vector<32x64xf32> -> vector<32x64xf32>
    %229 = arith.addf %220, %228 : vector<32x64xf32>
    %230 = arith.addf %229, %222 : vector<32x64xf32>
    %cst_140 = arith.constant 0.000000e+00 : f32
    %231 = vector.broadcast %cst_140 : f32 to vector<32x64xf32>
    %232 = arith.maximumf %230, %231 : vector<32x64xf32>
    %cst_141 = arith.constant 0.000000e+00 : f32
    %233 = vector.broadcast %cst_141 : f32 to vector<2x5xf32>
    %c0_142 = arith.constant 0 : index
    %c0_143 = arith.constant 0 : index
    %c0_144 = arith.constant 0 : index
    %234 = vector.load %arg23[%c0_142, %c0_143, %c0_144] : memref<2x2x32xf32, #tpu.memory_space<vmem>>, vector<1x2x32xf32>
    %235 = vector.shape_cast %234 : vector<1x2x32xf32> to vector<2x32xf32>
    %cst_145 = arith.constant dense<0.000000e+00> : vector<2x64xf32>
    %236 = tpu.matmul %235, %232, %cst_145 {dimension_numbers = #tpu.dot_dimension_numbers<[1], [0], [0], [1], [0, 0, 1, 1], [], []>} : vector<2x32xf32>, vector<32x64xf32>, vector<2x64xf32> -> vector<2x64xf32>
    %c0_146 = arith.constant 0 : index
    %c0_147 = arith.constant 0 : index
    %c0_148 = arith.constant 0 : index
    %237 = vector.load %arg24[%c0_146, %c0_147, %c0_148] : memref<2x64x5xf32, #tpu.memory_space<vmem>>, vector<1x64x5xf32>
    %238 = vector.shape_cast %237 : vector<1x64x5xf32> to vector<64x5xf32>
    %cst_149 = arith.constant dense<0.000000e+00> : vector<2x5xf32>
    %239 = tpu.matmul %236, %238, %cst_149 {dimension_numbers = #tpu.dot_dimension_numbers<[1], [0], [0], [1], [0, 0, 1, 1], [], []>} : vector<2x64xf32>, vector<64x5xf32>, vector<2x5xf32> -> vector<2x5xf32>
    %240 = arith.addf %233, %239 : vector<2x5xf32>
    %c1_150 = arith.constant 1 : index
    %c0_151 = arith.constant 0 : index
    %c0_152 = arith.constant 0 : index
    %241 = vector.load %arg23[%c1_150, %c0_151, %c0_152] : memref<2x2x32xf32, #tpu.memory_space<vmem>>, vector<1x2x32xf32>
    %242 = vector.shape_cast %241 : vector<1x2x32xf32> to vector<2x32xf32>
    %cst_153 = arith.constant dense<0.000000e+00> : vector<2x64xf32>
    %243 = tpu.matmul %242, %232, %cst_153 {dimension_numbers = #tpu.dot_dimension_numbers<[1], [0], [0], [1], [0, 0, 1, 1], [], []>} : vector<2x32xf32>, vector<32x64xf32>, vector<2x64xf32> -> vector<2x64xf32>
    %c1_154 = arith.constant 1 : index
    %c0_155 = arith.constant 0 : index
    %c0_156 = arith.constant 0 : index
    %244 = vector.load %arg24[%c1_154, %c0_155, %c0_156] : memref<2x64x5xf32, #tpu.memory_space<vmem>>, vector<1x64x5xf32>
    %245 = vector.shape_cast %244 : vector<1x64x5xf32> to vector<64x5xf32>
    %cst_157 = arith.constant dense<0.000000e+00> : vector<2x5xf32>
    %246 = tpu.matmul %243, %245, %cst_157 {dimension_numbers = #tpu.dot_dimension_numbers<[1], [0], [0], [1], [0, 0, 1, 1], [], []>} : vector<2x64xf32>, vector<64x5xf32>, vector<2x5xf32> -> vector<2x5xf32>
    %247 = arith.addf %240, %246 : vector<2x5xf32>
    %c0_158 = arith.constant 0 : index
    %c0_159 = arith.constant 0 : index
    %248 = vector.load %arg25[%c0_158, %c0_159] : memref<1x5xf32, #tpu.memory_space<vmem>>, vector<1x5xf32>
    %249 = vector.broadcast %248 : vector<1x5xf32> to vector<2x5xf32>
    %250 = arith.addf %247, %249 : vector<2x5xf32>
    %c0_160 = arith.constant 0 : index
    %c0_161 = arith.constant 0 : index
    %251 = vector.load %arg26[%c0_160, %c0_161] : memref<2x5xf32, #tpu.memory_space<vmem>>, vector<2x5xf32>
    tpu.vector_store %arg26[%c0_160, %c0_161], %250 {strides = array<i32>} : memref<2x5xf32, #tpu.memory_space<vmem>>, vector<2x5xf32>,
    return
  }
}

</mosaic_0001>

<llo_original>
// kernel: asl_stgcn_forward.1
$region0: #{asl_stgcn_forward.1}
  #allocation0 [shape = 'u32[]', space=smem, size = 0x4, offset = 0x4, fixed_abs, tag = 'smem constant byte address 0x4 - core index']
  #allocation1 [shape = 'u32[144,128]{1,0:T(1,128)}', space=vmem, size = 0x12000, scoped, tag = 'internal scratch']
  %s0 = inlined_call_operand.vmem [shape: f32[192,4], index: 0, kind: input, shape index: {}]
  %s1 = inlined_call_operand.vmem [shape: f32[3,4,192], index: 1, kind: input, shape index: {}]
  %s2 = inlined_call_operand.vmem [shape: f32[1,192], index: 2, kind: input, shape index: {}]
  %s3 = inlined_call_operand.vmem [shape: f32[64,16], index: 3, kind: input, shape index: {}]
  %s4 = inlined_call_operand.vmem [shape: f32[160,160], index: 4, kind: input, shape index: {}]
  %s5 = inlined_call_operand.vmem [shape: f32[3,16,192], index: 5, kind: input, shape index: {}]
  %s6 = inlined_call_operand.vmem [shape: f32[1,192], index: 6, kind: input, shape index: {}]
  %s7 = inlined_call_operand.vmem [shape: f32[128,8], index: 7, kind: input, shape index: {}]
  %s8 = inlined_call_operand.vmem [shape: f32[8,128], index: 8, kind: input, shape index: {}]
  %s9 = inlined_call_operand.vmem [shape: f32[8,1], index: 9, kind: input, shape index: {}]
  %s10 = inlined_call_operand.vmem [shape: f32[8,1], index: 10, kind: input, shape index: {}]
  %s11 = inlined_call_operand.vmem [shape: f32[3,64,192], index: 11, kind: input, shape index: {}]
  %s12 = inlined_call_operand.vmem [shape: f32[1,192], index: 12, kind: input, shape index: {}]
  %s13 = inlined_call_operand.vmem [shape: f32[64,16], index: 13, kind: input, shape index: {}]
  %s14 = inlined_call_operand.vmem [shape: f32[96,96], index: 14, kind: input, shape index: {}]
  %s15 = inlined_call_operand.vmem [shape: f32[3,16,192], index: 15, kind: input, shape index: {}]
  %s16 = inlined_call_operand.vmem [shape: f32[1,192], index: 16, kind: input, shape index: {}]
  %s17 = inlined_call_operand.vmem [shape: f32[64,8], index: 17, kind: input, shape index: {}]
  %s18 = inlined_call_operand.vmem [shape: f32[8,64], index: 18, kind: input, shape index: {}]
  %s19 = inlined_call_operand.vmem [shape: f32[8,1], index: 19, kind: input, shape index: {}]
  %s20 = inlined_call_operand.vmem [shape: f32[8,1], index: 20, kind: input, shape index: {}]
  %s21 = inlined_call_operand.vmem [shape: f32[3,64,192], index: 21, kind: input, shape index: {}]
  %s22 = inlined_call_operand.vmem [shape: f32[1,192], index: 22, kind: input, shape index: {}]
  %s23 = inlined_call_operand.vmem [shape: f32[2,2,32], index: 23, kind: input, shape index: {}]
  %s24 = inlined_call_operand.vmem [shape: f32[2,64,5], index: 24, kind: input, shape index: {}]
  %s25 = inlined_call_operand.vmem [shape: f32[1,5], index: 25, kind: input, shape index: {}]
  %s26 = inlined_call_operand.hbm [shape: f32[2,5], index: 26, kind: output, shape index: {}]
  %s27 = sld [smem:[#allocation0]]
  $region114: #{asl_stgcn_forward.1} parent=0
    _
  %s29 = ssub.s32 1, %s27
  %s30 = scalar_select 0, %s29, %s27
  $region1: #{asl_stgcn_forward.1} parent=0
    #allocation2 [shape = 'u8[1024]{0}', space=vmem, size = 0x400, scoped, tag = 'output window, operand 0, single buffered']
    #allocation3 [shape = 's32[1]{0}', space=sflag, size = 0x4, scoped, tag = 'scoped memory for asl_stgcn_forward.1']
    %31 = vsyncpa [#allocation3], 0
    // Predicated region
    $region2: #{asl_stgcn_forward.1} parent=1 // pred_check
      _
    $region3: #{asl_stgcn_forward.1} parent=1 // pred_check_branch
      %33 = sbr.rel (0) target = $region5
    $region4: #{asl_stgcn_forward.1} parent=1 // pred_region
      _
    $region5: #{asl_stgcn_forward.1} parent=1 // pred_fallthru
      _
    // Predicated region
    $region6: #{asl_stgcn_forward.1} parent=1 // pred_check
      _
    $region7: #{asl_stgcn_forward.1} parent=1 // pred_check_branch
      %35 = sbr.rel (0) target = $region9
    $region8: #{asl_stgcn_forward.1} parent=1 // pred_region
      _
    $region9: #{asl_stgcn_forward.1} parent=1 // pred_fallthru
      _
    // Predicated region
    $region10: #{asl_stgcn_forward.1} parent=1 // pred_check
      _
    $region11: #{asl_stgcn_forward.1} parent=1 // pred_check_branch
      %37 = sbr.rel (0) target = $region13
    $region12: #{asl_stgcn_forward.1} parent=1 // pred_region
      _
    $region13: #{asl_stgcn_forward.1} parent=1 // pred_fallthru
      _
    // Predicated region
    $region14: #{asl_stgcn_forward.1} parent=1 // pred_check
      _
    $region15: #{asl_stgcn_forward.1} parent=1 // pred_check_branch
      %39 = sbr.rel (0) target = $region17
    $region16: #{asl_stgcn_forward.1} parent=1 // pred_region
      _
    $region17: #{asl_stgcn_forward.1} parent=1 // pred_fallthru
      _
    // Predicated region
    $region18: #{asl_stgcn_forward.1} parent=1 // pred_check
      _
    $region19: #{asl_stgcn_forward.1} parent=1 // pred_check_branch
      %41 = sbr.rel (0) target = $region21
    $region20: #{asl_stgcn_forward.1} parent=1 // pred_region
      _
    $region21: #{asl_stgcn_forward.1} parent=1 // pred_fallthru
      _
    // Predicated region
    $region22: #{asl_stgcn_forward.1} parent=1 // pred_check
      _
    $region23: #{asl_stgcn_forward.1} parent=1 // pred_check_branch
      %43 = sbr.rel (0) target = $region25
    $region24: #{asl_stgcn_forward.1} parent=1 // pred_region
      _
    $region25: #{asl_stgcn_forward.1} parent=1 // pred_fallthru
      _
    // Predicated region
    $region26: #{asl_stgcn_forward.1} parent=1 // pred_check
      _
    $region27: #{asl_stgcn_forward.1} parent=1 // pred_check_branch
      %45 = sbr.rel (0) target = $region29
    $region28: #{asl_stgcn_forward.1} parent=1 // pred_region
      _
    $region29: #{asl_stgcn_forward.1} parent=1 // pred_fallthru
      _
    // Predicated region
    $region30: #{asl_stgcn_forward.1} parent=1 // pred_check
      _
    $region31: #{asl_stgcn_forward.1} parent=1 // pred_check_branch
      %47 = sbr.rel (0) target = $region33
    $region32: #{asl_stgcn_forward.1} parent=1 // pred_region
      _
    $region33: #{asl_stgcn_forward.1} parent=1 // pred_fallthru
      _
    // Predicated region
    $region34: #{asl_stgcn_forward.1} parent=1 // pred_check
      _
    $region35: #{asl_stgcn_forward.1} parent=1 // pred_check_branch
      %49 = sbr.rel (0) target = $region37
    $region36: #{asl_stgcn_forward.1} parent=1 // pred_region
      _
    $region37: #{asl_stgcn_forward.1} parent=1 // pred_fallthru
      _
    // Predicated region
    $region38: #{asl_stgcn_forward.1} parent=1 // pred_check
      _
    $region39: #{asl_stgcn_forward.1} parent=1 // pred_check_branch
      %51 = sbr.rel (0) target = $region41
    $region40: #{asl_stgcn_forward.1} parent=1 // pred_region
      _
    $region41: #{asl_stgcn_forward.1} parent=1 // pred_fallthru
      _
    // Predicated region
    $region42: #{asl_stgcn_forward.1} parent=1 // pred_check
      _
    $region43: #{asl_stgcn_forward.1} parent=1 // pred_check_branch
      %53 = sbr.rel (0) target = $region45
    $region44: #{asl_stgcn_forward.1} parent=1 // pred_region
      _
    $region45: #{asl_stgcn_forward.1} parent=1 // pred_fallthru
      _
    // Predicated region
    $region46: #{asl_stgcn_forward.1} parent=1 // pred_check
      _
    $region47: #{asl_stgcn_forward.1} parent=1 // pred_check_branch
      %55 = sbr.rel (0) target = $region49
    $region48: #{asl_stgcn_forward.1} parent=1 // pred_region
      _
    $region49: #{asl_stgcn_forward.1} parent=1 // pred_fallthru
      _
    // Predicated region
    $region50: #{asl_stgcn_forward.1} parent=1 // pred_check
      _
    $region51: #{asl_stgcn_forward.1} parent=1 // pred_check_branch
      %57 = sbr.rel (0) target = $region53
    $region52: #{asl_stgcn_forward.1} parent=1 // pred_region
      _
    $region53: #{asl_stgcn_forward.1} parent=1 // pred_fallthru
      _
    // Predicated region
    $region54: #{asl_stgcn_forward.1} parent=1 // pred_check
      _
    $region55: #{asl_stgcn_forward.1} parent=1 // pred_check_branch
      %59 = sbr.rel (0) target = $region57
    $region56: #{asl_stgcn_forward.1} parent=1 // pred_region
      _
    $region57: #{asl_stgcn_forward.1} parent=1 // pred_fallthru
      _
    // Predicated region
    $region58: #{asl_stgcn_forward.1} parent=1 // pred_check
      _
    $region59: #{asl_stgcn_forward.1} parent=1 // pred_check_branch
      %61 = sbr.rel (0) target = $region61
    $region60: #{asl_stgcn_forward.1} parent=1 // pred_region
      _
    $region61: #{asl_stgcn_forward.1} parent=1 // pred_fallthru
      _
    // Predicated region
    $region62: #{asl_stgcn_forward.1} parent=1 // pred_check
      _
    $region63: #{asl_stgcn_forward.1} parent=1 // pred_check_branch
      %63 = sbr.rel (0) target = $region65
    $region64: #{asl_stgcn_forward.1} parent=1 // pred_region
      _
    $region65: #{asl_stgcn_forward.1} parent=1 // pred_fallthru
      _
    // Predicated region
    $region66: #{asl_stgcn_forward.1} parent=1 // pred_check
      _
    $region67: #{asl_stgcn_forward.1} parent=1 // pred_check_branch
      %65 = sbr.rel (0) target = $region69
    $region68: #{asl_stgcn_forward.1} parent=1 // pred_region
      _
    $region69: #{asl_stgcn_forward.1} parent=1 // pred_fallthru
      _
    // Predicated region
    $region70: #{asl_stgcn_forward.1} parent=1 // pred_check
      _
    $region71: #{asl_stgcn_forward.1} parent=1 // pred_check_branch
      %67 = sbr.rel (0) target = $region73
    $region72: #{asl_stgcn_forward.1} parent=1 // pred_region
      _
    $region73: #{asl_stgcn_forward.1} parent=1 // pred_fallthru
      _
    // Predicated region
    $region74: #{asl_stgcn_forward.1} parent=1 // pred_check
      _
    $region75: #{asl_stgcn_forward.1} parent=1 // pred_check_branch
      %69 = sbr.rel (0) target = $region77
    $region76: #{asl_stgcn_forward.1} parent=1 // pred_region
      _
    $region77: #{asl_stgcn_forward.1} parent=1 // pred_fallthru
      _
    // Predicated region
    $region78: #{asl_stgcn_forward.1} parent=1 // pred_check
      _
    $region79: #{asl_stgcn_forward.1} parent=1 // pred_check_branch
      %71 = sbr.rel (0) target = $region81
    $region80: #{asl_stgcn_forward.1} parent=1 // pred_region
      _
    $region81: #{asl_stgcn_forward.1} parent=1 // pred_fallthru
      _
    // Predicated region
    $region82: #{asl_stgcn_forward.1} parent=1 // pred_check
      _
    $region83: #{asl_stgcn_forward.1} parent=1 // pred_check_branch
      %73 = sbr.rel (0) target = $region85
    $region84: #{asl_stgcn_forward.1} parent=1 // pred_region
      _
    $region85: #{asl_stgcn_forward.1} parent=1 // pred_fallthru
      _
    // Predicated region
    $region86: #{asl_stgcn_forward.1} parent=1 // pred_check
      _
    $region87: #{asl_stgcn_forward.1} parent=1 // pred_check_branch
      %75 = sbr.rel (0) target = $region89
    $region88: #{asl_stgcn_forward.1} parent=1 // pred_region
      _
    $region89: #{asl_stgcn_forward.1} parent=1 // pred_fallthru
      _
    // Predicated region
    $region90: #{asl_stgcn_forward.1} parent=1 // pred_check
      _
    $region91: #{asl_stgcn_forward.1} parent=1 // pred_check_branch
      %77 = sbr.rel (0) target = $region93
    $region92: #{asl_stgcn_forward.1} parent=1 // pred_region
      _
    $region93: #{asl_stgcn_forward.1} parent=1 // pred_fallthru
      _
    // Predicated region
    $region94: #{asl_stgcn_forward.1} parent=1 // pred_check
      _
    $region95: #{asl_stgcn_forward.1} parent=1 // pred_check_branch
      %79 = sbr.rel (0) target = $region97
    $region96: #{asl_stgcn_forward.1} parent=1 // pred_region
      _
    $region97: #{asl_stgcn_forward.1} parent=1 // pred_fallthru
      _
    // Predicated region
    $region98: #{asl_stgcn_forward.1} parent=1 // pred_check
      _
    $region99: #{asl_stgcn_forward.1} parent=1 // pred_check_branch
      %81 = sbr.rel (0) target = $region101
    $region100: #{asl_stgcn_forward.1} parent=1 // pred_region
      _
    $region101: #{asl_stgcn_forward.1} parent=1 // pred_fallthru
      _
    // Predicated region
    $region102: #{asl_stgcn_forward.1} parent=1 // pred_check
      _
    $region103: #{asl_stgcn_forward.1} parent=1 // pred_check_branch
      %83 = sbr.rel (0) target = $region105
    $region104: #{asl_stgcn_forward.1} parent=1 // pred_region
      _
    $region105: #{asl_stgcn_forward.1} parent=1 // pred_fallthru
      _
    %v84 = vld [vmem:[%s0] sm:$0xff]
    %v85 = vld [vmem:[%s0 + $0x8] sm:$0xff]
    %v86 = vld [vmem:[%s0 + $0x10] sm:$0xff]
    %v87 = vld [vmem:[%s0 + $0x18] sm:$0xff]
    %v88 = vld [vmem:[%s0 + $0x20] sm:$0xff]
    %v89 = vld [vmem:[%s0 + $0x28] sm:$0xff]
    %v90 = vld [vmem:[%s0 + $0x30] sm:$0xff]
    %v91 = vld [vmem:[%s0 + $0x38] sm:$0xff]
    %v92 = vld [vmem:[%s0 + $0x40] sm:$0xff]
    %v93 = vld [vmem:[%s0 + $0x48] sm:$0xff]
    %v94 = vld [vmem:[%s0 + $0x50] sm:$0xff]
    %v95 = vld [vmem:[%s0 + $0x58] sm:$0xff]
    %v96 = vld [vmem:[%s0 + $0x60] sm:$0xff]
    %v97 = vld [vmem:[%s0 + $0x68] sm:$0xff]
    %v98 = vld [vmem:[%s0 + $0x70] sm:$0xff]
    %v99 = vld [vmem:[%s0 + $0x78] sm:$0xff]
    %v100 = vld [vmem:[%s0 + $0x80] sm:$0xff]
    %v101 = vld [vmem:[%s0 + $0x88] sm:$0xff]
    %v102 = vld [vmem:[%s0 + $0x90] sm:$0xff]
    %v103 = vld [vmem:[%s0 + $0x98] sm:$0xff]
    %v104 = vld [vmem:[%s0 + $0xa0] sm:$0xff]
    %v105 = vld [vmem:[%s0 + $0xa8] sm:$0xff]
    %v106 = vld [vmem:[%s0 + $0xb0] sm:$0xff]
    %v107 = vld [vmem:[%s0 + $0xb8] sm:$0xff]
    %v108 = vld [vmem:[%s2] sm:$0x3]
    %v109 = vld [vmem:[%s1] sm:$0xff]
    %v111 = vcombine.high %v109, %v109
    %vm112 = vcmask 31744
    %v114 = vsel %vm112, %v84, 0
    %v117 = vsel %vm112, %v85, 0
    %v120 = vsel %vm112, %v86, 0
    %v123 = vsel %vm112, %v87, 0
    %v126 = vsel %vm112, %v88, 0
    %v129 = vsel %vm112, %v89, 0
    %v132 = vsel %vm112, %v90, 0
    %v135 = vsel %vm112, %v91, 0
    %v138 = vsel %vm112, %v92, 0
    %v141 = vsel %vm112, %v93, 0
    %v144 = vsel %vm112, %v94, 0
    %v147 = vsel %vm112, %v95, 0
    %v150 = vsel %vm112, %v96, 0
    %v153 = vsel %vm112, %v97, 0
    %v156 = vsel %vm112, %v98, 0
    %v159 = vsel %vm112, %v99, 0
    %v162 = vsel %vm112, %v100, 0
    %v165 = vsel %vm112, %v101, 0
    %v168 = vsel %vm112, %v102, 0
    %v171 = vsel %vm112, %v103, 0
    %vm173 = vcmask 1043456
    %v174 = vsel %vm173, %v109, 0
    %v176 = vsel %vm173, %v111, 0
    %178 = vmatprep.subr.mxu0 0.0
    %179 = vmatpush1.msra.mxu0 0.0
    %180 = vmatprep.subr.mxu0 0.0
    %181 = vmatpush1.msra.mxu0 0.0
    %182 = vmatprep.subr.mxu0 0.0
    %183 = vmatpush1.msra.mxu0 0.0
    %184 = vmatprep.subr.mxu0 0.0
    %185 = vmatpush1.msra.mxu0 0.0
    %186 = vmatprep.subr.mxu0 0.0
    %187 = vmatpush1.msra.mxu0 0.0
    %188 = vmatprep.subr.mxu0 0.0
    %189 = vmatpush1.msra.mxu0 0.0
    %190 = vmatprep.subr.mxu0 0.0
    %191 = vmatpush1.msra.mxu0 0.0
    %192 = vmatprep.subr.mxu0 0.0
    %193 = vmatpush1.msra.mxu0 0.0
    %194 = vmatprep.subr.mxu0 0.0
    %195 = vmatpush1.msra.mxu0 0.0
    %196 = vmatprep.subr.mxu0 0.0
    %197 = vmatpush1.msra.mxu0 0.0
    %198 = vmatprep.subr.mxu0 0.0
    %199 = vmatpush1.msra.mxu0 0.0
    %200 = vmatprep.subr.mxu0 0.0
    %201 = vmatpush1.msra.mxu0 0.0
    %202 = vmatprep.subr.mxu0 0.0
    %203 = vmatpush1.msra.mxu0 0.0
    %204 = vmatprep.subr.mxu0 0.0
    %205 = vmatpush1.msra.mxu0 0.0
    %206 = vmatprep.subr.mxu0 0.0
    %207 = vmatpush1.msra.mxu0 0.0
    %208 = vmatprep.subr.mxu0 %v176
    %209 = vmatpush1.msra.mxu0 %v174
    %210 = vmatprep.subr.mxu0 0.0
    %211 = vmatpush2.msra.mxu0 0.0
    %212 = vmatprep.subr.mxu0 0.0
    %213 = vmatpush2.msra.mxu0 0.0
    %214 = vmatprep.subr.mxu0 0.0
    %215 = vmatpush2.msra.mxu0 0.0
    %216 = vmatprep.subr.mxu0 0.0
    %217 = vmatpush2.msra.mxu0 0.0
    %218 = vmatprep.subr.mxu0 0.0
    %219 = vmatpush2.msra.mxu0 0.0
    %220 = vmatprep.subr.mxu0 0.0
    %221 = vmatpush2.msra.mxu0 0.0
    %222 = vmatprep.subr.mxu0 0.0
    %223 = vmatpush2.msra.mxu0 0.0
    %224 = vmatprep.subr.mxu0 0.0
    %225 = vmatpush2.msra.mxu0 0.0
    %226 = vmatprep.subr.mxu0 0.0
    %227 = vmatpush2.msra.mxu0 0.0
    %228 = vmatprep.subr.mxu0 0.0
    %229 = vmatpush2.msra.mxu0 0.0
    %230 = vmatprep.subr.mxu0 0.0
    %231 = vmatpush2.msra.mxu0 0.0
    %232 = vmatprep.subr.mxu0 0.0
    %233 = vmatpush2.msra.mxu0 0.0
    %234 = vmatprep.subr.mxu0 0.0
    %235 = vmatpush2.msra.mxu0 0.0
    %236 = vmatprep.subr.mxu0 0.0
    %237 = vmatpush2.msra.mxu0 0.0
    %238 = vmatprep.subr.mxu0 0.0
    %239 = vmatpush2.msra.mxu0 0.0
    %240 = vmatprep.subr.mxu0 0.0
    %241 = vmatpush2.msra.mxu0 0.0
    %242 = vmatprep.mubr.f32.mxu0 0.0
    %243 = vmatmul.mubr.f32.gmra.mxu0 %v114
    %v244 = vpop.f32.mrf.mxu0
    %v245 = vadd.f32 0.0, %v244
    %v246 = vpop.f32.mrf.mxu0
    %v247 = vadd.f32 0.0, %v246
    %248 = vmatprep.mubr.f32.mxu0 0.0
    %249 = vmatmul.mubr.f32.gmra.mxu0 %v117
    %v250 = vpop.f32.mrf.mxu0
    %v251 = vadd.f32 0.0, %v250
    %v252 = vpop.f32.mrf.mxu0
    %v253 = vadd.f32 0.0, %v252
    %254 = vmatprep.mubr.f32.mxu0 0.0
    %255 = vmatmul.mubr.f32.gmra.mxu0 %v120
    %v256 = vpop.f32.mrf.mxu0
    %v257 = vadd.f32 0.0, %v256
    %v258 = vpop.f32.mrf.mxu0
    %v259 = vadd.f32 0.0, %v258
    %260 = vmatprep.mubr.f32.mxu0 0.0
    %261 = vmatmul.mubr.f32.gmra.mxu0 %v123
    %v262 = vpop.f32.mrf.mxu0
    %v263 = vadd.f32 0.0, %v262
    %v264 = vpop.f32.mrf.mxu0
    %v265 = vadd.f32 0.0, %v264
    %266 = vmatprep.mubr.f32.mxu0 0.0
    %267 = vmatmul.mubr.f32.gmra.mxu0 %v126
    %v268 = vpop.f32.mrf.mxu0
    %v269 = vadd.f32 0.0, %v268
    %v270 = vpop.f32.mrf.mxu0
    %v271 = vadd.f32 0.0, %v270
    %272 = vmatprep.mubr.f32.mxu0 0.0
    %273 = vmatmul.mubr.f32.gmra.mxu0 %v129
    %v274 = vpop.f32.mrf.mxu0
    %v275 = vadd.f32 0.0, %v274
    %v276 = vpop.f32.mrf.mxu0
    %v277 = vadd.f32 0.0, %v276
    %278 = vmatprep.mubr.f32.mxu0 0.0
    %279 = vmatmul.mubr.f32.gmra.mxu0 %v132
    %v280 = vpop.f32.mrf.mxu0
    %v281 = vadd.f32 0.0, %v280
    %v282 = vpop.f32.mrf.mxu0
    %v283 = vadd.f32 0.0, %v282
    %284 = vmatprep.mubr.f32.mxu0 0.0
    %285 = vmatmul.mubr.f32.gmra.mxu0 %v135
    %v286 = vpop.f32.mrf.mxu0
    %v287 = vadd.f32 0.0, %v286
    %v288 = vpop.f32.mrf.mxu0
    %v289 = vadd.f32 0.0, %v288
    %290 = vmatprep.mubr.f32.mxu0 0.0
    %291 = vmatmul.mubr.f32.gmra.mxu0 %v138
    %v292 = vpop.f32.mrf.mxu0
    %v293 = vadd.f32 0.0, %v292
    %v294 = vpop.f32.mrf.mxu0
    %v295 = vadd.f32 0.0, %v294
    %296 = vmatprep.mubr.f32.mxu0 0.0
    %297 = vmatmul.mubr.f32.gmra.mxu0 %v141
    %v298 = vpop.f32.mrf.mxu0
    %v299 = vadd.f32 0.0, %v298
    %v300 = vpop.f32.mrf.mxu0
    %v301 = vadd.f32 0.0, %v300
    %302 = vmatprep.mubr.f32.mxu0 0.0
    %303 = vmatmul.mubr.f32.gmra.mxu0 %v144
    %v304 = vpop.f32.mrf.mxu0
    %v305 = vadd.f32 0.0, %v304
    %v306 = vpop.f32.mrf.mxu0
    %v307 = vadd.f32 0.0, %v306
    %308 = vmatprep.mubr.f32.mxu0 0.0
    %309 = vmatmul.mubr.f32.gmra.mxu0 %v147
    %v310 = vpop.f32.mrf.mxu0
    %v311 = vadd.f32 0.0, %v310
    %v312 = vpop.f32.mrf.mxu0
    %v313 = vadd.f32 0.0, %v312
    %314 = vmatprep.mubr.f32.mxu0 0.0
    %315 = vmatmul.mubr.f32.gmra.mxu0 %v150
    %v316 = vpop.f32.mrf.mxu0
    %v317 = vadd.f32 0.0, %v316
    %v318 = vpop.f32.mrf.mxu0
    %v319 = vadd.f32 0.0, %v318
    %320 = vmatprep.mubr.f32.mxu0 0.0
    %321 = vmatmul.mubr.f32.gmra.mxu0 %v153
    %v322 = vpop.f32.mrf.mxu0
    %v323 = vadd.f32 0.0, %v322
    %v324 = vpop.f32.mrf.mxu0
    %v325 = vadd.f32 0.0, %v324
    %326 = vmatprep.mubr.f32.mxu0 0.0
    %327 = vmatmul.mubr.f32.gmra.mxu0 %v156
    %v328 = vpop.f32.mrf.mxu0
    %v329 = vadd.f32 0.0, %v328
    %v330 = vpop.f32.mrf.mxu0
    %v331 = vadd.f32 0.0, %v330
    %332 = vmatprep.mubr.f32.mxu0 0.0
    %333 = vmatmul.mubr.f32.gmra.mxu0 %v159
    %v334 = vpop.f32.mrf.mxu0
    %v335 = vadd.f32 0.0, %v334
    %v336 = vpop.f32.mrf.mxu0
    %v337 = vadd.f32 0.0, %v336
    %338 = vmatprep.mubr.f32.mxu0 0.0
    %339 = vmatmul.mubr.f32.gmra.mxu0 %v162
    %v340 = vpop.f32.mrf.mxu0
    %v341 = vadd.f32 0.0, %v340
    %v342 = vpop.f32.mrf.mxu0
    %v343 = vadd.f32 0.0, %v342
    %344 = vmatprep.mubr.f32.mxu0 0.0
    %345 = vmatmul.mubr.f32.gmra.mxu0 %v165
    %v346 = vpop.f32.mrf.mxu0
    %v347 = vadd.f32 0.0, %v346
    %v348 = vpop.f32.mrf.mxu0
    %v349 = vadd.f32 0.0, %v348
    %350 = vmatprep.mubr.f32.mxu0 0.0
    %351 = vmatmul.mubr.f32.gmra.mxu0 %v168
    %v352 = vpop.f32.mrf.mxu0
    %v353 = vadd.f32 0.0, %v352
    %v354 = vpop.f32.mrf.mxu0
    %v355 = vadd.f32 0.0, %v354
    %356 = vmatprep.mubr.f32.mxu0 0.0
    %357 = vmatmul.mubr.f32.gmra.mxu0 %v171
    %v358 = vpop.f32.mrf.mxu0
    %v359 = vadd.f32 0.0, %v358
    %v360 = vpop.f32.mrf.mxu0
    %v361 = vadd.f32 0.0, %v360
    %362 = vdwg.mxu0
    %v364 = vlaneseq
    %v365 = vshrl.u32 %v364, 7
    %v366 = vsub.s32 0, %v365
    %v367 = vrot.slane %v108, %v366
    %v368 = vlaneseq
    %v369 = vshrl.u32 %v368, 7
    %v370 = vsub.s32 1, %v369
    %v371 = vrot.slane %v108, %v370
    %v374 = vadd.f32 %v367, %v245
    %v375 = vadd.f32 %v371, %v247
    %v376 = vadd.f32 %v367, %v251
    %v377 = vadd.f32 %v371, %v253
    %v378 = vadd.f32 %v367, %v257
    %v379 = vadd.f32 %v371, %v259
    %v380 = vadd.f32 %v367, %v263
    %v381 = vadd.f32 %v371, %v265
    %v382 = vadd.f32 %v367, %v269
    %v383 = vadd.f32 %v371, %v271
    %v384 = vadd.f32 %v367, %v275
    %v385 = vadd.f32 %v371, %v277
    %v386 = vadd.f32 %v367, %v281
    %v387 = vadd.f32 %v371, %v283
    %v388 = vadd.f32 %v367, %v287
    %v389 = vadd.f32 %v371, %v289
    %v390 = vadd.f32 %v367, %v293
    %v391 = vadd.f32 %v371, %v295
    %v392 = vadd.f32 %v367, %v299
    %v393 = vadd.f32 %v371, %v301
    %v394 = vadd.f32 %v367, %v305
    %v395 = vadd.f32 %v371, %v307
    %v396 = vadd.f32 %v367, %v311
    %v397 = vadd.f32 %v371, %v313
    %v398 = vadd.f32 %v367, %v317
    %v399 = vadd.f32 %v371, %v319
    %v400 = vadd.f32 %v367, %v323
    %v401 = vadd.f32 %v371, %v325
    %v402 = vadd.f32 %v367, %v329
    %v403 = vadd.f32 %v371, %v331
    %v404 = vadd.f32 %v367, %v335
    %v405 = vadd.f32 %v371, %v337
    %v406 = vadd.f32 %v367, %v341
    %v407 = vadd.f32 %v371, %v343
    %v408 = vadd.f32 %v367, %v347
    %v409 = vadd.f32 %v371, %v349
    %v410 = vadd.f32 %v367, %v353
    %v411 = vadd.f32 %v371, %v355
    %v412 = vadd.f32 %v367, %v359
    %v413 = vadd.f32 %v371, %v361
    %s414 = scalar_lea.vmem %s1, 8
    %v415 = vld [vmem:[%s414] sm:$0xff]
    %v417 = vcombine.high %v415, %v415
    %v419 = vsel %vm112, %v104, 0
    %v422 = vsel %vm112, %v105, 0
    %v424 = vsel %vm173, %v415, 0
    %v426 = vsel %vm173, %v417, 0
    %428 = vmatprep.subr.mxu0 0.0
    %429 = vmatpush1.msra.mxu0 0.0
    %430 = vmatprep.subr.mxu0 0.0
    %431 = vmatpush1.msra.mxu0 0.0
    %432 = vmatprep.subr.mxu0 0.0
    %433 = vmatpush1.msra.mxu0 0.0
    %434 = vmatprep.subr.mxu0 0.0
    %435 = vmatpush1.msra.mxu0 0.0
    %436 = vmatprep.subr.mxu0 0.0
    %437 = vmatpush1.msra.mxu0 0.0
    %438 = vmatprep.subr.mxu0 0.0
    %439 = vmatpush1.msra.mxu0 0.0
    %440 = vmatprep.subr.mxu0 0.0
    %441 = vmatpush1.msra.mxu0 0.0
    %442 = vmatprep.subr.mxu0 0.0
    %443 = vmatpush1.msra.mxu0 0.0
    %444 = vmatprep.subr.mxu0 0.0
    %445 = vmatpush1.msra.mxu0 0.0
    %446 = vmatprep.subr.mxu0 0.0
    %447 = vmatpush1.msra.mxu0 0.0
    %448 = vmatprep.subr.mxu0 0.0
    %449 = vmatpush1.msra.mxu0 0.0
    %450 = vmatprep.subr.mxu0 0.0
    %451 = vmatpush1.msra.mxu0 0.0
    %452 = vmatprep.subr.mxu0 0.0
    %453 = vmatpush1.msra.mxu0 0.0
    %454 = vmatprep.subr.mxu0 0.0
    %455 = vmatpush1.msra.mxu0 0.0
    %456 = vmatprep.subr.mxu0 0.0
    %457 = vmatpush1.msra.mxu0 0.0
    %458 = vmatprep.subr.mxu0 %v426
    %459 = vmatpush1.msra.mxu0 %v424
    %460 = vmatprep.subr.mxu0 0.0
    %461 = vmatpush2.msra.mxu0 0.0
    %462 = vmatprep.subr.mxu0 0.0
    %463 = vmatpush2.msra.mxu0 0.0
    %464 = vmatprep.subr.mxu0 0.0
    %465 = vmatpush2.msra.mxu0 0.0
    %466 = vmatprep.subr.mxu0 0.0
    %467 = vmatpush2.msra.mxu0 0.0
    %468 = vmatprep.subr.mxu0 0.0
    %469 = vmatpush2.msra.mxu0 0.0
    %470 = vmatprep.subr.mxu0 0.0
    %471 = vmatpush2.msra.mxu0 0.0
    %472 = vmatprep.subr.mxu0 0.0
    %473 = vmatpush2.msra.mxu0 0.0
    %474 = vmatprep.subr.mxu0 0.0
    %475 = vmatpush2.msra.mxu0 0.0
    %476 = vmatprep.subr.mxu0 0.0
    %477 = vmatpush2.msra.mxu0 0.0
    %478 = vmatprep.subr.mxu0 0.0
    %479 = vmatpush2.msra.mxu0 0.0
    %480 = vmatprep.subr.mxu0 0.0
    %481 = vmatpush2.msra.mxu0 0.0
    %482 = vmatprep.subr.mxu0 0.0
    %483 = vmatpush2.msra.mxu0 0.0
    %484 = vmatprep.subr.mxu0 0.0
    %485 = vmatpush2.msra.mxu0 0.0
    %486 = vmatprep.subr.mxu0 0.0
    %487 = vmatpush2.msra.mxu0 0.0
    %488 = vmatprep.subr.mxu0 0.0
    %489 = vmatpush2.msra.mxu0 0.0
    %490 = vmatprep.subr.mxu0 0.0
    %491 = vmatpush2.msra.mxu0 0.0
    %492 = vmatprep.mubr.f32.mxu0 0.0
    %493 = vmatmul.mubr.f32.gmra.mxu0 %v120
    %v494 = vpop.f32.mrf.mxu0
    %v495 = vadd.f32 0.0, %v494
    %v496 = vpop.f32.mrf.mxu0
    %v497 = vadd.f32 0.0, %v496
    %498 = vmatprep.mubr.f32.mxu0 0.0
    %499 = vmatmul.mubr.f32.gmra.mxu0 %v123
    %v500 = vpop.f32.mrf.mxu0
    %v501 = vadd.f32 0.0, %v500
    %v502 = vpop.f32.mrf.mxu0
    %v503 = vadd.f32 0.0, %v502
    %504 = vmatprep.mubr.f32.mxu0 0.0
    %505 = vmatmul.mubr.f32.gmra.mxu0 %v126
    %v506 = vpop.f32.mrf.mxu0
    %v507 = vadd.f32 0.0, %v506
    %v508 = vpop.f32.mrf.mxu0
    %v509 = vadd.f32 0.0, %v508
    %510 = vmatprep.mubr.f32.mxu0 0.0
    %511 = vmatmul.mubr.f32.gmra.mxu0 %v129
    %v512 = vpop.f32.mrf.mxu0
    %v513 = vadd.f32 0.0, %v512
    %v514 = vpop.f32.mrf.mxu0
    %v515 = vadd.f32 0.0, %v514
    %516 = vmatprep.mubr.f32.mxu0 0.0
    %517 = vmatmul.mubr.f32.gmra.mxu0 %v132
    %v518 = vpop.f32.mrf.mxu0
    %v519 = vadd.f32 0.0, %v518
    %v520 = vpop.f32.mrf.mxu0
    %v521 = vadd.f32 0.0, %v520
    %522 = vmatprep.mubr.f32.mxu0 0.0
    %523 = vmatmul.mubr.f32.gmra.mxu0 %v135
    %v524 = vpop.f32.mrf.mxu0
    %v525 = vadd.f32 0.0, %v524
    %v526 = vpop.f32.mrf.mxu0
    %v527 = vadd.f32 0.0, %v526
    %528 = vmatprep.mubr.f32.mxu0 0.0
    %529 = vmatmul.mubr.f32.gmra.mxu0 %v138
    %v530 = vpop.f32.mrf.mxu0
    %v531 = vadd.f32 0.0, %v530
    %v532 = vpop.f32.mrf.mxu0
    %v533 = vadd.f32 0.0, %v532
    %534 = vmatprep.mubr.f32.mxu0 0.0
    %535 = vmatmul.mubr.f32.gmra.mxu0 %v141
    %v536 = vpop.f32.mrf.mxu0
    %v537 = vadd.f32 0.0, %v536
    %v538 = vpop.f32.mrf.mxu0
    %v539 = vadd.f32 0.0, %v538
    %540 = vmatprep.mubr.f32.mxu0 0.0
    %541 = vmatmul.mubr.f32.gmra.mxu0 %v144
    %v542 = vpop.f32.mrf.mxu0
    %v543 = vadd.f32 0.0, %v542
    %v544 = vpop.f32.mrf.mxu0
    %v545 = vadd.f32 0.0, %v544
    %546 = vmatprep.mubr.f32.mxu0 0.0
    %547 = vmatmul.mubr.f32.gmra.mxu0 %v147
    %v548 = vpop.f32.mrf.mxu0
    %v549 = vadd.f32 0.0, %v548
    %v550 = vpop.f32.mrf.mxu0
    %v551 = vadd.f32 0.0, %v550
    %552 = vmatprep.mubr.f32.mxu0 0.0
    %553 = vmatmul.mubr.f32.gmra.mxu0 %v150
    %v554 = vpop.f32.mrf.mxu0
    %v555 = vadd.f32 0.0, %v554
    %v556 = vpop.f32.mrf.mxu0
    %v557 = vadd.f32 0.0, %v556
    %558 = vmatprep.mubr.f32.mxu0 0.0
    %559 = vmatmul.mubr.f32.gmra.mxu0 %v153
    %v560 = vpop.f32.mrf.mxu0
    %v561 = vadd.f32 0.0, %v560
    %v562 = vpop.f32.mrf.mxu0
    %v563 = vadd.f32 0.0, %v562
    %564 = vmatprep.mubr.f32.mxu0 0.0
    %565 = vmatmul.mubr.f32.gmra.mxu0 %v156
    %v566 = vpop.f32.mrf.mxu0
    %v567 = vadd.f32 0.0, %v566
    %v568 = vpop.f32.mrf.mxu0
    %v569 = vadd.f32 0.0, %v568
    %570 = vmatprep.mubr.f32.mxu0 0.0
    %571 = vmatmul.mubr.f32.gmra.mxu0 %v159
    %v572 = vpop.f32.mrf.mxu0
    %v573 = vadd.f32 0.0, %v572
    %v574 = vpop.f32.mrf.mxu0
    %v575 = vadd.f32 0.0, %v574
    %576 = vmatprep.mubr.f32.mxu0 0.0
    %577 = vmatmul.mubr.f32.gmra.mxu0 %v162
    %v578 = vpop.f32.mrf.mxu0
    %v579 = vadd.f32 0.0, %v578
    %v580 = vpop.f32.mrf.mxu0
    %v581 = vadd.f32 0.0, %v580
    %582 = vmatprep.mubr.f32.mxu0 0.0
    %583 = vmatmul.mubr.f32.gmra.mxu0 %v165
    %v584 = vpop.f32.mrf.mxu0
    %v585 = vadd.f32 0.0, %v584
    %v586 = vpop.f32.mrf.mxu0
    %v587 = vadd.f32 0.0, %v586
    %588 = vmatprep.mubr.f32.mxu0 0.0
    %589 = vmatmul.mubr.f32.gmra.mxu0 %v168
    %v590 = vpop.f32.mrf.mxu0
    %v591 = vadd.f32 0.0, %v590
    %v592 = vpop.f32.mrf.mxu0
    %v593 = vadd.f32 0.0, %v592
    %594 = vmatprep.mubr.f32.mxu0 0.0
    %595 = vmatmul.mubr.f32.gmra.mxu0 %v171
    %v596 = vpop.f32.mrf.mxu0
    %v597 = vadd.f32 0.0, %v596
    %v598 = vpop.f32.mrf.mxu0
    %v599 = vadd.f32 0.0, %v598
    %600 = vmatprep.mubr.f32.mxu0 0.0
    %601 = vmatmul.mubr.f32.gmra.mxu0 %v419
    %v602 = vpop.f32.mrf.mxu0
    %v603 = vadd.f32 0.0, %v602
    %v604 = vpop.f32.mrf.mxu0
    %v605 = vadd.f32 0.0, %v604
    %606 = vmatprep.mubr.f32.mxu0 0.0
    %607 = vmatmul.mubr.f32.gmra.mxu0 %v422
    %v608 = vpop.f32.mrf.mxu0
    %v609 = vadd.f32 0.0, %v608
    %v610 = vpop.f32.mrf.mxu0
    %v611 = vadd.f32 0.0, %v610
    %612 = vdwg.mxu0
    %v613 = vadd.f32 %v374, %v495
    %v614 = vadd.f32 %v375, %v497
    %v615 = vadd.f32 %v376, %v501
    %v616 = vadd.f32 %v377, %v503
    %v617 = vadd.f32 %v378, %v507
    %v618 = vadd.f32 %v379, %v509
    %v619 = vadd.f32 %v380, %v513
    %v620 = vadd.f32 %v381, %v515
    %v621 = vadd.f32 %v382, %v519
    %v622 = vadd.f32 %v383, %v521
    %v623 = vadd.f32 %v384, %v525
    %v624 = vadd.f32 %v385, %v527
    %v625 = vadd.f32 %v386, %v531
    %v626 = vadd.f32 %v387, %v533
    %v627 = vadd.f32 %v388, %v537
    %v628 = vadd.f32 %v389, %v539
    %v629 = vadd.f32 %v390, %v543
    %v630 = vadd.f32 %v391, %v545
    %v631 = vadd.f32 %v392, %v549
    %v632 = vadd.f32 %v393, %v551
    %v633 = vadd.f32 %v394, %v555
    %v634 = vadd.f32 %v395, %v557
    %v635 = vadd.f32 %v396, %v561
    %v636 = vadd.f32 %v397, %v563
    %v637 = vadd.f32 %v398, %v567
    %v638 = vadd.f32 %v399, %v569
    %v639 = vadd.f32 %v400, %v573
    %v640 = vadd.f32 %v401, %v575
    %v641 = vadd.f32 %v402, %v579
    %v642 = vadd.f32 %v403, %v581
    %v643 = vadd.f32 %v404, %v585
    %v644 = vadd.f32 %v405, %v587
    %v645 = vadd.f32 %v406, %v591
    %v646 = vadd.f32 %v407, %v593
    %v647 = vadd.f32 %v408, %v597
    %v648 = vadd.f32 %v409, %v599
    %v649 = vadd.f32 %v410, %v603
    %v650 = vadd.f32 %v411, %v605
    %v651 = vadd.f32 %v412, %v609
    %v652 = vadd.f32 %v413, %v611
    %s653 = scalar_lea.vmem %s1, 16
    %v654 = vld [vmem:[%s653] sm:$0xff]
    %v656 = vcombine.high %v654, %v654
    %v658 = vsel %vm112, %v106, 0
    %v661 = vsel %vm112, %v107, 0
    %v663 = vsel %vm173, %v654, 0
    %v665 = vsel %vm173, %v656, 0
    %667 = vmatprep.subr.mxu0 0.0
    %668 = vmatpush1.msra.mxu0 0.0
    %669 = vmatprep.subr.mxu0 0.0
    %670 = vmatpush1.msra.mxu0 0.0
    %671 = vmatprep.subr.mxu0 0.0
    %672 = vmatpush1.msra.mxu0 0.0
    %673 = vmatprep.subr.mxu0 0.0
    %674 = vmatpush1.msra.mxu0 0.0
    %675 = vmatprep.subr.mxu0 0.0
    %676 = vmatpush1.msra.mxu0 0.0
    %677 = vmatprep.subr.mxu0 0.0
    %678 = vmatpush1.msra.mxu0 0.0
    %679 = vmatprep.subr.mxu0 0.0
    %680 = vmatpush1.msra.mxu0 0.0
    %681 = vmatprep.subr.mxu0 0.0
    %682 = vmatpush1.msra.mxu0 0.0
    %683 = vmatprep.subr.mxu0 0.0
    %684 = vmatpush1.msra.mxu0 0.0
    %685 = vmatprep.subr.mxu0 0.0
    %686 = vmatpush1.msra.mxu0 0.0
    %687 = vmatprep.subr.mxu0 0.0
    %688 = vmatpush1.msra.mxu0 0.0
    %689 = vmatprep.subr.mxu0 0.0
    %690 = vmatpush1.msra.mxu0 0.0
    %691 = vmatprep.subr.mxu0 0.0
    %692 = vmatpush1.msra.mxu0 0.0
    %693 = vmatprep.subr.mxu0 0.0
    %694 = vmatpush1.msra.mxu0 0.0
    %695 = vmatprep.subr.mxu0 0.0
    %696 = vmatpush1.msra.mxu0 0.0
    %697 = vmatprep.subr.mxu0 %v665
    %698 = vmatpush1.msra.mxu0 %v663
    %699 = vmatprep.subr.mxu0 0.0
    %700 = vmatpush2.msra.mxu0 0.0
    %701 = vmatprep.subr.mxu0 0.0
    %702 = vmatpush2.msra.mxu0 0.0
    %703 = vmatprep.subr.mxu0 0.0
    %704 = vmatpush2.msra.mxu0 0.0
    %705 = vmatprep.subr.mxu0 0.0
    %706 = vmatpush2.msra.mxu0 0.0
    %707 = vmatprep.subr.mxu0 0.0
    %708 = vmatpush2.msra.mxu0 0.0
    %709 = vmatprep.subr.mxu0 0.0
    %710 = vmatpush2.msra.mxu0 0.0
    %711 = vmatprep.subr.mxu0 0.0
    %712 = vmatpush2.msra.mxu0 0.0
    %713 = vmatprep.subr.mxu0 0.0
    %714 = vmatpush2.msra.mxu0 0.0
    %715 = vmatprep.subr.mxu0 0.0
    %716 = vmatpush2.msra.mxu0 0.0
    %717 = vmatprep.subr.mxu0 0.0
    %718 = vmatpush2.msra.mxu0 0.0
    %719 = vmatprep.subr.mxu0 0.0
    %720 = vmatpush2.msra.mxu0 0.0
    %721 = vmatprep.subr.mxu0 0.0
    %722 = vmatpush2.msra.mxu0 0.0
    %723 = vmatprep.subr.mxu0 0.0
    %724 = vmatpush2.msra.mxu0 0.0
    %725 = vmatprep.subr.mxu0 0.0
    %726 = vmatpush2.msra.mxu0 0.0
    %727 = vmatprep.subr.mxu0 0.0
    %728 = vmatpush2.msra.mxu0 0.0
    %729 = vmatprep.subr.mxu0 0.0
    %730 = vmatpush2.msra.mxu0 0.0
    %731 = vmatprep.mubr.f32.mxu0 0.0
    %732 = vmatmul.mubr.f32.gmra.mxu0 %v126
    %v733 = vpop.f32.mrf.mxu0
    %v734 = vadd.f32 0.0, %v733
    %v735 = vpop.f32.mrf.mxu0
    %v736 = vadd.f32 0.0, %v735
    %737 = vmatprep.mubr.f32.mxu0 0.0
    %738 = vmatmul.mubr.f32.gmra.mxu0 %v129
    %v739 = vpop.f32.mrf.mxu0
    %v740 = vadd.f32 0.0, %v739
    %v741 = vpop.f32.mrf.mxu0
    %v742 = vadd.f32 0.0, %v741
    %743 = vmatprep.mubr.f32.mxu0 0.0
    %744 = vmatmul.mubr.f32.gmra.mxu0 %v132
    %v745 = vpop.f32.mrf.mxu0
    %v746 = vadd.f32 0.0, %v745
    %v747 = vpop.f32.mrf.mxu0
    %v748 = vadd.f32 0.0, %v747
    %749 = vmatprep.mubr.f32.mxu0 0.0
    %750 = vmatmul.mubr.f32.gmra.mxu0 %v135
    %v751 = vpop.f32.mrf.mxu0
    %v752 = vadd.f32 0.0, %v751
    %v753 = vpop.f32.mrf.mxu0
    %v754 = vadd.f32 0.0, %v753
    %755 = vmatprep.mubr.f32.mxu0 0.0
    %756 = vmatmul.mubr.f32.gmra.mxu0 %v138
    %v757 = vpop.f32.mrf.mxu0
    %v758 = vadd.f32 0.0, %v757
    %v759 = vpop.f32.mrf.mxu0
    %v760 = vadd.f32 0.0, %v759
    %761 = vmatprep.mubr.f32.mxu0 0.0
    %762 = vmatmul.mubr.f32.gmra.mxu0 %v141
    %v763 = vpop.f32.mrf.mxu0
    %v764 = vadd.f32 0.0, %v763
    %v765 = vpop.f32.mrf.mxu0
    %v766 = vadd.f32 0.0, %v765
    %767 = vmatprep.mubr.f32.mxu0 0.0
    %768 = vmatmul.mubr.f32.gmra.mxu0 %v144
    %v769 = vpop.f32.mrf.mxu0
    %v770 = vadd.f32 0.0, %v769
    %v771 = vpop.f32.mrf.mxu0
    %v772 = vadd.f32 0.0, %v771
    %773 = vmatprep.mubr.f32.mxu0 0.0
    %774 = vmatmul.mubr.f32.gmra.mxu0 %v147
    %v775 = vpop.f32.mrf.mxu0
    %v776 = vadd.f32 0.0, %v775
    %v777 = vpop.f32.mrf.mxu0
    %v778 = vadd.f32 0.0, %v777
    %779 = vmatprep.mubr.f32.mxu0 0.0
    %780 = vmatmul.mubr.f32.gmra.mxu0 %v150
    %v781 = vpop.f32.mrf.mxu0
    %v782 = vadd.f32 0.0, %v781
    %v783 = vpop.f32.mrf.mxu0
    %v784 = vadd.f32 0.0, %v783
    %785 = vmatprep.mubr.f32.mxu0 0.0
    %786 = vmatmul.mubr.f32.gmra.mxu0 %v153
    %v787 = vpop.f32.mrf.mxu0
    %v788 = vadd.f32 0.0, %v787
    %v789 = vpop.f32.mrf.mxu0
    %v790 = vadd.f32 0.0, %v789
    %791 = vmatprep.mubr.f32.mxu0 0.0
    %792 = vmatmul.mubr.f32.gmra.mxu0 %v156
    %v793 = vpop.f32.mrf.mxu0
    %v794 = vadd.f32 0.0, %v793
    %v795 = vpop.f32.mrf.mxu0
    %v796 = vadd.f32 0.0, %v795
    %797 = vmatprep.mubr.f32.mxu0 0.0
    %798 = vmatmul.mubr.f32.gmra.mxu0 %v159
    %v799 = vpop.f32.mrf.mxu0
    %v800 = vadd.f32 0.0, %v799
    %v801 = vpop.f32.mrf.mxu0
    %v802 = vadd.f32 0.0, %v801
    %803 = vmatprep.mubr.f32.mxu0 0.0
    %804 = vmatmul.mubr.f32.gmra.mxu0 %v162
    %v805 = vpop.f32.mrf.mxu0
    %v806 = vadd.f32 0.0, %v805
    %v807 = vpop.f32.mrf.mxu0
    %v808 = vadd.f32 0.0, %v807
    %809 = vmatprep.mubr.f32.mxu0 0.0
    %810 = vmatmul.mubr.f32.gmra.mxu0 %v165
    %v811 = vpop.f32.mrf.mxu0
    %v812 = vadd.f32 0.0, %v811
    %v813 = vpop.f32.mrf.mxu0
    %v814 = vadd.f32 0.0, %v813
    %815 = vmatprep.mubr.f32.mxu0 0.0
    %816 = vmatmul.mubr.f32.gmra.mxu0 %v168
    %v817 = vpop.f32.mrf.mxu0
    %v818 = vadd.f32 0.0, %v817
    %v819 = vpop.f32.mrf.mxu0
    %v820 = vadd.f32 0.0, %v819
    %821 = vmatprep.mubr.f32.mxu0 0.0
    %822 = vmatmul.mubr.f32.gmra.mxu0 %v171
    %v823 = vpop.f32.mrf.mxu0
    %v824 = vadd.f32 0.0, %v823
    %v825 = vpop.f32.mrf.mxu0
    %v826 = vadd.f32 0.0, %v825
    %827 = vmatprep.mubr.f32.mxu0 0.0
    %828 = vmatmul.mubr.f32.gmra.mxu0 %v419
    %v829 = vpop.f32.mrf.mxu0
    %v830 = vadd.f32 0.0, %v829
    %v831 = vpop.f32.mrf.mxu0
    %v832 = vadd.f32 0.0, %v831
    %833 = vmatprep.mubr.f32.mxu0 0.0
    %834 = vmatmul.mubr.f32.gmra.mxu0 %v422
    %v835 = vpop.f32.mrf.mxu0
    %v836 = vadd.f32 0.0, %v835
    %v837 = vpop.f32.mrf.mxu0
    %v838 = vadd.f32 0.0, %v837
    %839 = vmatprep.mubr.f32.mxu0 0.0
    %840 = vmatmul.mubr.f32.gmra.mxu0 %v658
    %v841 = vpop.f32.mrf.mxu0
    %v842 = vadd.f32 0.0, %v841
    %v843 = vpop.f32.mrf.mxu0
    %v844 = vadd.f32 0.0, %v843
    %845 = vmatprep.mubr.f32.mxu0 0.0
    %846 = vmatmul.mubr.f32.gmra.mxu0 %v661
    %v847 = vpop.f32.mrf.mxu0
    %v848 = vadd.f32 0.0, %v847
    %v849 = vpop.f32.mrf.mxu0
    %v850 = vadd.f32 0.0, %v849
    %851 = vdwg.mxu0
    %v852 = vadd.f32 %v613, %v734
    %v853 = vadd.f32 %v614, %v736
    %v854 = vadd.f32 %v615, %v740
    %v855 = vadd.f32 %v616, %v742
    %v856 = vadd.f32 %v617, %v746
    %v857 = vadd.f32 %v618, %v748
    %v858 = vadd.f32 %v619, %v752
    %v859 = vadd.f32 %v620, %v754
    %v860 = vadd.f32 %v621, %v758
    %v861 = vadd.f32 %v622, %v760
    %v862 = vadd.f32 %v623, %v764
    %v863 = vadd.f32 %v624, %v766
    %v864 = vadd.f32 %v625, %v770
    %v865 = vadd.f32 %v626, %v772
    %v866 = vadd.f32 %v627, %v776
    %v867 = vadd.f32 %v628, %v778
    %v868 = vadd.f32 %v629, %v782
    %v869 = vadd.f32 %v630, %v784
    %v870 = vadd.f32 %v631, %v788
    %v871 = vadd.f32 %v632, %v790
    %v872 = vadd.f32 %v633, %v794
    %v873 = vadd.f32 %v634, %v796
    %v874 = vadd.f32 %v635, %v800
    %v875 = vadd.f32 %v636, %v802
    %v876 = vadd.f32 %v637, %v806
    %v877 = vadd.f32 %v638, %v808
    %v878 = vadd.f32 %v639, %v812
    %v879 = vadd.f32 %v640, %v814
    %v880 = vadd.f32 %v641, %v818
    %v881 = vadd.f32 %v642, %v820
    %v882 = vadd.f32 %v643, %v824
    %v883 = vadd.f32 %v644, %v826
    %v884 = vadd.f32 %v645, %v830
    %v885 = vadd.f32 %v646, %v832
    %v886 = vadd.f32 %v647, %v836
    %v887 = vadd.f32 %v648, %v838
    %v888 = vadd.f32 %v649, %v842
    %v889 = vadd.f32 %v650, %v844
    %v890 = vadd.f32 %v651, %v848
    %v891 = vadd.f32 %v652, %v850
    %v892 = vsub.f32 0.0, %v852
    %v893 = vsub.f32 0.0, %v854
    %v894 = vsub.f32 0.0, %v856
    %v895 = vsub.f32 0.0, %v858
    %v896 = vsub.f32 0.0, %v860
    %v897 = vsub.f32 0.0, %v862
    %v898 = vsub.f32 0.0, %v864
    %v899 = vsub.f32 0.0, %v866
    %v900 = vsub.f32 0.0, %v868
    %v901 = vsub.f32 0.0, %v870
    %v902 = vsub.f32 0.0, %v872
    %v903 = vsub.f32 0.0, %v874
    %v904 = vsub.f32 0.0, %v876
    %v905 = vsub.f32 0.0, %v878
    %v906 = vsub.f32 0.0, %v880
    %v907 = vsub.f32 0.0, %v882
    %v908 = vsub.f32 0.0, %v884
    %v909 = vsub.f32 0.0, %v886
    %v910 = vsub.f32 0.0, %v888
    %v911 = vsub.f32 0.0, %v890
    %v912 = vmul.f32 %v892, 1.442695
    %v913 = vpow.pop %v912
    %v914 = vmul.f32 %v893, 1.442695
    %v915 = vpow.pop %v914
    %v916 = vmul.f32 %v894, 1.442695
    %v917 = vpow.pop %v916
    %v918 = vmul.f32 %v895, 1.442695
    %v919 = vpow.pop %v918
    %v920 = vmul.f32 %v896, 1.442695
    %v921 = vpow.pop %v920
    %v922 = vmul.f32 %v897, 1.442695
    %v923 = vpow.pop %v922
    %v924 = vmul.f32 %v898, 1.442695
    %v925 = vpow.pop %v924
    %v926 = vmul.f32 %v899, 1.442695
    %v927 = vpow.pop %v926
    %v928 = vmul.f32 %v900, 1.442695
    %v929 = vpow.pop %v928
    %v930 = vmul.f32 %v901, 1.442695
    %v931 = vpow.pop %v930
    %v932 = vmul.f32 %v902, 1.442695
    %v933 = vpow.pop %v932
    %v934 = vmul.f32 %v903, 1.442695
    %v935 = vpow.pop %v934
    %v936 = vmul.f32 %v904, 1.442695
    %v937 = vpow.pop %v936
    %v938 = vmul.f32 %v905, 1.442695
    %v939 = vpow.pop %v938
    %v940 = vmul.f32 %v906, 1.442695
    %v941 = vpow.pop %v940
    %v942 = vmul.f32 %v907, 1.442695
    %v943 = vpow.pop %v942
    %v944 = vmul.f32 %v908, 1.442695
    %v945 = vpow.pop %v944
    %v946 = vmul.f32 %v909, 1.442695
    %v947 = vpow.pop %v946
    %v948 = vmul.f32 %v910, 1.442695
    %v949 = vpow.pop %v948
    %v950 = vmul.f32 %v911, 1.442695
    %v951 = vpow.pop %v950
    %v952 = vadd.f32 %v913, 1.0
    %v953 = vadd.f32 %v915, 1.0
    %v954 = vadd.f32 %v917, 1.0
    %v955 = vadd.f32 %v919, 1.0
    %v956 = vadd.f32 %v921, 1.0
    %v957 = vadd.f32 %v923, 1.0
    %v958 = vadd.f32 %v925, 1.0
    %v959 = vadd.f32 %v927, 1.0
    %v960 = vadd.f32 %v929, 1.0
    %v961 = vadd.f32 %v931, 1.0
    %v962 = vadd.f32 %v933, 1.0
    %v963 = vadd.f32 %v935, 1.0
    %v964 = vadd.f32 %v937, 1.0
    %v965 = vadd.f32 %v939, 1.0
    %v966 = vadd.f32 %v941, 1.0
    %v967 = vadd.f32 %v943, 1.0
    %v968 = vadd.f32 %v945, 1.0
    %v969 = vadd.f32 %v947, 1.0
    %v970 = vadd.f32 %v949, 1.0
    %v971 = vadd.f32 %v951, 1.0
    %v972 = vrcp.pop %v952
    %v973 = vrcp.pop %v953
    %v974 = vrcp.pop %v954
    %v975 = vrcp.pop %v955
    %v976 = vrcp.pop %v956
    %v977 = vrcp.pop %v957
    %v978 = vrcp.pop %v958
    %v979 = vrcp.pop %v959
    %v980 = vrcp.pop %v960
    %v981 = vrcp.pop %v961
    %v982 = vrcp.pop %v962
    %v983 = vrcp.pop %v963
    %v984 = vrcp.pop %v964
    %v985 = vrcp.pop %v965
    %v986 = vrcp.pop %v966
    %v987 = vrcp.pop %v967
    %v988 = vrcp.pop %v968
    %v989 = vrcp.pop %v969
    %v990 = vrcp.pop %v970
    %v991 = vrcp.pop %v971
    %1012 = vrot.lane.b32.xlu0 %v972, 64
    %v1013 = vpop.permute.xlu0 %1012
    %1014 = vrot.lane.b32.xlu0 %v973, 64
    %v1015 = vpop.permute.xlu0 %1014
    %1016 = vrot.lane.b32.xlu0 %v974, 64
    %v1017 = vpop.permute.xlu0 %1016
    %1018 = vrot.lane.b32.xlu0 %v975, 64
    %v1019 = vpop.permute.xlu0 %1018
    %1020 = vrot.lane.b32.xlu0 %v976, 64
    %v1021 = vpop.permute.xlu0 %1020
    %1022 = vrot.lane.b32.xlu0 %v977, 64
    %v1023 = vpop.permute.xlu0 %1022
    %1024 = vrot.lane.b32.xlu0 %v978, 64
    %v1025 = vpop.permute.xlu0 %1024
    %1026 = vrot.lane.b32.xlu0 %v979, 64
    %v1027 = vpop.permute.xlu0 %1026
    %1028 = vrot.lane.b32.xlu0 %v980, 64
    %v1029 = vpop.permute.xlu0 %1028
    %1030 = vrot.lane.b32.xlu0 %v981, 64
    %v1031 = vpop.permute.xlu0 %1030
    %1032 = vrot.lane.b32.xlu0 %v982, 64
    %v1033 = vpop.permute.xlu0 %1032
    %1034 = vrot.lane.b32.xlu0 %v983, 64
    %v1035 = vpop.permute.xlu0 %1034
    %1036 = vrot.lane.b32.xlu0 %v984, 64
    %v1037 = vpop.permute.xlu0 %1036
    %1038 = vrot.lane.b32.xlu0 %v985, 64
    %v1039 = vpop.permute.xlu0 %1038
    %1040 = vrot.lane.b32.xlu0 %v986, 64
    %v1041 = vpop.permute.xlu0 %1040
    %1042 = vrot.lane.b32.xlu0 %v987, 64
    %v1043 = vpop.permute.xlu0 %1042
    %1044 = vrot.lane.b32.xlu0 %v988, 64
    %v1045 = vpop.permute.xlu0 %1044
    %1046 = vrot.lane.b32.xlu0 %v989, 64
    %v1047 = vpop.permute.xlu0 %1046
    %1048 = vrot.lane.b32.xlu0 %v990, 64
    %v1049 = vpop.permute.xlu0 %1048
    %1050 = vrot.lane.b32.xlu0 %v991, 64
    %v1051 = vpop.permute.xlu0 %1050
    %v1072 = vadd.f32 %v852, %v1013
    %v1073 = vadd.f32 %v854, %v1015
    %v1074 = vadd.f32 %v856, %v1017
    %v1075 = vadd.f32 %v858, %v1019
    %v1076 = vadd.f32 %v860, %v1021
    %v1077 = vadd.f32 %v862, %v1023
    %v1078 = vadd.f32 %v864, %v1025
    %v1079 = vadd.f32 %v866, %v1027
    %v1080 = vadd.f32 %v868, %v1029
    %v1081 = vadd.f32 %v870, %v1031
    %v1082 = vadd.f32 %v872, %v1033
    %v1083 = vadd.f32 %v874, %v1035
    %v1084 = vadd.f32 %v876, %v1037
    %v1085 = vadd.f32 %v878, %v1039
    %v1086 = vadd.f32 %v880, %v1041
    %v1087 = vadd.f32 %v882, %v1043
    %v1088 = vadd.f32 %v884, %v1045
    %v1089 = vadd.f32 %v886, %v1047
    %v1090 = vadd.f32 %v888, %v1049
    %v1091 = vadd.f32 %v890, %v1051
    %v1092 = vadd.f32 %v1072, %v853
    %v1093 = vadd.f32 %v1073, %v855
    %v1094 = vadd.f32 %v1074, %v857
    %v1095 = vadd.f32 %v1075, %v859
    %v1096 = vadd.f32 %v1076, %v861
    %v1097 = vadd.f32 %v1077, %v863
    %v1098 = vadd.f32 %v1078, %v865
    %v1099 = vadd.f32 %v1079, %v867
    %v1100 = vadd.f32 %v1080, %v869
    %v1101 = vadd.f32 %v1081, %v871
    %v1102 = vadd.f32 %v1082, %v873
    %v1103 = vadd.f32 %v1083, %v875
    %v1104 = vadd.f32 %v1084, %v877
    %v1105 = vadd.f32 %v1085, %v879
    %v1106 = vadd.f32 %v1086, %v881
    %v1107 = vadd.f32 %v1087, %v883
    %v1108 = vadd.f32 %v1088, %v885
    %v1109 = vadd.f32 %v1089, %v887
    %v1110 = vadd.f32 %v1090, %v889
    %v1111 = vadd.f32 %v1091, %v891
    %v1112 = vmax.f32 %v1092, 0.0
    %v1113 = vmax.f32 %v1093, 0.0
    %v1114 = vmax.f32 %v1094, 0.0
    %v1115 = vmax.f32 %v1095, 0.0
    %v1116 = vmax.f32 %v1096, 0.0
    %v1117 = vmax.f32 %v1097, 0.0
    %v1118 = vmax.f32 %v1098, 0.0
    %v1119 = vmax.f32 %v1099, 0.0
    %v1120 = vmax.f32 %v1100, 0.0
    %v1121 = vmax.f32 %v1101, 0.0
    %v1122 = vmax.f32 %v1102, 0.0
    %v1123 = vmax.f32 %v1103, 0.0
    %v1124 = vmax.f32 %v1104, 0.0
    %v1125 = vmax.f32 %v1105, 0.0
    %v1126 = vmax.f32 %v1106, 0.0
    %v1127 = vmax.f32 %v1107, 0.0
    %v1128 = vmax.f32 %v1108, 0.0
    %v1129 = vmax.f32 %v1109, 0.0
    %v1130 = vmax.f32 %v1110, 0.0
    %v1131 = vmax.f32 %v1111, 0.0
    %v1132 = vld [vmem:[%s3] sm:$0xff]
    %v1133 = vld [vmem:[%s3 + $0x8] sm:$0xff]
    %v1134 = vld [vmem:[%s3 + $0x10] sm:$0xff]
    %v1135 = vld [vmem:[%s3 + $0x18] sm:$0xff]
    %v1136 = vld [vmem:[%s3 + $0x20] sm:$0xff]
    %v1137 = vld [vmem:[%s3 + $0x28] sm:$0xff]
    %v1138 = vld [vmem:[%s3 + $0x30] sm:$0xff]
    %v1139 = vld [vmem:[%s3 + $0x38] sm:$0xff]
    %vm1140 = vcmask 523264
    %v1142 = vsel %vm1140, %v1112, 0
    %v1145 = vsel %vm1140, %v1113, 0
    %v1148 = vsel %vm1140, %v1114, 0
    %v1151 = vsel %vm1140, %v1115, 0
    %v1154 = vsel %vm1140, %v1116, 0
    %v1157 = vsel %vm1140, %v1117, 0
    %v1160 = vsel %vm1140, %v1118, 0
    %v1163 = vsel %vm1140, %v1119, 0
    %v1166 = vsel %vm1140, %v1120, 0
    %v1169 = vsel %vm1140, %v1121, 0
    %v1172 = vsel %vm1140, %v1122, 0
    %v1175 = vsel %vm1140, %v1123, 0
    %v1178 = vsel %vm1140, %v1124, 0
    %v1181 = vsel %vm1140, %v1125, 0
    %v1184 = vsel %vm1140, %v1126, 0
    %v1187 = vsel %vm1140, %v1127, 0
    %v1190 = vsel %vm1140, %v1128, 0
    %v1193 = vsel %vm1140, %v1129, 0
    %v1196 = vsel %vm1140, %v1130, 0
    %v1199 = vsel %vm1140, %v1131, 0
    %1201 = vmatprep.subr.mxu0 0.0
    %1202 = vmatpush1.msra.mxu0 0.0
    %1203 = vmatprep.subr.mxu0 0.0
    %1204 = vmatpush1.msra.mxu0 0.0
    %1205 = vmatprep.subr.mxu0 0.0
    %1206 = vmatpush1.msra.mxu0 0.0
    %1207 = vmatprep.subr.mxu0 0.0
    %1208 = vmatpush1.msra.mxu0 0.0
    %1209 = vmatprep.subr.mxu0 0.0
    %1210 = vmatpush1.msra.mxu0 0.0
    %1211 = vmatprep.subr.mxu0 0.0
    %1212 = vmatpush1.msra.mxu0 0.0
    %1213 = vmatprep.subr.mxu0 0.0
    %1214 = vmatpush1.msra.mxu0 0.0
    %1215 = vmatprep.subr.mxu0 0.0
    %1216 = vmatpush1.msra.mxu0 0.0
    %1217 = vmatprep.subr.mxu0 0.0
    %1218 = vmatpush1.msra.mxu0 %v1139
    %1219 = vmatprep.subr.mxu0 0.0
    %1220 = vmatpush1.msra.mxu0 %v1138
    %1221 = vmatprep.subr.mxu0 0.0
    %1222 = vmatpush1.msra.mxu0 %v1137
    %1223 = vmatprep.subr.mxu0 0.0
    %1224 = vmatpush1.msra.mxu0 %v1136
    %1225 = vmatprep.subr.mxu0 0.0
    %1226 = vmatpush1.msra.mxu0 %v1135
    %1227 = vmatprep.subr.mxu0 0.0
    %1228 = vmatpush1.msra.mxu0 %v1134
    %1229 = vmatprep.subr.mxu0 0.0
    %1230 = vmatpush1.msra.mxu0 %v1133
    %1231 = vmatprep.subr.mxu0 0.0
    %1232 = vmatpush1.msra.mxu0 %v1132
    %1233 = vmatprep.subr.mxu0 0.0
    %1234 = vmatpush2.msra.mxu0 0.0
    %1235 = vmatprep.subr.mxu0 0.0
    %1236 = vmatpush2.msra.mxu0 0.0
    %1237 = vmatprep.subr.mxu0 0.0
    %1238 = vmatpush2.msra.mxu0 0.0
    %1239 = vmatprep.subr.mxu0 0.0
    %1240 = vmatpush2.msra.mxu0 0.0
    %1241 = vmatprep.subr.mxu0 0.0
    %1242 = vmatpush2.msra.mxu0 0.0
    %1243 = vmatprep.subr.mxu0 0.0
    %1244 = vmatpush2.msra.mxu0 0.0
    %1245 = vmatprep.subr.mxu0 0.0
    %1246 = vmatpush2.msra.mxu0 0.0
    %1247 = vmatprep.subr.mxu0 0.0
    %1248 = vmatpush2.msra.mxu0 0.0
    %1249 = vmatprep.subr.mxu0 0.0
    %1250 = vmatpush2.msra.mxu0 0.0
    %1251 = vmatprep.subr.mxu0 0.0
    %1252 = vmatpush2.msra.mxu0 0.0
    %1253 = vmatprep.subr.mxu0 0.0
    %1254 = vmatpush2.msra.mxu0 0.0
    %1255 = vmatprep.subr.mxu0 0.0
    %1256 = vmatpush2.msra.mxu0 0.0
    %1257 = vmatprep.subr.mxu0 0.0
    %1258 = vmatpush2.msra.mxu0 0.0
    %1259 = vmatprep.subr.mxu0 0.0
    %1260 = vmatpush2.msra.mxu0 0.0
    %1261 = vmatprep.subr.mxu0 0.0
    %1262 = vmatpush2.msra.mxu0 0.0
    %1263 = vmatprep.subr.mxu0 0.0
    %1264 = vmatpush2.msra.mxu0 0.0
    %1265 = vmatprep.mubr.f32.mxu0 0.0
    %1266 = vmatmul.mubr.f32.gmra.mxu0 %v1142
    %v1267 = vpop.f32.mrf.mxu0
    %v1268 = vadd.f32 0.0, %v1267
    %v1269 = vpop.f32.mrf.mxu0
    %1270 = vmatprep.mubr.f32.mxu0 0.0
    %1271 = vmatmul.mubr.f32.gmra.mxu0 %v1145
    %v1272 = vpop.f32.mrf.mxu0
    %v1273 = vadd.f32 0.0, %v1272
    %v1274 = vpop.f32.mrf.mxu0
    %1275 = vmatprep.mubr.f32.mxu0 0.0
    %1276 = vmatmul.mubr.f32.gmra.mxu0 %v1148
    %v1277 = vpop.f32.mrf.mxu0
    %v1278 = vadd.f32 0.0, %v1277
    %v1279 = vpop.f32.mrf.mxu0
    %1280 = vmatprep.mubr.f32.mxu0 0.0
    %1281 = vmatmul.mubr.f32.gmra.mxu0 %v1151
    %v1282 = vpop.f32.mrf.mxu0
    %v1283 = vadd.f32 0.0, %v1282
    %v1284 = vpop.f32.mrf.mxu0
    %1285 = vmatprep.mubr.f32.mxu0 0.0
    %1286 = vmatmul.mubr.f32.gmra.mxu0 %v1154
    %v1287 = vpop.f32.mrf.mxu0
    %v1288 = vadd.f32 0.0, %v1287
    %v1289 = vpop.f32.mrf.mxu0
    %1290 = vmatprep.mubr.f32.mxu0 0.0
    %1291 = vmatmul.mubr.f32.gmra.mxu0 %v1157
    %v1292 = vpop.f32.mrf.mxu0
    %v1293 = vadd.f32 0.0, %v1292
    %v1294 = vpop.f32.mrf.mxu0
    %1295 = vmatprep.mubr.f32.mxu0 0.0
    %1296 = vmatmul.mubr.f32.gmra.mxu0 %v1160
    %v1297 = vpop.f32.mrf.mxu0
    %v1298 = vadd.f32 0.0, %v1297
    %v1299 = vpop.f32.mrf.mxu0
    %1300 = vmatprep.mubr.f32.mxu0 0.0
    %1301 = vmatmul.mubr.f32.gmra.mxu0 %v1163
    %v1302 = vpop.f32.mrf.mxu0
    %v1303 = vadd.f32 0.0, %v1302
    %v1304 = vpop.f32.mrf.mxu0
    %1305 = vmatprep.mubr.f32.mxu0 0.0
    %1306 = vmatmul.mubr.f32.gmra.mxu0 %v1166
    %v1307 = vpop.f32.mrf.mxu0
    %v1308 = vadd.f32 0.0, %v1307
    %v1309 = vpop.f32.mrf.mxu0
    %1310 = vmatprep.mubr.f32.mxu0 0.0
    %1311 = vmatmul.mubr.f32.gmra.mxu0 %v1169
    %v1312 = vpop.f32.mrf.mxu0
    %v1313 = vadd.f32 0.0, %v1312
    %v1314 = vpop.f32.mrf.mxu0
    %1315 = vmatprep.mubr.f32.mxu0 0.0
    %1316 = vmatmul.mubr.f32.gmra.mxu0 %v1172
    %v1317 = vpop.f32.mrf.mxu0
    %v1318 = vadd.f32 0.0, %v1317
    %v1319 = vpop.f32.mrf.mxu0
    %1320 = vmatprep.mubr.f32.mxu0 0.0
    %1321 = vmatmul.mubr.f32.gmra.mxu0 %v1175
    %v1322 = vpop.f32.mrf.mxu0
    %v1323 = vadd.f32 0.0, %v1322
    %v1324 = vpop.f32.mrf.mxu0
    %1325 = vmatprep.mubr.f32.mxu0 0.0
    %1326 = vmatmul.mubr.f32.gmra.mxu0 %v1178
    %v1327 = vpop.f32.mrf.mxu0
    %v1328 = vadd.f32 0.0, %v1327
    %v1329 = vpop.f32.mrf.mxu0
    %1330 = vmatprep.mubr.f32.mxu0 0.0
    %1331 = vmatmul.mubr.f32.gmra.mxu0 %v1181
    %v1332 = vpop.f32.mrf.mxu0
    %v1333 = vadd.f32 0.0, %v1332
    %v1334 = vpop.f32.mrf.mxu0
    %1335 = vmatprep.mubr.f32.mxu0 0.0
    %1336 = vmatmul.mubr.f32.gmra.mxu0 %v1184
    %v1337 = vpop.f32.mrf.mxu0
    %v1338 = vadd.f32 0.0, %v1337
    %v1339 = vpop.f32.mrf.mxu0
    %1340 = vmatprep.mubr.f32.mxu0 0.0
    %1341 = vmatmul.mubr.f32.gmra.mxu0 %v1187
    %v1342 = vpop.f32.mrf.mxu0
    %v1343 = vadd.f32 0.0, %v1342
    %v1344 = vpop.f32.mrf.mxu0
    %1345 = vmatprep.mubr.f32.mxu0 0.0
    %1346 = vmatmul.mubr.f32.gmra.mxu0 %v1190
    %v1347 = vpop.f32.mrf.mxu0
    %v1348 = vadd.f32 0.0, %v1347
    %v1349 = vpop.f32.mrf.mxu0
    %1350 = vmatprep.mubr.f32.mxu0 0.0
    %1351 = vmatmul.mubr.f32.gmra.mxu0 %v1193
    %v1352 = vpop.f32.mrf.mxu0
    %v1353 = vadd.f32 0.0, %v1352
    %v1354 = vpop.f32.mrf.mxu0
    %1355 = vmatprep.mubr.f32.mxu0 0.0
    %1356 = vmatmul.mubr.f32.gmra.mxu0 %v1196
    %v1357 = vpop.f32.mrf.mxu0
    %v1358 = vadd.f32 0.0, %v1357
    %v1359 = vpop.f32.mrf.mxu0
    %1360 = vmatprep.mubr.f32.mxu0 0.0
    %1361 = vmatmul.mubr.f32.gmra.mxu0 %v1199
    %v1362 = vpop.f32.mrf.mxu0
    %v1363 = vadd.f32 0.0, %v1362
    %v1364 = vpop.f32.mrf.mxu0
    %1365 = vdwg.mxu0
    %v1366 = vld [vmem:[%s4] sm:$0xff]
    %v1367 = vld [vmem:[%s4 + $0x8] sm:$0xff]
    %v1368 = vld [vmem:[%s4 + $0x10] sm:$0xff]
    %v1369 = vld [vmem:[%s4 + $0x18] sm:$0xff]
    %v1370 = vld [vmem:[%s4 + $0x20] sm:$0xff]
    %v1371 = vld [vmem:[%s4 + $0x28] sm:$0xff]
    %v1372 = vld [vmem:[%s4 + $0x30] sm:$0xff]
    %v1373 = vld [vmem:[%s4 + $0x38] sm:$0xff]
    %v1374 = vld [vmem:[%s4 + $0x40] sm:$0xff]
    %v1375 = vld [vmem:[%s4 + $0x48] sm:$0xff]
    %v1376 = vld [vmem:[%s4 + $0x50] sm:$0xff]
    %v1377 = vld [vmem:[%s4 + $0x58] sm:$0xff]
    %v1378 = vld [vmem:[%s4 + $0x60] sm:$0xff]
    %v1379 = vld [vmem:[%s4 + $0x68] sm:$0xff]
    %v1380 = vld [vmem:[%s4 + $0x70] sm:$0xff]
    %v1381 = vld [vmem:[%s4 + $0x78] sm:$0xff]
    %v1382 = vld [vmem:[%s4 + $0x80] sm:$0xff]
    %v1383 = vld [vmem:[%s4 + $0x88] sm:$0xff]
    %v1384 = vld [vmem:[%s4 + $0x90] sm:$0xff]
    %v1385 = vld [vmem:[%s4 + $0x98] sm:$0xff]
    %v1386 = vld [vmem:[%s4 + $0xa0] sm:$0xff]
    %v1387 = vld [vmem:[%s4 + $0xa8] sm:$0xff]
    %v1388 = vld [vmem:[%s4 + $0xb0] sm:$0xff]
    %v1389 = vld [vmem:[%s4 + $0xb8] sm:$0xff]
    %v1390 = vld [vmem:[%s4 + $0xc0] sm:$0xff]
    %v1391 = vld [vmem:[%s4 + $0xc8] sm:$0xff]
    %v1392 = vld [vmem:[%s4 + $0xd0] sm:$0xff]
    %v1393 = vld [vmem:[%s4 + $0xd8] sm:$0xff]
    %v1394 = vld [vmem:[%s4 + $0xe0] sm:$0xff]
    %v1395 = vld [vmem:[%s4 + $0xe8] sm:$0xff]
    %v1396 = vld [vmem:[%s4 + $0xf0] sm:$0xff]
    %v1397 = vld [vmem:[%s4 + $0xf8] sm:$0xff]
    %v1398 = vld [vmem:[%s4 + $0x100] sm:$0xff]
    %v1399 = vld [vmem:[%s4 + $0x108] sm:$0xff]
    %v1400 = vld [vmem:[%s4 + $0x110] sm:$0xff]
    %v1401 = vld [vmem:[%s4 + $0x118] sm:$0xff]
    %v1402 = vld [vmem:[%s4 + $0x120] sm:$0xff]
    %v1403 = vld [vmem:[%s4 + $0x128] sm:$0xff]
    %v1404 = vld [vmem:[%s4 + $0x130] sm:$0xff]
    %v1405 = vld [vmem:[%s4 + $0x138] sm:$0xff]
    %vm1406 = vcmask 261120
    %v1408 = vsel %vm1406, %v1367, 0
    %v1411 = vsel %vm1406, %v1369, 0
    %v1414 = vsel %vm1406, %v1371, 0
    %v1417 = vsel %vm1406, %v1373, 0
    %v1420 = vsel %vm1406, %v1375, 0
    %v1423 = vsel %vm1406, %v1377, 0
    %v1426 = vsel %vm1406, %v1379, 0
    %v1429 = vsel %vm1406, %v1381, 0
    %v1432 = vsel %vm1406, %v1383, 0
    %v1435 = vsel %vm1406, %v1385, 0
    %v1438 = vsel %vm1406, %v1387, 0
    %v1441 = vsel %vm1406, %v1389, 0
    %v1444 = vsel %vm1406, %v1391, 0
    %v1447 = vsel %vm1406, %v1393, 0
    %v1450 = vsel %vm1406, %v1395, 0
    %v1453 = vsel %vm1406, %v1397, 0
    %v1456 = vsel %vm1406, %v1399, 0
    %v1459 = vsel %vm1406, %v1401, 0
    %v1462 = vsel %vm1406, %v1403, 0
    %v1465 = vsel %vm1406, %v1405, 0
    %1467 = vmatprep.subr.mxu0 0.0
    %1468 = vmatpush1.msra.mxu0 %v1343
    %1469 = vmatprep.subr.mxu0 0.0
    %1470 = vmatpush1.msra.mxu0 %v1338
    %1471 = vmatprep.subr.mxu0 0.0
    %1472 = vmatpush1.msra.mxu0 %v1333
    %1473 = vmatprep.subr.mxu0 0.0
    %1474 = vmatpush1.msra.mxu0 %v1328
    %1475 = vmatprep.subr.mxu0 0.0
    %1476 = vmatpush1.msra.mxu0 %v1323
    %1477 = vmatprep.subr.mxu0 0.0
    %1478 = vmatpush1.msra.mxu0 %v1318
    %1479 = vmatprep.subr.mxu0 0.0
    %1480 = vmatpush1.msra.mxu0 %v1313
    %1481 = vmatprep.subr.mxu0 0.0
    %1482 = vmatpush1.msra.mxu0 %v1308
    %1483 = vmatprep.subr.mxu0 0.0
    %1484 = vmatpush1.msra.mxu0 %v1303
    %1485 = vmatprep.subr.mxu0 0.0
    %1486 = vmatpush1.msra.mxu0 %v1298
    %1487 = vmatprep.subr.mxu0 0.0
    %1488 = vmatpush1.msra.mxu0 %v1293
    %1489 = vmatprep.subr.mxu0 0.0
    %1490 = vmatpush1.msra.mxu0 %v1288
    %1491 = vmatprep.subr.mxu0 0.0
    %1492 = vmatpush1.msra.mxu0 %v1283
    %1493 = vmatprep.subr.mxu0 0.0
    %1494 = vmatpush1.msra.mxu0 %v1278
    %1495 = vmatprep.subr.mxu0 0.0
    %1496 = vmatpush1.msra.mxu0 %v1273
    %1497 = vmatprep.subr.mxu0 0.0
    %1498 = vmatpush1.msra.mxu0 %v1268
    %1499 = vmatprep.subr.mxu0 0.0
    %1500 = vmatpush2.msra.mxu0 0.0
    %1501 = vmatprep.subr.mxu0 0.0
    %1502 = vmatpush2.msra.mxu0 0.0
    %1503 = vmatprep.subr.mxu0 0.0
    %1504 = vmatpush2.msra.mxu0 0.0
    %1505 = vmatprep.subr.mxu0 0.0
    %1506 = vmatpush2.msra.mxu0 0.0
    %1507 = vmatprep.subr.mxu0 0.0
    %1508 = vmatpush2.msra.mxu0 0.0
    %1509 = vmatprep.subr.mxu0 0.0
    %1510 = vmatpush2.msra.mxu0 0.0
    %1511 = vmatprep.subr.mxu0 0.0
    %1512 = vmatpush2.msra.mxu0 0.0
    %1513 = vmatprep.subr.mxu0 0.0
    %1514 = vmatpush2.msra.mxu0 0.0
    %1515 = vmatprep.subr.mxu0 0.0
    %1516 = vmatpush2.msra.mxu0 0.0
    %1517 = vmatprep.subr.mxu0 0.0
    %1518 = vmatpush2.msra.mxu0 0.0
    %1519 = vmatprep.subr.mxu0 0.0
    %1520 = vmatpush2.msra.mxu0 0.0
    %1521 = vmatprep.subr.mxu0 0.0
    %1522 = vmatpush2.msra.mxu0 0.0
    %1523 = vmatprep.subr.mxu0 0.0
    %1524 = vmatpush2.msra.mxu0 %v1363
    %1525 = vmatprep.subr.mxu0 0.0
    %1526 = vmatpush2.msra.mxu0 %v1358
    %1527 = vmatprep.subr.mxu0 0.0
    %1528 = vmatpush2.msra.mxu0 %v1353
    %1529 = vmatprep.subr.mxu0 0.0
    %1530 = vmatpush2.msra.mxu0 %v1348
    %1531 = vmatprep.mubr.f32.mxu0 %v1408
    %1532 = vmatmul.mubr.f32.gmra.mxu0 %v1366
    %v1533 = vpop.f32.mrf.mxu0
    %v1534 = vadd.f32 0.0, %v1533
    %v1535 = vpop.f32.mrf.mxu0
    %1536 = vmatprep.mubr.f32.mxu0 %v1411
    %1537 = vmatmul.mubr.f32.gmra.mxu0 %v1368
    %v1538 = vpop.f32.mrf.mxu0
    %v1539 = vadd.f32 0.0, %v1538
    %v1540 = vpop.f32.mrf.mxu0
    %1541 = vmatprep.mubr.f32.mxu0 %v1414
    %1542 = vmatmul.mubr.f32.gmra.mxu0 %v1370
    %v1543 = vpop.f32.mrf.mxu0
    %v1544 = vadd.f32 0.0, %v1543
    %v1545 = vpop.f32.mrf.mxu0
    %1546 = vmatprep.mubr.f32.mxu0 %v1417
    %1547 = vmatmul.mubr.f32.gmra.mxu0 %v1372
    %v1548 = vpop.f32.mrf.mxu0
    %v1549 = vadd.f32 0.0, %v1548
    %v1550 = vpop.f32.mrf.mxu0
    %1551 = vmatprep.mubr.f32.mxu0 %v1420
    %1552 = vmatmul.mubr.f32.gmra.mxu0 %v1374
    %v1553 = vpop.f32.mrf.mxu0
    %v1554 = vadd.f32 0.0, %v1553
    %v1555 = vpop.f32.mrf.mxu0
    %1556 = vmatprep.mubr.f32.mxu0 %v1423
    %1557 = vmatmul.mubr.f32.gmra.mxu0 %v1376
    %v1558 = vpop.f32.mrf.mxu0
    %v1559 = vadd.f32 0.0, %v1558
    %v1560 = vpop.f32.mrf.mxu0
    %1561 = vmatprep.mubr.f32.mxu0 %v1426
    %1562 = vmatmul.mubr.f32.gmra.mxu0 %v1378
    %v1563 = vpop.f32.mrf.mxu0
    %v1564 = vadd.f32 0.0, %v1563
    %v1565 = vpop.f32.mrf.mxu0
    %1566 = vmatprep.mubr.f32.mxu0 %v1429
    %1567 = vmatmul.mubr.f32.gmra.mxu0 %v1380
    %v1568 = vpop.f32.mrf.mxu0
    %v1569 = vadd.f32 0.0, %v1568
    %v1570 = vpop.f32.mrf.mxu0
    %1571 = vmatprep.mubr.f32.mxu0 %v1432
    %1572 = vmatmul.mubr.f32.gmra.mxu0 %v1382
    %v1573 = vpop.f32.mrf.mxu0
    %v1574 = vadd.f32 0.0, %v1573
    %v1575 = vpop.f32.mrf.mxu0
    %1576 = vmatprep.mubr.f32.mxu0 %v1435
    %1577 = vmatmul.mubr.f32.gmra.mxu0 %v1384
    %v1578 = vpop.f32.mrf.mxu0
    %v1579 = vadd.f32 0.0, %v1578
    %v1580 = vpop.f32.mrf.mxu0
    %1581 = vmatprep.mubr.f32.mxu0 %v1438
    %1582 = vmatmul.mubr.f32.gmra.mxu0 %v1386
    %v1583 = vpop.f32.mrf.mxu0
    %v1584 = vadd.f32 0.0, %v1583
    %v1585 = vpop.f32.mrf.mxu0
    %1586 = vmatprep.mubr.f32.mxu0 %v1441
    %1587 = vmatmul.mubr.f32.gmra.mxu0 %v1388
    %v1588 = vpop.f32.mrf.mxu0
    %v1589 = vadd.f32 0.0, %v1588
    %v1590 = vpop.f32.mrf.mxu0
    %1591 = vmatprep.mubr.f32.mxu0 %v1444
    %1592 = vmatmul.mubr.f32.gmra.mxu0 %v1390
    %v1593 = vpop.f32.mrf.mxu0
    %v1594 = vadd.f32 0.0, %v1593
    %v1595 = vpop.f32.mrf.mxu0
    %1596 = vmatprep.mubr.f32.mxu0 %v1447
    %1597 = vmatmul.mubr.f32.gmra.mxu0 %v1392
    %v1598 = vpop.f32.mrf.mxu0
    %v1599 = vadd.f32 0.0, %v1598
    %v1600 = vpop.f32.mrf.mxu0
    %1601 = vmatprep.mubr.f32.mxu0 %v1450
    %1602 = vmatmul.mubr.f32.gmra.mxu0 %v1394
    %v1603 = vpop.f32.mrf.mxu0
    %v1604 = vadd.f32 0.0, %v1603
    %v1605 = vpop.f32.mrf.mxu0
    %1606 = vmatprep.mubr.f32.mxu0 %v1453
    %1607 = vmatmul.mubr.f32.gmra.mxu0 %v1396
    %v1608 = vpop.f32.mrf.mxu0
    %v1609 = vadd.f32 0.0, %v1608
    %v1610 = vpop.f32.mrf.mxu0
    %1611 = vmatprep.mubr.f32.mxu0 %v1456
    %1612 = vmatmul.mubr.f32.gmra.mxu0 %v1398
    %v1613 = vpop.f32.mrf.mxu0
    %v1614 = vadd.f32 0.0, %v1613
    %v1615 = vpop.f32.mrf.mxu0
    %1616 = vmatprep.mubr.f32.mxu0 %v1459
    %1617 = vmatmul.mubr.f32.gmra.mxu0 %v1400
    %v1618 = vpop.f32.mrf.mxu0
    %v1619 = vadd.f32 0.0, %v1618
    %v1620 = vpop.f32.mrf.mxu0
    %1621 = vmatprep.mubr.f32.mxu0 %v1462
    %1622 = vmatmul.mubr.f32.gmra.mxu0 %v1402
    %v1623 = vpop.f32.mrf.mxu0
    %v1624 = vadd.f32 0.0, %v1623
    %v1625 = vpop.f32.mrf.mxu0
    %1626 = vmatprep.mubr.f32.mxu0 %v1465
    %1627 = vmatmul.mubr.f32.gmra.mxu0 %v1404
    %v1628 = vpop.f32.mrf.mxu0
    %v1629 = vadd.f32 0.0, %v1628
    %v1630 = vpop.f32.mrf.mxu0
    %1631 = vdwg.mxu0
    %v1632 = vmax.f32 %v1534, 0.0
    %v1633 = vmax.f32 %v1539, 0.0
    %v1634 = vmax.f32 %v1544, 0.0
    %v1635 = vmax.f32 %v1549, 0.0
    %v1636 = vmax.f32 %v1554, 0.0
    %v1637 = vmax.f32 %v1559, 0.0
    %v1638 = vmax.f32 %v1564, 0.0
    %v1639 = vmax.f32 %v1569, 0.0
    %v1640 = vmax.f32 %v1574, 0.0
    %v1641 = vmax.f32 %v1579, 0.0
    %v1642 = vmax.f32 %v1584, 0.0
    %v1643 = vmax.f32 %v1589, 0.0
    %v1644 = vmax.f32 %v1594, 0.0
    %v1645 = vmax.f32 %v1599, 0.0
    %v1646 = vmax.f32 %v1604, 0.0
    %v1647 = vmax.f32 %v1609, 0.0
    %v1648 = vmax.f32 %v1614, 0.0
    %v1649 = vmax.f32 %v1619, 0.0
    %v1650 = vmax.f32 %v1624, 0.0
    %v1651 = vmax.f32 %v1629, 0.0
    %v1652 = vld [vmem:[%s6] sm:$0x3]
    %v1653 = vld [vmem:[%s5] sm:$0xff]
    %v1654 = vld [vmem:[%s5 + $0x8] sm:$0xff]
    %v1655 = vld [vmem:[%s5 + $0x10] sm:$0xff]
    %v1656 = vld [vmem:[%s5 + $0x18] sm:$0xff]
    %vm1657 = vcmask 130048
    %v1659 = vsel %vm1657, %v1632, 0
    %v1662 = vsel %vm1657, %v1633, 0
    %v1665 = vsel %vm1657, %v1634, 0
    %v1668 = vsel %vm1657, %v1635, 0
    %v1671 = vsel %vm1657, %v1636, 0
    %v1674 = vsel %vm1657, %v1637, 0
    %v1677 = vsel %vm1657, %v1638, 0
    %v1680 = vsel %vm1657, %v1639, 0
    %v1683 = vsel %vm1657, %v1640, 0
    %v1686 = vsel %vm1657, %v1641, 0
    %v1689 = vsel %vm1657, %v1642, 0
    %v1692 = vsel %vm1657, %v1643, 0
    %v1695 = vsel %vm1657, %v1644, 0
    %v1698 = vsel %vm1657, %v1645, 0
    %v1701 = vsel %vm1657, %v1646, 0
    %v1704 = vsel %vm1657, %v1647, 0
    %1706 = vmatprep.subr.mxu0 0.0
    %1707 = vmatpush1.msra.mxu0 0.0
    %1708 = vmatprep.subr.mxu0 0.0
    %1709 = vmatpush1.msra.mxu0 0.0
    %1710 = vmatprep.subr.mxu0 0.0
    %1711 = vmatpush1.msra.mxu0 0.0
    %1712 = vmatprep.subr.mxu0 0.0
    %1713 = vmatpush1.msra.mxu0 0.0
    %1714 = vmatprep.subr.mxu0 0.0
    %1715 = vmatpush1.msra.mxu0 0.0
    %1716 = vmatprep.subr.mxu0 0.0
    %1717 = vmatpush1.msra.mxu0 0.0
    %1718 = vmatprep.subr.mxu0 0.0
    %1719 = vmatpush1.msra.mxu0 0.0
    %1720 = vmatprep.subr.mxu0 0.0
    %1721 = vmatpush1.msra.mxu0 0.0
    %1722 = vmatprep.subr.mxu0 0.0
    %1723 = vmatpush1.msra.mxu0 0.0
    %1724 = vmatprep.subr.mxu0 0.0
    %1725 = vmatpush1.msra.mxu0 0.0
    %1726 = vmatprep.subr.mxu0 0.0
    %1727 = vmatpush1.msra.mxu0 0.0
    %1728 = vmatprep.subr.mxu0 0.0
    %1729 = vmatpush1.msra.mxu0 0.0
    %1730 = vmatprep.subr.mxu0 0.0
    %1731 = vmatpush1.msra.mxu0 0.0
    %1732 = vmatprep.subr.mxu0 0.0
    %1733 = vmatpush1.msra.mxu0 0.0
    %1734 = vmatprep.subr.mxu0 %v1656
    %1735 = vmatpush1.msra.mxu0 %v1655
    %1736 = vmatprep.subr.mxu0 %v1654
    %1737 = vmatpush1.msra.mxu0 %v1653
    %1738 = vmatprep.subr.mxu0 0.0
    %1739 = vmatpush2.msra.mxu0 0.0
    %1740 = vmatprep.subr.mxu0 0.0
    %1741 = vmatpush2.msra.mxu0 0.0
    %1742 = vmatprep.subr.mxu0 0.0
    %1743 = vmatpush2.msra.mxu0 0.0
    %1744 = vmatprep.subr.mxu0 0.0
    %1745 = vmatpush2.msra.mxu0 0.0
    %1746 = vmatprep.subr.mxu0 0.0
    %1747 = vmatpush2.msra.mxu0 0.0
    %1748 = vmatprep.subr.mxu0 0.0
    %1749 = vmatpush2.msra.mxu0 0.0
    %1750 = vmatprep.subr.mxu0 0.0
    %1751 = vmatpush2.msra.mxu0 0.0
    %1752 = vmatprep.subr.mxu0 0.0
    %1753 = vmatpush2.msra.mxu0 0.0
    %1754 = vmatprep.subr.mxu0 0.0
    %1755 = vmatpush2.msra.mxu0 0.0
    %1756 = vmatprep.subr.mxu0 0.0
    %1757 = vmatpush2.msra.mxu0 0.0
    %1758 = vmatprep.subr.mxu0 0.0
    %1759 = vmatpush2.msra.mxu0 0.0
    %1760 = vmatprep.subr.mxu0 0.0
    %1761 = vmatpush2.msra.mxu0 0.0
    %1762 = vmatprep.subr.mxu0 0.0
    %1763 = vmatpush2.msra.mxu0 0.0
    %1764 = vmatprep.subr.mxu0 0.0
    %1765 = vmatpush2.msra.mxu0 0.0
    %1766 = vmatprep.subr.mxu0 0.0
    %1767 = vmatpush2.msra.mxu0 0.0
    %1768 = vmatprep.subr.mxu0 0.0
    %1769 = vmatpush2.msra.mxu0 0.0
    %1770 = vmatprep.mubr.f32.mxu0 0.0
    %1771 = vmatmul.mubr.f32.gmra.mxu0 %v1659
    %v1772 = vpop.f32.mrf.mxu0
    %v1773 = vadd.f32 0.0, %v1772
    %v1774 = vpop.f32.mrf.mxu0
    %v1775 = vadd.f32 0.0, %v1774
    %1776 = vmatprep.mubr.f32.mxu0 0.0
    %1777 = vmatmul.mubr.f32.gmra.mxu0 %v1662
    %v1778 = vpop.f32.mrf.mxu0
    %v1779 = vadd.f32 0.0, %v1778
    %v1780 = vpop.f32.mrf.mxu0
    %v1781 = vadd.f32 0.0, %v1780
    %1782 = vmatprep.mubr.f32.mxu0 0.0
    %1783 = vmatmul.mubr.f32.gmra.mxu0 %v1665
    %v1784 = vpop.f32.mrf.mxu0
    %v1785 = vadd.f32 0.0, %v1784
    %v1786 = vpop.f32.mrf.mxu0
    %v1787 = vadd.f32 0.0, %v1786
    %1788 = vmatprep.mubr.f32.mxu0 0.0
    %1789 = vmatmul.mubr.f32.gmra.mxu0 %v1668
    %v1790 = vpop.f32.mrf.mxu0
    %v1791 = vadd.f32 0.0, %v1790
    %v1792 = vpop.f32.mrf.mxu0
    %v1793 = vadd.f32 0.0, %v1792
    %1794 = vmatprep.mubr.f32.mxu0 0.0
    %1795 = vmatmul.mubr.f32.gmra.mxu0 %v1671
    %v1796 = vpop.f32.mrf.mxu0
    %v1797 = vadd.f32 0.0, %v1796
    %v1798 = vpop.f32.mrf.mxu0
    %v1799 = vadd.f32 0.0, %v1798
    %1800 = vmatprep.mubr.f32.mxu0 0.0
    %1801 = vmatmul.mubr.f32.gmra.mxu0 %v1674
    %v1802 = vpop.f32.mrf.mxu0
    %v1803 = vadd.f32 0.0, %v1802
    %v1804 = vpop.f32.mrf.mxu0
    %v1805 = vadd.f32 0.0, %v1804
    %1806 = vmatprep.mubr.f32.mxu0 0.0
    %1807 = vmatmul.mubr.f32.gmra.mxu0 %v1677
    %v1808 = vpop.f32.mrf.mxu0
    %v1809 = vadd.f32 0.0, %v1808
    %v1810 = vpop.f32.mrf.mxu0
    %v1811 = vadd.f32 0.0, %v1810
    %1812 = vmatprep.mubr.f32.mxu0 0.0
    %1813 = vmatmul.mubr.f32.gmra.mxu0 %v1680
    %v1814 = vpop.f32.mrf.mxu0
    %v1815 = vadd.f32 0.0, %v1814
    %v1816 = vpop.f32.mrf.mxu0
    %v1817 = vadd.f32 0.0, %v1816
    %1818 = vmatprep.mubr.f32.mxu0 0.0
    %1819 = vmatmul.mubr.f32.gmra.mxu0 %v1683
    %v1820 = vpop.f32.mrf.mxu0
    %v1821 = vadd.f32 0.0, %v1820
    %v1822 = vpop.f32.mrf.mxu0
    %v1823 = vadd.f32 0.0, %v1822
    %1824 = vmatprep.mubr.f32.mxu0 0.0
    %1825 = vmatmul.mubr.f32.gmra.mxu0 %v1686
    %v1826 = vpop.f32.mrf.mxu0
    %v1827 = vadd.f32 0.0, %v1826
    %v1828 = vpop.f32.mrf.mxu0
    %v1829 = vadd.f32 0.0, %v1828
    %1830 = vmatprep.mubr.f32.mxu0 0.0
    %1831 = vmatmul.mubr.f32.gmra.mxu0 %v1689
    %v1832 = vpop.f32.mrf.mxu0
    %v1833 = vadd.f32 0.0, %v1832
    %v1834 = vpop.f32.mrf.mxu0
    %v1835 = vadd.f32 0.0, %v1834
    %1836 = vmatprep.mubr.f32.mxu0 0.0
    %1837 = vmatmul.mubr.f32.gmra.mxu0 %v1692
    %v1838 = vpop.f32.mrf.mxu0
    %v1839 = vadd.f32 0.0, %v1838
    %v1840 = vpop.f32.mrf.mxu0
    %v1841 = vadd.f32 0.0, %v1840
    %1842 = vmatprep.mubr.f32.mxu0 0.0
    %1843 = vmatmul.mubr.f32.gmra.mxu0 %v1695
    %v1844 = vpop.f32.mrf.mxu0
    %v1845 = vadd.f32 0.0, %v1844
    %v1846 = vpop.f32.mrf.mxu0
    %v1847 = vadd.f32 0.0, %v1846
    %1848 = vmatprep.mubr.f32.mxu0 0.0
    %1849 = vmatmul.mubr.f32.gmra.mxu0 %v1698
    %v1850 = vpop.f32.mrf.mxu0
    %v1851 = vadd.f32 0.0, %v1850
    %v1852 = vpop.f32.mrf.mxu0
    %v1853 = vadd.f32 0.0, %v1852
    %1854 = vmatprep.mubr.f32.mxu0 0.0
    %1855 = vmatmul.mubr.f32.gmra.mxu0 %v1701
    %v1856 = vpop.f32.mrf.mxu0
    %v1857 = vadd.f32 0.0, %v1856
    %v1858 = vpop.f32.mrf.mxu0
    %v1859 = vadd.f32 0.0, %v1858
    %1860 = vmatprep.mubr.f32.mxu0 0.0
    %1861 = vmatmul.mubr.f32.gmra.mxu0 %v1704
    %v1862 = vpop.f32.mrf.mxu0
    %v1863 = vadd.f32 0.0, %v1862
    %v1864 = vpop.f32.mrf.mxu0
    %v1865 = vadd.f32 0.0, %v1864
    %1866 = vdwg.mxu0
    %v1868 = vlaneseq
    %v1869 = vshrl.u32 %v1868, 7
    %v1870 = vsub.s32 0, %v1869
    %v1871 = vrot.slane %v1652, %v1870
    %v1872 = vlaneseq
    %v1873 = vshrl.u32 %v1872, 7
    %v1874 = vsub.s32 1, %v1873
    %v1875 = vrot.slane %v1652, %v1874
    %v1878 = vadd.f32 %v1871, %v1773
    %v1879 = vadd.f32 %v1875, %v1775
    %v1880 = vadd.f32 %v1871, %v1779
    %v1881 = vadd.f32 %v1875, %v1781
    %v1882 = vadd.f32 %v1871, %v1785
    %v1883 = vadd.f32 %v1875, %v1787
    %v1884 = vadd.f32 %v1871, %v1791
    %v1885 = vadd.f32 %v1875, %v1793
    %v1886 = vadd.f32 %v1871, %v1797
    %v1887 = vadd.f32 %v1875, %v1799
    %v1888 = vadd.f32 %v1871, %v1803
    %v1889 = vadd.f32 %v1875, %v1805
    %v1890 = vadd.f32 %v1871, %v1809
    %v1891 = vadd.f32 %v1875, %v1811
    %v1892 = vadd.f32 %v1871, %v1815
    %v1893 = vadd.f32 %v1875, %v1817
    %v1894 = vadd.f32 %v1871, %v1821
    %v1895 = vadd.f32 %v1875, %v1823
    %v1896 = vadd.f32 %v1871, %v1827
    %v1897 = vadd.f32 %v1875, %v1829
    %v1898 = vadd.f32 %v1871, %v1833
    %v1899 = vadd.f32 %v1875, %v1835
    %v1900 = vadd.f32 %v1871, %v1839
    %v1901 = vadd.f32 %v1875, %v1841
    %v1902 = vadd.f32 %v1871, %v1845
    %v1903 = vadd.f32 %v1875, %v1847
    %v1904 = vadd.f32 %v1871, %v1851
    %v1905 = vadd.f32 %v1875, %v1853
    %v1906 = vadd.f32 %v1871, %v1857
    %v1907 = vadd.f32 %v1875, %v1859
    %v1908 = vadd.f32 %v1871, %v1863
    %v1909 = vadd.f32 %v1875, %v1865
    %s1910 = scalar_lea.vmem %s5, 32
    %v1911 = vld [vmem:[%s1910] sm:$0xff]
    %v1912 = vld [vmem:[%s1910 + $0x8] sm:$0xff]
    %v1913 = vld [vmem:[%s1910 + $0x10] sm:$0xff]
    %v1914 = vld [vmem:[%s1910 + $0x18] sm:$0xff]
    %v1916 = vsel %vm1657, %v1648, 0
    %v1919 = vsel %vm1657, %v1649, 0
    %1921 = vmatprep.subr.mxu0 0.0
    %1922 = vmatpush1.msra.mxu0 0.0
    %1923 = vmatprep.subr.mxu0 0.0
    %1924 = vmatpush1.msra.mxu0 0.0
    %1925 = vmatprep.subr.mxu0 0.0
    %1926 = vmatpush1.msra.mxu0 0.0
    %1927 = vmatprep.subr.mxu0 0.0
    %1928 = vmatpush1.msra.mxu0 0.0
    %1929 = vmatprep.subr.mxu0 0.0
    %1930 = vmatpush1.msra.mxu0 0.0
    %1931 = vmatprep.subr.mxu0 0.0
    %1932 = vmatpush1.msra.mxu0 0.0
    %1933 = vmatprep.subr.mxu0 0.0
    %1934 = vmatpush1.msra.mxu0 0.0
    %1935 = vmatprep.subr.mxu0 0.0
    %1936 = vmatpush1.msra.mxu0 0.0
    %1937 = vmatprep.subr.mxu0 0.0
    %1938 = vmatpush1.msra.mxu0 0.0
    %1939 = vmatprep.subr.mxu0 0.0
    %1940 = vmatpush1.msra.mxu0 0.0
    %1941 = vmatprep.subr.mxu0 0.0
    %1942 = vmatpush1.msra.mxu0 0.0
    %1943 = vmatprep.subr.mxu0 0.0
    %1944 = vmatpush1.msra.mxu0 0.0
    %1945 = vmatprep.subr.mxu0 0.0
    %1946 = vmatpush1.msra.mxu0 0.0
    %1947 = vmatprep.subr.mxu0 0.0
    %1948 = vmatpush1.msra.mxu0 0.0
    %1949 = vmatprep.subr.mxu0 %v1914
    %1950 = vmatpush1.msra.mxu0 %v1913
    %1951 = vmatprep.subr.mxu0 %v1912
    %1952 = vmatpush1.msra.mxu0 %v1911
    %1953 = vmatprep.subr.mxu0 0.0
    %1954 = vmatpush2.msra.mxu0 0.0
    %1955 = vmatprep.subr.mxu0 0.0
    %1956 = vmatpush2.msra.mxu0 0.0
    %1957 = vmatprep.subr.mxu0 0.0
    %1958 = vmatpush2.msra.mxu0 0.0
    %1959 = vmatprep.subr.mxu0 0.0
    %1960 = vmatpush2.msra.mxu0 0.0
    %1961 = vmatprep.subr.mxu0 0.0
    %1962 = vmatpush2.msra.mxu0 0.0
    %1963 = vmatprep.subr.mxu0 0.0
    %1964 = vmatpush2.msra.mxu0 0.0
    %1965 = vmatprep.subr.mxu0 0.0
    %1966 = vmatpush2.msra.mxu0 0.0
    %1967 = vmatprep.subr.mxu0 0.0
    %1968 = vmatpush2.msra.mxu0 0.0
    %1969 = vmatprep.subr.mxu0 0.0
    %1970 = vmatpush2.msra.mxu0 0.0
    %1971 = vmatprep.subr.mxu0 0.0
    %1972 = vmatpush2.msra.mxu0 0.0
    %1973 = vmatprep.subr.mxu0 0.0
    %1974 = vmatpush2.msra.mxu0 0.0
    %1975 = vmatprep.subr.mxu0 0.0
    %1976 = vmatpush2.msra.mxu0 0.0
    %1977 = vmatprep.subr.mxu0 0.0
    %1978 = vmatpush2.msra.mxu0 0.0
    %1979 = vmatprep.subr.mxu0 0.0
    %1980 = vmatpush2.msra.mxu0 0.0
    %1981 = vmatprep.subr.mxu0 0.0
    %1982 = vmatpush2.msra.mxu0 0.0
    %1983 = vmatprep.subr.mxu0 0.0
    %1984 = vmatpush2.msra.mxu0 0.0
    %1985 = vmatprep.mubr.f32.mxu0 0.0
    %1986 = vmatmul.mubr.f32.gmra.mxu0 %v1665
    %v1987 = vpop.f32.mrf.mxu0
    %v1988 = vadd.f32 0.0, %v1987
    %v1989 = vpop.f32.mrf.mxu0
    %v1990 = vadd.f32 0.0, %v1989
    %1991 = vmatprep.mubr.f32.mxu0 0.0
    %1992 = vmatmul.mubr.f32.gmra.mxu0 %v1668
    %v1993 = vpop.f32.mrf.mxu0
    %v1994 = vadd.f32 0.0, %v1993
    %v1995 = vpop.f32.mrf.mxu0
    %v1996 = vadd.f32 0.0, %v1995
    %1997 = vmatprep.mubr.f32.mxu0 0.0
    %1998 = vmatmul.mubr.f32.gmra.mxu0 %v1671
    %v1999 = vpop.f32.mrf.mxu0
    %v2000 = vadd.f32 0.0, %v1999
    %v2001 = vpop.f32.mrf.mxu0
    %v2002 = vadd.f32 0.0, %v2001
    %2003 = vmatprep.mubr.f32.mxu0 0.0
    %2004 = vmatmul.mubr.f32.gmra.mxu0 %v1674
    %v2005 = vpop.f32.mrf.mxu0
    %v2006 = vadd.f32 0.0, %v2005
    %v2007 = vpop.f32.mrf.mxu0
    %v2008 = vadd.f32 0.0, %v2007
    %2009 = vmatprep.mubr.f32.mxu0 0.0
    %2010 = vmatmul.mubr.f32.gmra.mxu0 %v1677
    %v2011 = vpop.f32.mrf.mxu0
    %v2012 = vadd.f32 0.0, %v2011
    %v2013 = vpop.f32.mrf.mxu0
    %v2014 = vadd.f32 0.0, %v2013
    %2015 = vmatprep.mubr.f32.mxu0 0.0
    %2016 = vmatmul.mubr.f32.gmra.mxu0 %v1680
    %v2017 = vpop.f32.mrf.mxu0
    %v2018 = vadd.f32 0.0, %v2017
    %v2019 = vpop.f32.mrf.mxu0
    %v2020 = vadd.f32 0.0, %v2019
    %2021 = vmatprep.mubr.f32.mxu0 0.0
    %2022 = vmatmul.mubr.f32.gmra.mxu0 %v1683
    %v2023 = vpop.f32.mrf.mxu0
    %v2024 = vadd.f32 0.0, %v2023
    %v2025 = vpop.f32.mrf.mxu0
    %v2026 = vadd.f32 0.0, %v2025
    %2027 = vmatprep.mubr.f32.mxu0 0.0
    %2028 = vmatmul.mubr.f32.gmra.mxu0 %v1686
    %v2029 = vpop.f32.mrf.mxu0
    %v2030 = vadd.f32 0.0, %v2029
    %v2031 = vpop.f32.mrf.mxu0
    %v2032 = vadd.f32 0.0, %v2031
    %2033 = vmatprep.mubr.f32.mxu0 0.0
    %2034 = vmatmul.mubr.f32.gmra.mxu0 %v1689
    %v2035 = vpop.f32.mrf.mxu0
    %v2036 = vadd.f32 0.0, %v2035
    %v2037 = vpop.f32.mrf.mxu0
    %v2038 = vadd.f32 0.0, %v2037
    %2039 = vmatprep.mubr.f32.mxu0 0.0
    %2040 = vmatmul.mubr.f32.gmra.mxu0 %v1692
    %v2041 = vpop.f32.mrf.mxu0
    %v2042 = vadd.f32 0.0, %v2041
    %v2043 = vpop.f32.mrf.mxu0
    %v2044 = vadd.f32 0.0, %v2043
    %2045 = vmatprep.mubr.f32.mxu0 0.0
    %2046 = vmatmul.mubr.f32.gmra.mxu0 %v1695
    %v2047 = vpop.f32.mrf.mxu0
    %v2048 = vadd.f32 0.0, %v2047
    %v2049 = vpop.f32.mrf.mxu0
    %v2050 = vadd.f32 0.0, %v2049
    %2051 = vmatprep.mubr.f32.mxu0 0.0
    %2052 = vmatmul.mubr.f32.gmra.mxu0 %v1698
    %v2053 = vpop.f32.mrf.mxu0
    %v2054 = vadd.f32 0.0, %v2053
    %v2055 = vpop.f32.mrf.mxu0
    %v2056 = vadd.f32 0.0, %v2055
    %2057 = vmatprep.mubr.f32.mxu0 0.0
    %2058 = vmatmul.mubr.f32.gmra.mxu0 %v1701
    %v2059 = vpop.f32.mrf.mxu0
    %v2060 = vadd.f32 0.0, %v2059
    %v2061 = vpop.f32.mrf.mxu0
    %v2062 = vadd.f32 0.0, %v2061
    %2063 = vmatprep.mubr.f32.mxu0 0.0
    %2064 = vmatmul.mubr.f32.gmra.mxu0 %v1704
    %v2065 = vpop.f32.mrf.mxu0
    %v2066 = vadd.f32 0.0, %v2065
    %v2067 = vpop.f32.mrf.mxu0
    %v2068 = vadd.f32 0.0, %v2067
    %2069 = vmatprep.mubr.f32.mxu0 0.0
    %2070 = vmatmul.mubr.f32.gmra.mxu0 %v1916
    %v2071 = vpop.f32.mrf.mxu0
    %v2072 = vadd.f32 0.0, %v2071
    %v2073 = vpop.f32.mrf.mxu0
    %v2074 = vadd.f32 0.0, %v2073
    %2075 = vmatprep.mubr.f32.mxu0 0.0
    %2076 = vmatmul.mubr.f32.gmra.mxu0 %v1919
    %v2077 = vpop.f32.mrf.mxu0
    %v2078 = vadd.f32 0.0, %v2077
    %v2079 = vpop.f32.mrf.mxu0
    %v2080 = vadd.f32 0.0, %v2079
    %2081 = vdwg.mxu0
    %v2082 = vadd.f32 %v1878, %v1988
    %v2083 = vadd.f32 %v1879, %v1990
    %v2084 = vadd.f32 %v1880, %v1994
    %v2085 = vadd.f32 %v1881, %v1996
    %v2086 = vadd.f32 %v1882, %v2000
    %v2087 = vadd.f32 %v1883, %v2002
    %v2088 = vadd.f32 %v1884, %v2006
    %v2089 = vadd.f32 %v1885, %v2008
    %v2090 = vadd.f32 %v1886, %v2012
    %v2091 = vadd.f32 %v1887, %v2014
    %v2092 = vadd.f32 %v1888, %v2018
    %v2093 = vadd.f32 %v1889, %v2020
    %v2094 = vadd.f32 %v1890, %v2024
    %v2095 = vadd.f32 %v1891, %v2026
    %v2096 = vadd.f32 %v1892, %v2030
    %v2097 = vadd.f32 %v1893, %v2032
    %v2098 = vadd.f32 %v1894, %v2036
    %v2099 = vadd.f32 %v1895, %v2038
    %v2100 = vadd.f32 %v1896, %v2042
    %v2101 = vadd.f32 %v1897, %v2044
    %v2102 = vadd.f32 %v1898, %v2048
    %v2103 = vadd.f32 %v1899, %v2050
    %v2104 = vadd.f32 %v1900, %v2054
    %v2105 = vadd.f32 %v1901, %v2056
    %v2106 = vadd.f32 %v1902, %v2060
    %v2107 = vadd.f32 %v1903, %v2062
    %v2108 = vadd.f32 %v1904, %v2066
    %v2109 = vadd.f32 %v1905, %v2068
    %v2110 = vadd.f32 %v1906, %v2072
    %v2111 = vadd.f32 %v1907, %v2074
    %v2112 = vadd.f32 %v1908, %v2078
    %v2113 = vadd.f32 %v1909, %v2080
    %s2114 = scalar_lea.vmem %s5, 64
    %v2115 = vld [vmem:[%s2114] sm:$0xff]
    %v2116 = vld [vmem:[%s2114 + $0x8] sm:$0xff]
    %v2117 = vld [vmem:[%s2114 + $0x10] sm:$0xff]
    %v2118 = vld [vmem:[%s2114 + $0x18] sm:$0xff]
    %v2120 = vsel %vm1657, %v1650, 0
    %v2123 = vsel %vm1657, %v1651, 0
    %2125 = vmatprep.subr.mxu0 0.0
    %2126 = vmatpush1.msra.mxu0 0.0
    %2127 = vmatprep.subr.mxu0 0.0
    %2128 = vmatpush1.msra.mxu0 0.0
    %2129 = vmatprep.subr.mxu0 0.0
    %2130 = vmatpush1.msra.mxu0 0.0
    %2131 = vmatprep.subr.mxu0 0.0
    %2132 = vmatpush1.msra.mxu0 0.0
    %2133 = vmatprep.subr.mxu0 0.0
    %2134 = vmatpush1.msra.mxu0 0.0
    %2135 = vmatprep.subr.mxu0 0.0
    %2136 = vmatpush1.msra.mxu0 0.0
    %2137 = vmatprep.subr.mxu0 0.0
    %2138 = vmatpush1.msra.mxu0 0.0
    %2139 = vmatprep.subr.mxu0 0.0
    %2140 = vmatpush1.msra.mxu0 0.0
    %2141 = vmatprep.subr.mxu0 0.0
    %2142 = vmatpush1.msra.mxu0 0.0
    %2143 = vmatprep.subr.mxu0 0.0
    %2144 = vmatpush1.msra.mxu0 0.0
    %2145 = vmatprep.subr.mxu0 0.0
    %2146 = vmatpush1.msra.mxu0 0.0
    %2147 = vmatprep.subr.mxu0 0.0
    %2148 = vmatpush1.msra.mxu0 0.0
    %2149 = vmatprep.subr.mxu0 0.0
    %2150 = vmatpush1.msra.mxu0 0.0
    %2151 = vmatprep.subr.mxu0 0.0
    %2152 = vmatpush1.msra.mxu0 0.0
    %2153 = vmatprep.subr.mxu0 %v2118
    %2154 = vmatpush1.msra.mxu0 %v2117
    %2155 = vmatprep.subr.mxu0 %v2116
    %2156 = vmatpush1.msra.mxu0 %v2115
    %2157 = vmatprep.subr.mxu0 0.0
    %2158 = vmatpush2.msra.mxu0 0.0
    %2159 = vmatprep.subr.mxu0 0.0
    %2160 = vmatpush2.msra.mxu0 0.0
    %2161 = vmatprep.subr.mxu0 0.0
    %2162 = vmatpush2.msra.mxu0 0.0
    %2163 = vmatprep.subr.mxu0 0.0
    %2164 = vmatpush2.msra.mxu0 0.0
    %2165 = vmatprep.subr.mxu0 0.0
    %2166 = vmatpush2.msra.mxu0 0.0
    %2167 = vmatprep.subr.mxu0 0.0
    %2168 = vmatpush2.msra.mxu0 0.0
    %2169 = vmatprep.subr.mxu0 0.0
    %2170 = vmatpush2.msra.mxu0 0.0
    %2171 = vmatprep.subr.mxu0 0.0
    %2172 = vmatpush2.msra.mxu0 0.0
    %2173 = vmatprep.subr.mxu0 0.0
    %2174 = vmatpush2.msra.mxu0 0.0
    %2175 = vmatprep.subr.mxu0 0.0
    %2176 = vmatpush2.msra.mxu0 0.0
    %2177 = vmatprep.subr.mxu0 0.0
    %2178 = vmatpush2.msra.mxu0 0.0
    %2179 = vmatprep.subr.mxu0 0.0
    %2180 = vmatpush2.msra.mxu0 0.0
    %2181 = vmatprep.subr.mxu0 0.0
    %2182 = vmatpush2.msra.mxu0 0.0
    %2183 = vmatprep.subr.mxu0 0.0
    %2184 = vmatpush2.msra.mxu0 0.0
    %2185 = vmatprep.subr.mxu0 0.0
    %2186 = vmatpush2.msra.mxu0 0.0
    %2187 = vmatprep.subr.mxu0 0.0
    %2188 = vmatpush2.msra.mxu0 0.0
    %2189 = vmatprep.mubr.f32.mxu0 0.0
    %2190 = vmatmul.mubr.f32.gmra.mxu0 %v1671
    %v2191 = vpop.f32.mrf.mxu0
    %v2192 = vadd.f32 0.0, %v2191
    %v2193 = vpop.f32.mrf.mxu0
    %v2194 = vadd.f32 0.0, %v2193
    %2195 = vmatprep.mubr.f32.mxu0 0.0
    %2196 = vmatmul.mubr.f32.gmra.mxu0 %v1674
    %v2197 = vpop.f32.mrf.mxu0
    %v2198 = vadd.f32 0.0, %v2197
    %v2199 = vpop.f32.mrf.mxu0
    %v2200 = vadd.f32 0.0, %v2199
    %2201 = vmatprep.mubr.f32.mxu0 0.0
    %2202 = vmatmul.mubr.f32.gmra.mxu0 %v1677
    %v2203 = vpop.f32.mrf.mxu0
    %v2204 = vadd.f32 0.0, %v2203
    %v2205 = vpop.f32.mrf.mxu0
    %v2206 = vadd.f32 0.0, %v2205
    %2207 = vmatprep.mubr.f32.mxu0 0.0
    %2208 = vmatmul.mubr.f32.gmra.mxu0 %v1680
    %v2209 = vpop.f32.mrf.mxu0
    %v2210 = vadd.f32 0.0, %v2209
    %v2211 = vpop.f32.mrf.mxu0
    %v2212 = vadd.f32 0.0, %v2211
    %2213 = vmatprep.mubr.f32.mxu0 0.0
    %2214 = vmatmul.mubr.f32.gmra.mxu0 %v1683
    %v2215 = vpop.f32.mrf.mxu0
    %v2216 = vadd.f32 0.0, %v2215
    %v2217 = vpop.f32.mrf.mxu0
    %v2218 = vadd.f32 0.0, %v2217
    %2219 = vmatprep.mubr.f32.mxu0 0.0
    %2220 = vmatmul.mubr.f32.gmra.mxu0 %v1686
    %v2221 = vpop.f32.mrf.mxu0
    %v2222 = vadd.f32 0.0, %v2221
    %v2223 = vpop.f32.mrf.mxu0
    %v2224 = vadd.f32 0.0, %v2223
    %2225 = vmatprep.mubr.f32.mxu0 0.0
    %2226 = vmatmul.mubr.f32.gmra.mxu0 %v1689
    %v2227 = vpop.f32.mrf.mxu0
    %v2228 = vadd.f32 0.0, %v2227
    %v2229 = vpop.f32.mrf.mxu0
    %v2230 = vadd.f32 0.0, %v2229
    %2231 = vmatprep.mubr.f32.mxu0 0.0
    %2232 = vmatmul.mubr.f32.gmra.mxu0 %v1692
    %v2233 = vpop.f32.mrf.mxu0
    %v2234 = vadd.f32 0.0, %v2233
    %v2235 = vpop.f32.mrf.mxu0
    %v2236 = vadd.f32 0.0, %v2235
    %2237 = vmatprep.mubr.f32.mxu0 0.0
    %2238 = vmatmul.mubr.f32.gmra.mxu0 %v1695
    %v2239 = vpop.f32.mrf.mxu0
    %v2240 = vadd.f32 0.0, %v2239
    %v2241 = vpop.f32.mrf.mxu0
    %v2242 = vadd.f32 0.0, %v2241
    %2243 = vmatprep.mubr.f32.mxu0 0.0
    %2244 = vmatmul.mubr.f32.gmra.mxu0 %v1698
    %v2245 = vpop.f32.mrf.mxu0
    %v2246 = vadd.f32 0.0, %v2245
    %v2247 = vpop.f32.mrf.mxu0
    %v2248 = vadd.f32 0.0, %v2247
    %2249 = vmatprep.mubr.f32.mxu0 0.0
    %2250 = vmatmul.mubr.f32.gmra.mxu0 %v1701
    %v2251 = vpop.f32.mrf.mxu0
    %v2252 = vadd.f32 0.0, %v2251
    %v2253 = vpop.f32.mrf.mxu0
    %v2254 = vadd.f32 0.0, %v2253
    %2255 = vmatprep.mubr.f32.mxu0 0.0
    %2256 = vmatmul.mubr.f32.gmra.mxu0 %v1704
    %v2257 = vpop.f32.mrf.mxu0
    %v2258 = vadd.f32 0.0, %v2257
    %v2259 = vpop.f32.mrf.mxu0
    %v2260 = vadd.f32 0.0, %v2259
    %2261 = vmatprep.mubr.f32.mxu0 0.0
    %2262 = vmatmul.mubr.f32.gmra.mxu0 %v1916
    %v2263 = vpop.f32.mrf.mxu0
    %v2264 = vadd.f32 0.0, %v2263
    %v2265 = vpop.f32.mrf.mxu0
    %v2266 = vadd.f32 0.0, %v2265
    %2267 = vmatprep.mubr.f32.mxu0 0.0
    %2268 = vmatmul.mubr.f32.gmra.mxu0 %v1919
    %v2269 = vpop.f32.mrf.mxu0
    %v2270 = vadd.f32 0.0, %v2269
    %v2271 = vpop.f32.mrf.mxu0
    %v2272 = vadd.f32 0.0, %v2271
    %2273 = vmatprep.mubr.f32.mxu0 0.0
    %2274 = vmatmul.mubr.f32.gmra.mxu0 %v2120
    %v2275 = vpop.f32.mrf.mxu0
    %v2276 = vadd.f32 0.0, %v2275
    %v2277 = vpop.f32.mrf.mxu0
    %v2278 = vadd.f32 0.0, %v2277
    %2279 = vmatprep.mubr.f32.mxu0 0.0
    %2280 = vmatmul.mubr.f32.gmra.mxu0 %v2123
    %v2281 = vpop.f32.mrf.mxu0
    %v2282 = vadd.f32 0.0, %v2281
    %v2283 = vpop.f32.mrf.mxu0
    %v2284 = vadd.f32 0.0, %v2283
    %2285 = vdwg.mxu0
    %v2286 = vadd.f32 %v2082, %v2192
    %v2287 = vadd.f32 %v2083, %v2194
    %v2288 = vadd.f32 %v2084, %v2198
    %v2289 = vadd.f32 %v2085, %v2200
    %v2290 = vadd.f32 %v2086, %v2204
    %v2291 = vadd.f32 %v2087, %v2206
    %v2292 = vadd.f32 %v2088, %v2210
    %v2293 = vadd.f32 %v2089, %v2212
    %v2294 = vadd.f32 %v2090, %v2216
    %v2295 = vadd.f32 %v2091, %v2218
    %v2296 = vadd.f32 %v2092, %v2222
    %v2297 = vadd.f32 %v2093, %v2224
    %v2298 = vadd.f32 %v2094, %v2228
    %v2299 = vadd.f32 %v2095, %v2230
    %v2300 = vadd.f32 %v2096, %v2234
    %v2301 = vadd.f32 %v2097, %v2236
    %v2302 = vadd.f32 %v2098, %v2240
    %v2303 = vadd.f32 %v2099, %v2242
    %v2304 = vadd.f32 %v2100, %v2246
    %v2305 = vadd.f32 %v2101, %v2248
    %v2306 = vadd.f32 %v2102, %v2252
    %v2307 = vadd.f32 %v2103, %v2254
    %v2308 = vadd.f32 %v2104, %v2258
    %v2309 = vadd.f32 %v2105, %v2260
    %v2310 = vadd.f32 %v2106, %v2264
    %v2311 = vadd.f32 %v2107, %v2266
    %v2312 = vadd.f32 %v2108, %v2270
    %v2313 = vadd.f32 %v2109, %v2272
    %v2314 = vadd.f32 %v2110, %v2276
    %v2315 = vadd.f32 %v2111, %v2278
    %v2316 = vadd.f32 %v2112, %v2282
    %v2317 = vadd.f32 %v2113, %v2284
    %v2318 = vsub.f32 0.0, %v2286
    %v2319 = vsub.f32 0.0, %v2288
    %v2320 = vsub.f32 0.0, %v2290
    %v2321 = vsub.f32 0.0, %v2292
    %v2322 = vsub.f32 0.0, %v2294
    %v2323 = vsub.f32 0.0, %v2296
    %v2324 = vsub.f32 0.0, %v2298
    %v2325 = vsub.f32 0.0, %v2300
    %v2326 = vsub.f32 0.0, %v2302
    %v2327 = vsub.f32 0.0, %v2304
    %v2328 = vsub.f32 0.0, %v2306
    %v2329 = vsub.f32 0.0, %v2308
    %v2330 = vsub.f32 0.0, %v2310
    %v2331 = vsub.f32 0.0, %v2312
    %v2332 = vsub.f32 0.0, %v2314
    %v2333 = vsub.f32 0.0, %v2316
    %v2334 = vmul.f32 %v2318, 1.442695
    %v2335 = vpow.pop %v2334
    %v2336 = vmul.f32 %v2319, 1.442695
    %v2337 = vpow.pop %v2336
    %v2338 = vmul.f32 %v2320, 1.442695
    %v2339 = vpow.pop %v2338
    %v2340 = vmul.f32 %v2321, 1.442695
    %v2341 = vpow.pop %v2340
    %v2342 = vmul.f32 %v2322, 1.442695
    %v2343 = vpow.pop %v2342
    %v2344 = vmul.f32 %v2323, 1.442695
    %v2345 = vpow.pop %v2344
    %v2346 = vmul.f32 %v2324, 1.442695
    %v2347 = vpow.pop %v2346
    %v2348 = vmul.f32 %v2325, 1.442695
    %v2349 = vpow.pop %v2348
    %v2350 = vmul.f32 %v2326, 1.442695
    %v2351 = vpow.pop %v2350
    %v2352 = vmul.f32 %v2327, 1.442695
    %v2353 = vpow.pop %v2352
    %v2354 = vmul.f32 %v2328, 1.442695
    %v2355 = vpow.pop %v2354
    %v2356 = vmul.f32 %v2329, 1.442695
    %v2357 = vpow.pop %v2356
    %v2358 = vmul.f32 %v2330, 1.442695
    %v2359 = vpow.pop %v2358
    %v2360 = vmul.f32 %v2331, 1.442695
    %v2361 = vpow.pop %v2360
    %v2362 = vmul.f32 %v2332, 1.442695
    %v2363 = vpow.pop %v2362
    %v2364 = vmul.f32 %v2333, 1.442695
    %v2365 = vpow.pop %v2364
    %v2366 = vadd.f32 %v2335, 1.0
    %v2367 = vadd.f32 %v2337, 1.0
    %v2368 = vadd.f32 %v2339, 1.0
    %v2369 = vadd.f32 %v2341, 1.0
    %v2370 = vadd.f32 %v2343, 1.0
    %v2371 = vadd.f32 %v2345, 1.0
    %v2372 = vadd.f32 %v2347, 1.0
    %v2373 = vadd.f32 %v2349, 1.0
    %v2374 = vadd.f32 %v2351, 1.0
    %v2375 = vadd.f32 %v2353, 1.0
    %v2376 = vadd.f32 %v2355, 1.0
    %v2377 = vadd.f32 %v2357, 1.0
    %v2378 = vadd.f32 %v2359, 1.0
    %v2379 = vadd.f32 %v2361, 1.0
    %v2380 = vadd.f32 %v2363, 1.0
    %v2381 = vadd.f32 %v2365, 1.0
    %v2382 = vrcp.pop %v2366
    %v2383 = vrcp.pop %v2367
    %v2384 = vrcp.pop %v2368
    %v2385 = vrcp.pop %v2369
    %v2386 = vrcp.pop %v2370
    %v2387 = vrcp.pop %v2371
    %v2388 = vrcp.pop %v2372
    %v2389 = vrcp.pop %v2373
    %v2390 = vrcp.pop %v2374
    %v2391 = vrcp.pop %v2375
    %v2392 = vrcp.pop %v2376
    %v2393 = vrcp.pop %v2377
    %v2394 = vrcp.pop %v2378
    %v2395 = vrcp.pop %v2379
    %v2396 = vrcp.pop %v2380
    %v2397 = vrcp.pop %v2381
    %2414 = vrot.lane.b32.xlu0 %v2382, 64
    %v2415 = vpop.permute.xlu0 %2414
    %2416 = vrot.lane.b32.xlu0 %v2383, 64
    %v2417 = vpop.permute.xlu0 %2416
    %2418 = vrot.lane.b32.xlu0 %v2384, 64
    %v2419 = vpop.permute.xlu0 %2418
    %2420 = vrot.lane.b32.xlu0 %v2385, 64
    %v2421 = vpop.permute.xlu0 %2420
    %2422 = vrot.lane.b32.xlu0 %v2386, 64
    %v2423 = vpop.permute.xlu0 %2422
    %2424 = vrot.lane.b32.xlu0 %v2387, 64
    %v2425 = vpop.permute.xlu0 %2424
    %2426 = vrot.lane.b32.xlu0 %v2388, 64
    %v2427 = vpop.permute.xlu0 %2426
    %2428 = vrot.lane.b32.xlu0 %v2389, 64
    %v2429 = vpop.permute.xlu0 %2428
    %2430 = vrot.lane.b32.xlu0 %v2390, 64
    %v2431 = vpop.permute.xlu0 %2430
    %2432 = vrot.lane.b32.xlu0 %v2391, 64
    %v2433 = vpop.permute.xlu0 %2432
    %2434 = vrot.lane.b32.xlu0 %v2392, 64
    %v2435 = vpop.permute.xlu0 %2434
    %2436 = vrot.lane.b32.xlu0 %v2393, 64
    %v2437 = vpop.permute.xlu0 %2436
    %2438 = vrot.lane.b32.xlu0 %v2394, 64
    %v2439 = vpop.permute.xlu0 %2438
    %2440 = vrot.lane.b32.xlu0 %v2395, 64
    %v2441 = vpop.permute.xlu0 %2440
    %2442 = vrot.lane.b32.xlu0 %v2396, 64
    %v2443 = vpop.permute.xlu0 %2442
    %2444 = vrot.lane.b32.xlu0 %v2397, 64
    %v2445 = vpop.permute.xlu0 %2444
    %v2462 = vadd.f32 %v2286, %v2415
    %v2463 = vadd.f32 %v2288, %v2417
    %v2464 = vadd.f32 %v2290, %v2419
    %v2465 = vadd.f32 %v2292, %v2421
    %v2466 = vadd.f32 %v2294, %v2423
    %v2467 = vadd.f32 %v2296, %v2425
    %v2468 = vadd.f32 %v2298, %v2427
    %v2469 = vadd.f32 %v2300, %v2429
    %v2470 = vadd.f32 %v2302, %v2431
    %v2471 = vadd.f32 %v2304, %v2433
    %v2472 = vadd.f32 %v2306, %v2435
    %v2473 = vadd.f32 %v2308, %v2437
    %v2474 = vadd.f32 %v2310, %v2439
    %v2475 = vadd.f32 %v2312, %v2441
    %v2476 = vadd.f32 %v2314, %v2443
    %v2477 = vadd.f32 %v2316, %v2445
    %v2478 = vadd.f32 %v2462, %v2287
    %v2479 = vadd.f32 %v2463, %v2289
    %v2480 = vadd.f32 %v2464, %v2291
    %v2481 = vadd.f32 %v2465, %v2293
    %v2482 = vadd.f32 %v2466, %v2295
    %v2483 = vadd.f32 %v2467, %v2297
    %v2484 = vadd.f32 %v2468, %v2299
    %v2485 = vadd.f32 %v2469, %v2301
    %v2486 = vadd.f32 %v2470, %v2303
    %v2487 = vadd.f32 %v2471, %v2305
    %v2488 = vadd.f32 %v2472, %v2307
    %v2489 = vadd.f32 %v2473, %v2309
    %v2490 = vadd.f32 %v2474, %v2311
    %v2491 = vadd.f32 %v2475, %v2313
    %v2492 = vadd.f32 %v2476, %v2315
    %v2493 = vadd.f32 %v2477, %v2317
    %v2494 = vmax.f32 %v2478, 0.0
    %v2495 = vmax.f32 %v2479, 0.0
    %v2496 = vmax.f32 %v2480, 0.0
    %v2497 = vmax.f32 %v2481, 0.0
    %v2498 = vmax.f32 %v2482, 0.0
    %v2499 = vmax.f32 %v2483, 0.0
    %v2500 = vmax.f32 %v2484, 0.0
    %v2501 = vmax.f32 %v2485, 0.0
    %v2502 = vmax.f32 %v2486, 0.0
    %v2503 = vmax.f32 %v2487, 0.0
    %v2504 = vmax.f32 %v2488, 0.0
    %v2505 = vmax.f32 %v2489, 0.0
    %v2506 = vmax.f32 %v2490, 0.0
    %v2507 = vmax.f32 %v2491, 0.0
    %v2508 = vmax.f32 %v2492, 0.0
    %v2509 = vmax.f32 %v2493, 0.0
    %v2510 = vld [vmem:[%s8] sm:$0xff]
    %2511 = vmatprep.subr.mxu0 0.0
    %2512 = vmatpush1.msra.mxu0 %v2509
    %2513 = vmatprep.subr.mxu0 0.0
    %2514 = vmatpush1.msra.mxu0 %v2508
    %2515 = vmatprep.subr.mxu0 0.0
    %2516 = vmatpush1.msra.mxu0 %v2507
    %2517 = vmatprep.subr.mxu0 0.0
    %2518 = vmatpush1.msra.mxu0 %v2506
    %2519 = vmatprep.subr.mxu0 0.0
    %2520 = vmatpush1.msra.mxu0 %v2505
    %2521 = vmatprep.subr.mxu0 0.0
    %2522 = vmatpush1.msra.mxu0 %v2504
    %2523 = vmatprep.subr.mxu0 0.0
    %2524 = vmatpush1.msra.mxu0 %v2503
    %2525 = vmatprep.subr.mxu0 0.0
    %2526 = vmatpush1.msra.mxu0 %v2502
    %2527 = vmatprep.subr.mxu0 0.0
    %2528 = vmatpush1.msra.mxu0 %v2501
    %2529 = vmatprep.subr.mxu0 0.0
    %2530 = vmatpush1.msra.mxu0 %v2500
    %2531 = vmatprep.subr.mxu0 0.0
    %2532 = vmatpush1.msra.mxu0 %v2499
    %2533 = vmatprep.subr.mxu0 0.0
    %2534 = vmatpush1.msra.mxu0 %v2498
    %2535 = vmatprep.subr.mxu0 0.0
    %2536 = vmatpush1.msra.mxu0 %v2497
    %2537 = vmatprep.subr.mxu0 0.0
    %2538 = vmatpush1.msra.mxu0 %v2496
    %2539 = vmatprep.subr.mxu0 0.0
    %2540 = vmatpush1.msra.mxu0 %v2495
    %2541 = vmatprep.subr.mxu0 0.0
    %2542 = vmatpush1.msra.mxu0 %v2494
    %2543 = vmatprep.subr.mxu0 0.0
    %2544 = vmatpush2.msra.mxu0 0.0
    %2545 = vmatprep.subr.mxu0 0.0
    %2546 = vmatpush2.msra.mxu0 0.0
    %2547 = vmatprep.subr.mxu0 0.0
    %2548 = vmatpush2.msra.mxu0 0.0
    %2549 = vmatprep.subr.mxu0 0.0
    %2550 = vmatpush2.msra.mxu0 0.0
    %2551 = vmatprep.subr.mxu0 0.0
    %2552 = vmatpush2.msra.mxu0 0.0
    %2553 = vmatprep.subr.mxu0 0.0
    %2554 = vmatpush2.msra.mxu0 0.0
    %2555 = vmatprep.subr.mxu0 0.0
    %2556 = vmatpush2.msra.mxu0 0.0
    %2557 = vmatprep.subr.mxu0 0.0
    %2558 = vmatpush2.msra.mxu0 0.0
    %2559 = vmatprep.subr.mxu0 0.0
    %2560 = vmatpush2.msra.mxu0 0.0
    %2561 = vmatprep.subr.mxu0 0.0
    %2562 = vmatpush2.msra.mxu0 0.0
    %2563 = vmatprep.subr.mxu0 0.0
    %2564 = vmatpush2.msra.mxu0 0.0
    %2565 = vmatprep.subr.mxu0 0.0
    %2566 = vmatpush2.msra.mxu0 0.0
    %2567 = vmatprep.subr.mxu0 0.0
    %2568 = vmatpush2.msra.mxu0 0.0
    %2569 = vmatprep.subr.mxu0 0.0
    %2570 = vmatpush2.msra.mxu0 0.0
    %2571 = vmatprep.subr.mxu0 0.0
    %2572 = vmatpush2.msra.mxu0 0.0
    %2573 = vmatprep.subr.mxu0 0.0
    %2574 = vmatpush2.msra.mxu0 0.0
    %2575 = vmatprep.mubr.f32.mxu0 0.0
    %2576 = vmatmul.mubr.f32.gmra.mxu0 %v2510
    %v2577 = vpop.f32.mrf.mxu0
    %v2578 = vadd.f32 0.0, %v2577
    %v2579 = vpop.f32.mrf.mxu0
    %2580 = vdwg.mxu0
    %v2581 = vmul.f32 %v2494, %v2494
    %v2582 = vmul.f32 %v2495, %v2495
    %v2583 = vmul.f32 %v2496, %v2496
    %v2584 = vmul.f32 %v2497, %v2497
    %v2585 = vmul.f32 %v2498, %v2498
    %v2586 = vmul.f32 %v2499, %v2499
    %v2587 = vmul.f32 %v2500, %v2500
    %v2588 = vmul.f32 %v2501, %v2501
    %v2589 = vmul.f32 %v2502, %v2502
    %v2590 = vmul.f32 %v2503, %v2503
    %v2591 = vmul.f32 %v2504, %v2504
    %v2592 = vmul.f32 %v2505, %v2505
    %v2593 = vmul.f32 %v2506, %v2506
    %v2594 = vmul.f32 %v2507, %v2507
    %v2595 = vmul.f32 %v2508, %v2508
    %v2596 = vmul.f32 %v2509, %v2509
    %2597 = vmatprep.subr.mxu0 0.0
    %2598 = vmatpush1.msra.mxu0 %v2596
    %2599 = vmatprep.subr.mxu0 0.0
    %2600 = vmatpush1.msra.mxu0 %v2595
    %2601 = vmatprep.subr.mxu0 0.0
    %2602 = vmatpush1.msra.mxu0 %v2594
    %2603 = vmatprep.subr.mxu0 0.0
    %2604 = vmatpush1.msra.mxu0 %v2593
    %2605 = vmatprep.subr.mxu0 0.0
    %2606 = vmatpush1.msra.mxu0 %v2592
    %2607 = vmatprep.subr.mxu0 0.0
    %2608 = vmatpush1.msra.mxu0 %v2591
    %2609 = vmatprep.subr.mxu0 0.0
    %2610 = vmatpush1.msra.mxu0 %v2590
    %2611 = vmatprep.subr.mxu0 0.0
    %2612 = vmatpush1.msra.mxu0 %v2589
    %2613 = vmatprep.subr.mxu0 0.0
    %2614 = vmatpush1.msra.mxu0 %v2588
    %2615 = vmatprep.subr.mxu0 0.0
    %2616 = vmatpush1.msra.mxu0 %v2587
    %2617 = vmatprep.subr.mxu0 0.0
    %2618 = vmatpush1.msra.mxu0 %v2586
    %2619 = vmatprep.subr.mxu0 0.0
    %2620 = vmatpush1.msra.mxu0 %v2585
    %2621 = vmatprep.subr.mxu0 0.0
    %2622 = vmatpush1.msra.mxu0 %v2584
    %2623 = vmatprep.subr.mxu0 0.0
    %2624 = vmatpush1.msra.mxu0 %v2583
    %2625 = vmatprep.subr.mxu0 0.0
    %2626 = vmatpush1.msra.mxu0 %v2582
    %2627 = vmatprep.subr.mxu0 0.0
    %2628 = vmatpush1.msra.mxu0 %v2581
    %2629 = vmatprep.subr.mxu0 0.0
    %2630 = vmatpush2.msra.mxu0 0.0
    %2631 = vmatprep.subr.mxu0 0.0
    %2632 = vmatpush2.msra.mxu0 0.0
    %2633 = vmatprep.subr.mxu0 0.0
    %2634 = vmatpush2.msra.mxu0 0.0
    %2635 = vmatprep.subr.mxu0 0.0
    %2636 = vmatpush2.msra.mxu0 0.0
    %2637 = vmatprep.subr.mxu0 0.0
    %2638 = vmatpush2.msra.mxu0 0.0
    %2639 = vmatprep.subr.mxu0 0.0
    %2640 = vmatpush2.msra.mxu0 0.0
    %2641 = vmatprep.subr.mxu0 0.0
    %2642 = vmatpush2.msra.mxu0 0.0
    %2643 = vmatprep.subr.mxu0 0.0
    %2644 = vmatpush2.msra.mxu0 0.0
    %2645 = vmatprep.subr.mxu0 0.0
    %2646 = vmatpush2.msra.mxu0 0.0
    %2647 = vmatprep.subr.mxu0 0.0
    %2648 = vmatpush2.msra.mxu0 0.0
    %2649 = vmatprep.subr.mxu0 0.0
    %2650 = vmatpush2.msra.mxu0 0.0
    %2651 = vmatprep.subr.mxu0 0.0
    %2652 = vmatpush2.msra.mxu0 0.0
    %2653 = vmatprep.subr.mxu0 0.0
    %2654 = vmatpush2.msra.mxu0 0.0
    %2655 = vmatprep.subr.mxu0 0.0
    %2656 = vmatpush2.msra.mxu0 0.0
    %2657 = vmatprep.subr.mxu0 0.0
    %2658 = vmatpush2.msra.mxu0 0.0
    %2659 = vmatprep.subr.mxu0 0.0
    %2660 = vmatpush2.msra.mxu0 0.0
    %2661 = vmatprep.mubr.f32.mxu0 0.0
    %2662 = vmatmul.mubr.f32.gmra.mxu0 %v2510
    %v2663 = vpop.f32.mrf.mxu0
    %v2664 = vadd.f32 0.0, %v2663
    %v2665 = vpop.f32.mrf.mxu0
    %2666 = vdwg.mxu0
    %v2667 = vsel %vm1140, %v2578, 0.0
    %2668 = vadd.xlane.f32.xlu0 %v2667
    %v2669 = vpop.xlane.xlu0 %2668
    %v2670 = vrcp.pop 1024.0
    %v2671 = vmul.f32 %v2669, %v2670
    %v2672 = vsel %vm1140, %v2664, 0.0
    %2673 = vadd.xlane.f32.xlu0 %v2672
    %v2674 = vpop.xlane.xlu0 %2673
    %v2675 = vmul.f32 %v2674, %v2670
    %v2676 = vmul.f32 %v2671, %v2671
    %v2677 = vsub.f32 %v2675, %v2676
    %v2678 = vmax.f32 %v2677, 0.0
    %v2679 = vadd.f32 %v2678, 1e-05
    %v2680 = vrsqrt.pop %v2679
    %v2681 = vld [vmem:[%s9] sm:$0xff]
    %v2682 = vmul.f32 %v2680, %v2681
    %v2683 = vld [vmem:[%s10] sm:$0xff]
    %v2684 = vmul.f32 %v2671, %v2682
    %v2685 = vsub.f32 %v2683, %v2684
    %2687 = vset.pattern.permute.xlu0 0
    %2688 = vperm.xlu0 %2687, %v2682
    %v2689 = vpop.permute.xlu0 %2688
    %2692 = vset.pattern.permute.xlu0 0
    %2693 = vperm.xlu0 %2692, %v2685
    %v2694 = vpop.permute.xlu0 %2693
    %v2696 = vld [vmem:[%s7] sm:$0xff]
    %v2697 = vld [vmem:[%s7 + $0x8] sm:$0xff]
    %v2698 = vld [vmem:[%s7 + $0x10] sm:$0xff]
    %v2699 = vld [vmem:[%s7 + $0x18] sm:$0xff]
    %v2700 = vld [vmem:[%s7 + $0x20] sm:$0xff]
    %v2701 = vld [vmem:[%s7 + $0x28] sm:$0xff]
    %v2702 = vld [vmem:[%s7 + $0x30] sm:$0xff]
    %v2703 = vld [vmem:[%s7 + $0x38] sm:$0xff]
    %v2704 = vld [vmem:[%s7 + $0x40] sm:$0xff]
    %v2705 = vld [vmem:[%s7 + $0x48] sm:$0xff]
    %v2706 = vld [vmem:[%s7 + $0x50] sm:$0xff]
    %v2707 = vld [vmem:[%s7 + $0x58] sm:$0xff]
    %v2708 = vld [vmem:[%s7 + $0x60] sm:$0xff]
    %v2709 = vld [vmem:[%s7 + $0x68] sm:$0xff]
    %v2710 = vld [vmem:[%s7 + $0x70] sm:$0xff]
    %v2711 = vld [vmem:[%s7 + $0x78] sm:$0xff]
    %vm2712 = vcmask 64512
    %v2714 = vsel %vm2712, %v2696, 0
    %v2717 = vsel %vm2712, %v2697, 0
    %v2720 = vsel %vm2712, %v2698, 0
    %v2723 = vsel %vm2712, %v2699, 0
    %v2726 = vsel %vm2712, %v2700, 0
    %v2729 = vsel %vm2712, %v2701, 0
    %v2732 = vsel %vm2712, %v2702, 0
    %v2735 = vsel %vm2712, %v2703, 0
    %v2738 = vsel %vm2712, %v2704, 0
    %v2741 = vsel %vm2712, %v2705, 0
    %v2744 = vsel %vm2712, %v2706, 0
    %v2747 = vsel %vm2712, %v2707, 0
    %v2750 = vsel %vm2712, %v2708, 0
    %v2753 = vsel %vm2712, %v2709, 0
    %v2756 = vsel %vm2712, %v2710, 0
    %v2759 = vsel %vm2712, %v2711, 0
    %2761 = vmatprep.subr.mxu0 0.0
    %2762 = vmatpush1.msra.mxu0 0.0
    %2763 = vmatprep.subr.mxu0 0.0
    %2764 = vmatpush1.msra.mxu0 0.0
    %2765 = vmatprep.subr.mxu0 0.0
    %2766 = vmatpush1.msra.mxu0 0.0
    %2767 = vmatprep.subr.mxu0 0.0
    %2768 = vmatpush1.msra.mxu0 0.0
    %2769 = vmatprep.subr.mxu0 0.0
    %2770 = vmatpush1.msra.mxu0 0.0
    %2771 = vmatprep.subr.mxu0 0.0
    %2772 = vmatpush1.msra.mxu0 0.0
    %2773 = vmatprep.subr.mxu0 0.0
    %2774 = vmatpush1.msra.mxu0 0.0
    %2775 = vmatprep.subr.mxu0 0.0
    %2776 = vmatpush1.msra.mxu0 0.0
    %2777 = vmatprep.subr.mxu0 0.0
    %2778 = vmatpush1.msra.mxu0 0.0
    %2779 = vmatprep.subr.mxu0 0.0
    %2780 = vmatpush1.msra.mxu0 0.0
    %2781 = vmatprep.subr.mxu0 0.0
    %2782 = vmatpush1.msra.mxu0 0.0
    %2783 = vmatprep.subr.mxu0 0.0
    %2784 = vmatpush1.msra.mxu0 0.0
    %2785 = vmatprep.subr.mxu0 0.0
    %2786 = vmatpush1.msra.mxu0 0.0
    %2787 = vmatprep.subr.mxu0 0.0
    %2788 = vmatpush1.msra.mxu0 0.0
    %2789 = vmatprep.subr.mxu0 0.0
    %2790 = vmatpush1.msra.mxu0 0.0
    %2791 = vmatprep.subr.mxu0 0.0
    %2792 = vmatpush1.msra.mxu0 %v2689
    %2793 = vmatprep.subr.mxu0 0.0
    %2794 = vmatpush2.msra.mxu0 0.0
    %2795 = vmatprep.subr.mxu0 0.0
    %2796 = vmatpush2.msra.mxu0 0.0
    %2797 = vmatprep.subr.mxu0 0.0
    %2798 = vmatpush2.msra.mxu0 0.0
    %2799 = vmatprep.subr.mxu0 0.0
    %2800 = vmatpush2.msra.mxu0 0.0
    %2801 = vmatprep.subr.mxu0 0.0
    %2802 = vmatpush2.msra.mxu0 0.0
    %2803 = vmatprep.subr.mxu0 0.0
    %2804 = vmatpush2.msra.mxu0 0.0
    %2805 = vmatprep.subr.mxu0 0.0
    %2806 = vmatpush2.msra.mxu0 0.0
    %2807 = vmatprep.subr.mxu0 0.0
    %2808 = vmatpush2.msra.mxu0 0.0
    %2809 = vmatprep.subr.mxu0 0.0
    %2810 = vmatpush2.msra.mxu0 0.0
    %2811 = vmatprep.subr.mxu0 0.0
    %2812 = vmatpush2.msra.mxu0 0.0
    %2813 = vmatprep.subr.mxu0 0.0
    %2814 = vmatpush2.msra.mxu0 0.0
    %2815 = vmatprep.subr.mxu0 0.0
    %2816 = vmatpush2.msra.mxu0 0.0
    %2817 = vmatprep.subr.mxu0 0.0
    %2818 = vmatpush2.msra.mxu0 0.0
    %2819 = vmatprep.subr.mxu0 0.0
    %2820 = vmatpush2.msra.mxu0 0.0
    %2821 = vmatprep.subr.mxu0 0.0
    %2822 = vmatpush2.msra.mxu0 0.0
    %2823 = vmatprep.subr.mxu0 0.0
    %2824 = vmatpush2.msra.mxu0 0.0
    %2825 = vmatprep.mubr.f32.mxu0 0.0
    %2826 = vmatmul.mubr.f32.gmra.mxu0 %v2714
    %v2827 = vpop.f32.mrf.mxu0
    %v2828 = vadd.f32 0.0, %v2827
    %v2829 = vpop.f32.mrf.mxu0
    %2830 = vmatprep.mubr.f32.mxu0 0.0
    %2831 = vmatmul.mubr.f32.gmra.mxu0 %v2717
    %v2832 = vpop.f32.mrf.mxu0
    %v2833 = vadd.f32 0.0, %v2832
    %v2834 = vpop.f32.mrf.mxu0
    %2835 = vmatprep.mubr.f32.mxu0 0.0
    %2836 = vmatmul.mubr.f32.gmra.mxu0 %v2720
    %v2837 = vpop.f32.mrf.mxu0
    %v2838 = vadd.f32 0.0, %v2837
    %v2839 = vpop.f32.mrf.mxu0
    %2840 = vmatprep.mubr.f32.mxu0 0.0
    %2841 = vmatmul.mubr.f32.gmra.mxu0 %v2723
    %v2842 = vpop.f32.mrf.mxu0
    %v2843 = vadd.f32 0.0, %v2842
    %v2844 = vpop.f32.mrf.mxu0
    %2845 = vmatprep.mubr.f32.mxu0 0.0
    %2846 = vmatmul.mubr.f32.gmra.mxu0 %v2726
    %v2847 = vpop.f32.mrf.mxu0
    %v2848 = vadd.f32 0.0, %v2847
    %v2849 = vpop.f32.mrf.mxu0
    %2850 = vmatprep.mubr.f32.mxu0 0.0
    %2851 = vmatmul.mubr.f32.gmra.mxu0 %v2729
    %v2852 = vpop.f32.mrf.mxu0
    %v2853 = vadd.f32 0.0, %v2852
    %v2854 = vpop.f32.mrf.mxu0
    %2855 = vmatprep.mubr.f32.mxu0 0.0
    %2856 = vmatmul.mubr.f32.gmra.mxu0 %v2732
    %v2857 = vpop.f32.mrf.mxu0
    %v2858 = vadd.f32 0.0, %v2857
    %v2859 = vpop.f32.mrf.mxu0
    %2860 = vmatprep.mubr.f32.mxu0 0.0
    %2861 = vmatmul.mubr.f32.gmra.mxu0 %v2735
    %v2862 = vpop.f32.mrf.mxu0
    %v2863 = vadd.f32 0.0, %v2862
    %v2864 = vpop.f32.mrf.mxu0
    %2865 = vmatprep.mubr.f32.mxu0 0.0
    %2866 = vmatmul.mubr.f32.gmra.mxu0 %v2738
    %v2867 = vpop.f32.mrf.mxu0
    %v2868 = vadd.f32 0.0, %v2867
    %v2869 = vpop.f32.mrf.mxu0
    %2870 = vmatprep.mubr.f32.mxu0 0.0
    %2871 = vmatmul.mubr.f32.gmra.mxu0 %v2741
    %v2872 = vpop.f32.mrf.mxu0
    %v2873 = vadd.f32 0.0, %v2872
    %v2874 = vpop.f32.mrf.mxu0
    %2875 = vmatprep.mubr.f32.mxu0 0.0
    %2876 = vmatmul.mubr.f32.gmra.mxu0 %v2744
    %v2877 = vpop.f32.mrf.mxu0
    %v2878 = vadd.f32 0.0, %v2877
    %v2879 = vpop.f32.mrf.mxu0
    %2880 = vmatprep.mubr.f32.mxu0 0.0
    %2881 = vmatmul.mubr.f32.gmra.mxu0 %v2747
    %v2882 = vpop.f32.mrf.mxu0
    %v2883 = vadd.f32 0.0, %v2882
    %v2884 = vpop.f32.mrf.mxu0
    %2885 = vmatprep.mubr.f32.mxu0 0.0
    %2886 = vmatmul.mubr.f32.gmra.mxu0 %v2750
    %v2887 = vpop.f32.mrf.mxu0
    %v2888 = vadd.f32 0.0, %v2887
    %v2889 = vpop.f32.mrf.mxu0
    %2890 = vmatprep.mubr.f32.mxu0 0.0
    %2891 = vmatmul.mubr.f32.gmra.mxu0 %v2753
    %v2892 = vpop.f32.mrf.mxu0
    %v2893 = vadd.f32 0.0, %v2892
    %v2894 = vpop.f32.mrf.mxu0
    %2895 = vmatprep.mubr.f32.mxu0 0.0
    %2896 = vmatmul.mubr.f32.gmra.mxu0 %v2756
    %v2897 = vpop.f32.mrf.mxu0
    %v2898 = vadd.f32 0.0, %v2897
    %v2899 = vpop.f32.mrf.mxu0
    %2900 = vmatprep.mubr.f32.mxu0 0.0
    %2901 = vmatmul.mubr.f32.gmra.mxu0 %v2759
    %v2902 = vpop.f32.mrf.mxu0
    %v2903 = vadd.f32 0.0, %v2902
    %v2904 = vpop.f32.mrf.mxu0
    %2905 = vdwg.mxu0
    %2906 = vmatprep.subr.mxu0 0.0
    %2907 = vmatpush1.msra.mxu0 0.0
    %2908 = vmatprep.subr.mxu0 0.0
    %2909 = vmatpush1.msra.mxu0 0.0
    %2910 = vmatprep.subr.mxu0 0.0
    %2911 = vmatpush1.msra.mxu0 0.0
    %2912 = vmatprep.subr.mxu0 0.0
    %2913 = vmatpush1.msra.mxu0 0.0
    %2914 = vmatprep.subr.mxu0 0.0
    %2915 = vmatpush1.msra.mxu0 0.0
    %2916 = vmatprep.subr.mxu0 0.0
    %2917 = vmatpush1.msra.mxu0 0.0
    %2918 = vmatprep.subr.mxu0 0.0
    %2919 = vmatpush1.msra.mxu0 0.0
    %2920 = vmatprep.subr.mxu0 0.0
    %2921 = vmatpush1.msra.mxu0 0.0
    %2922 = vmatprep.subr.mxu0 0.0
    %2923 = vmatpush1.msra.mxu0 0.0
    %2924 = vmatprep.subr.mxu0 0.0
    %2925 = vmatpush1.msra.mxu0 0.0
    %2926 = vmatprep.subr.mxu0 0.0
    %2927 = vmatpush1.msra.mxu0 0.0
    %2928 = vmatprep.subr.mxu0 0.0
    %2929 = vmatpush1.msra.mxu0 0.0
    %2930 = vmatprep.subr.mxu0 0.0
    %2931 = vmatpush1.msra.mxu0 0.0
    %2932 = vmatprep.subr.mxu0 0.0
    %2933 = vmatpush1.msra.mxu0 0.0
    %2934 = vmatprep.subr.mxu0 0.0
    %2935 = vmatpush1.msra.mxu0 0.0
    %2936 = vmatprep.subr.mxu0 0.0
    %2937 = vmatpush1.msra.mxu0 %v2694
    %2938 = vmatprep.subr.mxu0 0.0
    %2939 = vmatpush2.msra.mxu0 0.0
    %2940 = vmatprep.subr.mxu0 0.0
    %2941 = vmatpush2.msra.mxu0 0.0
    %2942 = vmatprep.subr.mxu0 0.0
    %2943 = vmatpush2.msra.mxu0 0.0
    %2944 = vmatprep.subr.mxu0 0.0
    %2945 = vmatpush2.msra.mxu0 0.0
    %2946 = vmatprep.subr.mxu0 0.0
    %2947 = vmatpush2.msra.mxu0 0.0
    %2948 = vmatprep.subr.mxu0 0.0
    %2949 = vmatpush2.msra.mxu0 0.0
    %2950 = vmatprep.subr.mxu0 0.0
    %2951 = vmatpush2.msra.mxu0 0.0
    %2952 = vmatprep.subr.mxu0 0.0
    %2953 = vmatpush2.msra.mxu0 0.0
    %2954 = vmatprep.subr.mxu0 0.0
    %2955 = vmatpush2.msra.mxu0 0.0
    %2956 = vmatprep.subr.mxu0 0.0
    %2957 = vmatpush2.msra.mxu0 0.0
    %2958 = vmatprep.subr.mxu0 0.0
    %2959 = vmatpush2.msra.mxu0 0.0
    %2960 = vmatprep.subr.mxu0 0.0
    %2961 = vmatpush2.msra.mxu0 0.0
    %2962 = vmatprep.subr.mxu0 0.0
    %2963 = vmatpush2.msra.mxu0 0.0
    %2964 = vmatprep.subr.mxu0 0.0
    %2965 = vmatpush2.msra.mxu0 0.0
    %2966 = vmatprep.subr.mxu0 0.0
    %2967 = vmatpush2.msra.mxu0 0.0
    %2968 = vmatprep.subr.mxu0 0.0
    %2969 = vmatpush2.msra.mxu0 0.0
    %2970 = vmatprep.mubr.f32.mxu0 0.0
    %2971 = vmatmul.mubr.f32.gmra.mxu0 %v2714
    %v2972 = vpop.f32.mrf.mxu0
    %v2973 = vadd.f32 0.0, %v2972
    %v2974 = vpop.f32.mrf.mxu0
    %2975 = vmatprep.mubr.f32.mxu0 0.0
    %2976 = vmatmul.mubr.f32.gmra.mxu0 %v2717
    %v2977 = vpop.f32.mrf.mxu0
    %v2978 = vadd.f32 0.0, %v2977
    %v2979 = vpop.f32.mrf.mxu0
    %2980 = vmatprep.mubr.f32.mxu0 0.0
    %2981 = vmatmul.mubr.f32.gmra.mxu0 %v2720
    %v2982 = vpop.f32.mrf.mxu0
    %v2983 = vadd.f32 0.0, %v2982
    %v2984 = vpop.f32.mrf.mxu0
    %2985 = vmatprep.mubr.f32.mxu0 0.0
    %2986 = vmatmul.mubr.f32.gmra.mxu0 %v2723
    %v2987 = vpop.f32.mrf.mxu0
    %v2988 = vadd.f32 0.0, %v2987
    %v2989 = vpop.f32.mrf.mxu0
    %2990 = vmatprep.mubr.f32.mxu0 0.0
    %2991 = vmatmul.mubr.f32.gmra.mxu0 %v2726
    %v2992 = vpop.f32.mrf.mxu0
    %v2993 = vadd.f32 0.0, %v2992
    %v2994 = vpop.f32.mrf.mxu0
    %2995 = vmatprep.mubr.f32.mxu0 0.0
    %2996 = vmatmul.mubr.f32.gmra.mxu0 %v2729
    %v2997 = vpop.f32.mrf.mxu0
    %v2998 = vadd.f32 0.0, %v2997
    %v2999 = vpop.f32.mrf.mxu0
    %3000 = vmatprep.mubr.f32.mxu0 0.0
    %3001 = vmatmul.mubr.f32.gmra.mxu0 %v2732
    %v3002 = vpop.f32.mrf.mxu0
    %v3003 = vadd.f32 0.0, %v3002
    %v3004 = vpop.f32.mrf.mxu0
    %3005 = vmatprep.mubr.f32.mxu0 0.0
    %3006 = vmatmul.mubr.f32.gmra.mxu0 %v2735
    %v3007 = vpop.f32.mrf.mxu0
    %v3008 = vadd.f32 0.0, %v3007
    %v3009 = vpop.f32.mrf.mxu0
    %3010 = vmatprep.mubr.f32.mxu0 0.0
    %3011 = vmatmul.mubr.f32.gmra.mxu0 %v2738
    %v3012 = vpop.f32.mrf.mxu0
    %v3013 = vadd.f32 0.0, %v3012
    %v3014 = vpop.f32.mrf.mxu0
    %3015 = vmatprep.mubr.f32.mxu0 0.0
    %3016 = vmatmul.mubr.f32.gmra.mxu0 %v2741
    %v3017 = vpop.f32.mrf.mxu0
    %v3018 = vadd.f32 0.0, %v3017
    %v3019 = vpop.f32.mrf.mxu0
    %3020 = vmatprep.mubr.f32.mxu0 0.0
    %3021 = vmatmul.mubr.f32.gmra.mxu0 %v2744
    %v3022 = vpop.f32.mrf.mxu0
    %v3023 = vadd.f32 0.0, %v3022
    %v3024 = vpop.f32.mrf.mxu0
    %3025 = vmatprep.mubr.f32.mxu0 0.0
    %3026 = vmatmul.mubr.f32.gmra.mxu0 %v2747
    %v3027 = vpop.f32.mrf.mxu0
    %v3028 = vadd.f32 0.0, %v3027
    %v3029 = vpop.f32.mrf.mxu0
    %3030 = vmatprep.mubr.f32.mxu0 0.0
    %3031 = vmatmul.mubr.f32.gmra.mxu0 %v2750
    %v3032 = vpop.f32.mrf.mxu0
    %v3033 = vadd.f32 0.0, %v3032
    %v3034 = vpop.f32.mrf.mxu0
    %3035 = vmatprep.mubr.f32.mxu0 0.0
    %3036 = vmatmul.mubr.f32.gmra.mxu0 %v2753
    %v3037 = vpop.f32.mrf.mxu0
    %v3038 = vadd.f32 0.0, %v3037
    %v3039 = vpop.f32.mrf.mxu0
    %3040 = vmatprep.mubr.f32.mxu0 0.0
    %3041 = vmatmul.mubr.f32.gmra.mxu0 %v2756
    %v3042 = vpop.f32.mrf.mxu0
    %v3043 = vadd.f32 0.0, %v3042
    %v3044 = vpop.f32.mrf.mxu0
    %3045 = vmatprep.mubr.f32.mxu0 0.0
    %3046 = vmatmul.mubr.f32.gmra.mxu0 %v2759
    %v3047 = vpop.f32.mrf.mxu0
    %v3048 = vadd.f32 0.0, %v3047
    %v3049 = vpop.f32.mrf.mxu0
    %3050 = vdwg.mxu0
    %v3051 = vmul.f32 %v2494, %v2828
    %v3052 = vmul.f32 %v2495, %v2833
    %v3053 = vmul.f32 %v2496, %v2838
    %v3054 = vmul.f32 %v2497, %v2843
    %v3055 = vmul.f32 %v2498, %v2848
    %v3056 = vmul.f32 %v2499, %v2853
    %v3057 = vmul.f32 %v2500, %v2858
    %v3058 = vmul.f32 %v2501, %v2863
    %v3059 = vmul.f32 %v2502, %v2868
    %v3060 = vmul.f32 %v2503, %v2873
    %v3061 = vmul.f32 %v2504, %v2878
    %v3062 = vmul.f32 %v2505, %v2883
    %v3063 = vmul.f32 %v2506, %v2888
    %v3064 = vmul.f32 %v2507, %v2893
    %v3065 = vmul.f32 %v2508, %v2898
    %v3066 = vmul.f32 %v2509, %v2903
    %v3067 = vadd.f32 %v3051, %v2973
    %v3068 = vadd.f32 %v3052, %v2978
    %v3069 = vadd.f32 %v3053, %v2983
    %v3070 = vadd.f32 %v3054, %v2988
    %v3071 = vadd.f32 %v3055, %v2993
    %v3072 = vadd.f32 %v3056, %v2998
    %v3073 = vadd.f32 %v3057, %v3003
    %v3074 = vadd.f32 %v3058, %v3008
    %v3075 = vadd.f32 %v3059, %v3013
    %v3076 = vadd.f32 %v3060, %v3018
    %v3077 = vadd.f32 %v3061, %v3023
    %v3078 = vadd.f32 %v3062, %v3028
    %v3079 = vadd.f32 %v3063, %v3033
    %v3080 = vadd.f32 %v3064, %v3038
    %v3081 = vadd.f32 %v3065, %v3043
    %v3082 = vadd.f32 %v3066, %v3048
    %v3083 = vld [vmem:[%s12] sm:$0x3]
    %v3084 = vld [vmem:[%s11] sm:$0xff]
    %v3085 = vld [vmem:[%s11 + $0x8] sm:$0xff]
    %v3086 = vld [vmem:[%s11 + $0x10] sm:$0xff]
    %v3087 = vld [vmem:[%s11 + $0x18] sm:$0xff]
    %v3088 = vld [vmem:[%s11 + $0x20] sm:$0xff]
    %v3089 = vld [vmem:[%s11 + $0x28] sm:$0xff]
    %v3090 = vld [vmem:[%s11 + $0x30] sm:$0xff]
    %v3091 = vld [vmem:[%s11 + $0x38] sm:$0xff]
    %v3092 = vld [vmem:[%s11 + $0x40] sm:$0xff]
    %v3093 = vld [vmem:[%s11 + $0x48] sm:$0xff]
    %v3094 = vld [vmem:[%s11 + $0x50] sm:$0xff]
    %v3095 = vld [vmem:[%s11 + $0x58] sm:$0xff]
    %v3096 = vld [vmem:[%s11 + $0x60] sm:$0xff]
    %v3097 = vld [vmem:[%s11 + $0x68] sm:$0xff]
    %v3098 = vld [vmem:[%s11 + $0x70] sm:$0xff]
    %v3099 = vld [vmem:[%s11 + $0x78] sm:$0xff]
    %v3101 = vsel %vm1140, %v3067, 0
    %v3104 = vsel %vm1140, %v3068, 0
    %v3107 = vsel %vm1140, %v3069, 0
    %v3110 = vsel %vm1140, %v3070, 0
    %v3113 = vsel %vm1140, %v3071, 0
    %v3116 = vsel %vm1140, %v3072, 0
    %v3119 = vsel %vm1140, %v3073, 0
    %v3122 = vsel %vm1140, %v3074, 0
    %v3125 = vsel %vm1140, %v3075, 0
    %v3128 = vsel %vm1140, %v3076, 0
    %v3131 = vsel %vm1140, %v3077, 0
    %v3134 = vsel %vm1140, %v3078, 0
    %3136 = vmatprep.subr.mxu0 0.0
    %3137 = vmatpush1.msra.mxu0 0.0
    %3138 = vmatprep.subr.mxu0 0.0
    %3139 = vmatpush1.msra.mxu0 0.0
    %3140 = vmatprep.subr.mxu0 0.0
    %3141 = vmatpush1.msra.mxu0 0.0
    %3142 = vmatprep.subr.mxu0 0.0
    %3143 = vmatpush1.msra.mxu0 0.0
    %3144 = vmatprep.subr.mxu0 0.0
    %3145 = vmatpush1.msra.mxu0 0.0
    %3146 = vmatprep.subr.mxu0 0.0
    %3147 = vmatpush1.msra.mxu0 0.0
    %3148 = vmatprep.subr.mxu0 0.0
    %3149 = vmatpush1.msra.mxu0 0.0
    %3150 = vmatprep.subr.mxu0 0.0
    %3151 = vmatpush1.msra.mxu0 0.0
    %3152 = vmatprep.subr.mxu0 %v3099
    %3153 = vmatpush1.msra.mxu0 %v3098
    %3154 = vmatprep.subr.mxu0 %v3097
    %3155 = vmatpush1.msra.mxu0 %v3096
    %3156 = vmatprep.subr.mxu0 %v3095
    %3157 = vmatpush1.msra.mxu0 %v3094
    %3158 = vmatprep.subr.mxu0 %v3093
    %3159 = vmatpush1.msra.mxu0 %v3092
    %3160 = vmatprep.subr.mxu0 %v3091
    %3161 = vmatpush1.msra.mxu0 %v3090
    %3162 = vmatprep.subr.mxu0 %v3089
    %3163 = vmatpush1.msra.mxu0 %v3088
    %3164 = vmatprep.subr.mxu0 %v3087
    %3165 = vmatpush1.msra.mxu0 %v3086
    %3166 = vmatprep.subr.mxu0 %v3085
    %3167 = vmatpush1.msra.mxu0 %v3084
    %3168 = vmatprep.subr.mxu0 0.0
    %3169 = vmatpush2.msra.mxu0 0.0
    %3170 = vmatprep.subr.mxu0 0.0
    %3171 = vmatpush2.msra.mxu0 0.0
    %3172 = vmatprep.subr.mxu0 0.0
    %3173 = vmatpush2.msra.mxu0 0.0
    %3174 = vmatprep.subr.mxu0 0.0
    %3175 = vmatpush2.msra.mxu0 0.0
    %3176 = vmatprep.subr.mxu0 0.0
    %3177 = vmatpush2.msra.mxu0 0.0
    %3178 = vmatprep.subr.mxu0 0.0
    %3179 = vmatpush2.msra.mxu0 0.0
    %3180 = vmatprep.subr.mxu0 0.0
    %3181 = vmatpush2.msra.mxu0 0.0
    %3182 = vmatprep.subr.mxu0 0.0
    %3183 = vmatpush2.msra.mxu0 0.0
    %3184 = vmatprep.subr.mxu0 0.0
    %3185 = vmatpush2.msra.mxu0 0.0
    %3186 = vmatprep.subr.mxu0 0.0
    %3187 = vmatpush2.msra.mxu0 0.0
    %3188 = vmatprep.subr.mxu0 0.0
    %3189 = vmatpush2.msra.mxu0 0.0
    %3190 = vmatprep.subr.mxu0 0.0
    %3191 = vmatpush2.msra.mxu0 0.0
    %3192 = vmatprep.subr.mxu0 0.0
    %3193 = vmatpush2.msra.mxu0 0.0
    %3194 = vmatprep.subr.mxu0 0.0
    %3195 = vmatpush2.msra.mxu0 0.0
    %3196 = vmatprep.subr.mxu0 0.0
    %3197 = vmatpush2.msra.mxu0 0.0
    %3198 = vmatprep.subr.mxu0 0.0
    %3199 = vmatpush2.msra.mxu0 0.0
    %3200 = vmatprep.mubr.f32.mxu0 0.0
    %3201 = vmatmul.mubr.f32.gmra.mxu0 %v3101
    %v3202 = vpop.f32.mrf.mxu0
    %v3203 = vadd.f32 0.0, %v3202
    %v3204 = vpop.f32.mrf.mxu0
    %v3205 = vadd.f32 0.0, %v3204
    %3206 = vmatprep.mubr.f32.mxu0 0.0
    %3207 = vmatmul.mubr.f32.gmra.mxu0 %v3104
    %v3208 = vpop.f32.mrf.mxu0
    %v3209 = vadd.f32 0.0, %v3208
    %v3210 = vpop.f32.mrf.mxu0
    %v3211 = vadd.f32 0.0, %v3210
    %3212 = vmatprep.mubr.f32.mxu0 0.0
    %3213 = vmatmul.mubr.f32.gmra.mxu0 %v3107
    %v3214 = vpop.f32.mrf.mxu0
    %v3215 = vadd.f32 0.0, %v3214
    %v3216 = vpop.f32.mrf.mxu0
    %v3217 = vadd.f32 0.0, %v3216
    %3218 = vmatprep.mubr.f32.mxu0 0.0
    %3219 = vmatmul.mubr.f32.gmra.mxu0 %v3110
    %v3220 = vpop.f32.mrf.mxu0
    %v3221 = vadd.f32 0.0, %v3220
    %v3222 = vpop.f32.mrf.mxu0
    %v3223 = vadd.f32 0.0, %v3222
    %3224 = vmatprep.mubr.f32.mxu0 0.0
    %3225 = vmatmul.mubr.f32.gmra.mxu0 %v3113
    %v3226 = vpop.f32.mrf.mxu0
    %v3227 = vadd.f32 0.0, %v3226
    %v3228 = vpop.f32.mrf.mxu0
    %v3229 = vadd.f32 0.0, %v3228
    %3230 = vmatprep.mubr.f32.mxu0 0.0
    %3231 = vmatmul.mubr.f32.gmra.mxu0 %v3116
    %v3232 = vpop.f32.mrf.mxu0
    %v3233 = vadd.f32 0.0, %v3232
    %v3234 = vpop.f32.mrf.mxu0
    %v3235 = vadd.f32 0.0, %v3234
    %3236 = vmatprep.mubr.f32.mxu0 0.0
    %3237 = vmatmul.mubr.f32.gmra.mxu0 %v3119
    %v3238 = vpop.f32.mrf.mxu0
    %v3239 = vadd.f32 0.0, %v3238
    %v3240 = vpop.f32.mrf.mxu0
    %v3241 = vadd.f32 0.0, %v3240
    %3242 = vmatprep.mubr.f32.mxu0 0.0
    %3243 = vmatmul.mubr.f32.gmra.mxu0 %v3122
    %v3244 = vpop.f32.mrf.mxu0
    %v3245 = vadd.f32 0.0, %v3244
    %v3246 = vpop.f32.mrf.mxu0
    %v3247 = vadd.f32 0.0, %v3246
    %3248 = vmatprep.mubr.f32.mxu0 0.0
    %3249 = vmatmul.mubr.f32.gmra.mxu0 %v3125
    %v3250 = vpop.f32.mrf.mxu0
    %v3251 = vadd.f32 0.0, %v3250
    %v3252 = vpop.f32.mrf.mxu0
    %v3253 = vadd.f32 0.0, %v3252
    %3254 = vmatprep.mubr.f32.mxu0 0.0
    %3255 = vmatmul.mubr.f32.gmra.mxu0 %v3128
    %v3256 = vpop.f32.mrf.mxu0
    %v3257 = vadd.f32 0.0, %v3256
    %v3258 = vpop.f32.mrf.mxu0
    %v3259 = vadd.f32 0.0, %v3258
    %3260 = vmatprep.mubr.f32.mxu0 0.0
    %3261 = vmatmul.mubr.f32.gmra.mxu0 %v3131
    %v3262 = vpop.f32.mrf.mxu0
    %v3263 = vadd.f32 0.0, %v3262
    %v3264 = vpop.f32.mrf.mxu0
    %v3265 = vadd.f32 0.0, %v3264
    %3266 = vmatprep.mubr.f32.mxu0 0.0
    %3267 = vmatmul.mubr.f32.gmra.mxu0 %v3134
    %v3268 = vpop.f32.mrf.mxu0
    %v3269 = vadd.f32 0.0, %v3268
    %v3270 = vpop.f32.mrf.mxu0
    %v3271 = vadd.f32 0.0, %v3270
    %3272 = vdwg.mxu0
    %v3274 = vlaneseq
    %v3275 = vshrl.u32 %v3274, 7
    %v3276 = vsub.s32 0, %v3275
    %v3277 = vrot.slane %v3083, %v3276
    %v3278 = vlaneseq
    %v3279 = vshrl.u32 %v3278, 7
    %v3280 = vsub.s32 1, %v3279
    %v3281 = vrot.slane %v3083, %v3280
    %v3284 = vadd.f32 %v3277, %v3203
    %v3285 = vadd.f32 %v3281, %v3205
    %v3286 = vadd.f32 %v3277, %v3209
    %v3287 = vadd.f32 %v3281, %v3211
    %v3288 = vadd.f32 %v3277, %v3215
    %v3289 = vadd.f32 %v3281, %v3217
    %v3290 = vadd.f32 %v3277, %v3221
    %v3291 = vadd.f32 %v3281, %v3223
    %v3292 = vadd.f32 %v3277, %v3227
    %v3293 = vadd.f32 %v3281, %v3229
    %v3294 = vadd.f32 %v3277, %v3233
    %v3295 = vadd.f32 %v3281, %v3235
    %v3296 = vadd.f32 %v3277, %v3239
    %v3297 = vadd.f32 %v3281, %v3241
    %v3298 = vadd.f32 %v3277, %v3245
    %v3299 = vadd.f32 %v3281, %v3247
    %v3300 = vadd.f32 %v3277, %v3251
    %v3301 = vadd.f32 %v3281, %v3253
    %v3302 = vadd.f32 %v3277, %v3257
    %v3303 = vadd.f32 %v3281, %v3259
    %v3304 = vadd.f32 %v3277, %v3263
    %v3305 = vadd.f32 %v3281, %v3265
    %v3306 = vadd.f32 %v3277, %v3269
    %v3307 = vadd.f32 %v3281, %v3271
    %s3308 = scalar_lea.vmem %s11, 128
    %v3309 = vld [vmem:[%s3308] sm:$0xff]
    %v3310 = vld [vmem:[%s3308 + $0x8] sm:$0xff]
    %v3311 = vld [vmem:[%s3308 + $0x10] sm:$0xff]
    %v3312 = vld [vmem:[%s3308 + $0x18] sm:$0xff]
    %v3313 = vld [vmem:[%s3308 + $0x20] sm:$0xff]
    %v3314 = vld [vmem:[%s3308 + $0x28] sm:$0xff]
    %v3315 = vld [vmem:[%s3308 + $0x30] sm:$0xff]
    %v3316 = vld [vmem:[%s3308 + $0x38] sm:$0xff]
    %v3317 = vld [vmem:[%s3308 + $0x40] sm:$0xff]
    %v3318 = vld [vmem:[%s3308 + $0x48] sm:$0xff]
    %v3319 = vld [vmem:[%s3308 + $0x50] sm:$0xff]
    %v3320 = vld [vmem:[%s3308 + $0x58] sm:$0xff]
    %v3321 = vld [vmem:[%s3308 + $0x60] sm:$0xff]
    %v3322 = vld [vmem:[%s3308 + $0x68] sm:$0xff]
    %v3323 = vld [vmem:[%s3308 + $0x70] sm:$0xff]
    %v3324 = vld [vmem:[%s3308 + $0x78] sm:$0xff]
    %v3326 = vsel %vm1140, %v3079, 0
    %v3329 = vsel %vm1140, %v3080, 0
    %3331 = vmatprep.subr.mxu0 0.0
    %3332 = vmatpush1.msra.mxu0 0.0
    %3333 = vmatprep.subr.mxu0 0.0
    %3334 = vmatpush1.msra.mxu0 0.0
    %3335 = vmatprep.subr.mxu0 0.0
    %3336 = vmatpush1.msra.mxu0 0.0
    %3337 = vmatprep.subr.mxu0 0.0
    %3338 = vmatpush1.msra.mxu0 0.0
    %3339 = vmatprep.subr.mxu0 0.0
    %3340 = vmatpush1.msra.mxu0 0.0
    %3341 = vmatprep.subr.mxu0 0.0
    %3342 = vmatpush1.msra.mxu0 0.0
    %3343 = vmatprep.subr.mxu0 0.0
    %3344 = vmatpush1.msra.mxu0 0.0
    %3345 = vmatprep.subr.mxu0 0.0
    %3346 = vmatpush1.msra.mxu0 0.0
    %3347 = vmatprep.subr.mxu0 %v3324
    %3348 = vmatpush1.msra.mxu0 %v3323
    %3349 = vmatprep.subr.mxu0 %v3322
    %3350 = vmatpush1.msra.mxu0 %v3321
    %3351 = vmatprep.subr.mxu0 %v3320
    %3352 = vmatpush1.msra.mxu0 %v3319
    %3353 = vmatprep.subr.mxu0 %v3318
    %3354 = vmatpush1.msra.mxu0 %v3317
    %3355 = vmatprep.subr.mxu0 %v3316
    %3356 = vmatpush1.msra.mxu0 %v3315
    %3357 = vmatprep.subr.mxu0 %v3314
    %3358 = vmatpush1.msra.mxu0 %v3313
    %3359 = vmatprep.subr.mxu0 %v3312
    %3360 = vmatpush1.msra.mxu0 %v3311
    %3361 = vmatprep.subr.mxu0 %v3310
    %3362 = vmatpush1.msra.mxu0 %v3309
    %3363 = vmatprep.subr.mxu0 0.0
    %3364 = vmatpush2.msra.mxu0 0.0
    %3365 = vmatprep.subr.mxu0 0.0
    %3366 = vmatpush2.msra.mxu0 0.0
    %3367 = vmatprep.subr.mxu0 0.0
    %3368 = vmatpush2.msra.mxu0 0.0
    %3369 = vmatprep.subr.mxu0 0.0
    %3370 = vmatpush2.msra.mxu0 0.0
    %3371 = vmatprep.subr.mxu0 0.0
    %3372 = vmatpush2.msra.mxu0 0.0
    %3373 = vmatprep.subr.mxu0 0.0
    %3374 = vmatpush2.msra.mxu0 0.0
    %3375 = vmatprep.subr.mxu0 0.0
    %3376 = vmatpush2.msra.mxu0 0.0
    %3377 = vmatprep.subr.mxu0 0.0
    %3378 = vmatpush2.msra.mxu0 0.0
    %3379 = vmatprep.subr.mxu0 0.0
    %3380 = vmatpush2.msra.mxu0 0.0
    %3381 = vmatprep.subr.mxu0 0.0
    %3382 = vmatpush2.msra.mxu0 0.0
    %3383 = vmatprep.subr.mxu0 0.0
    %3384 = vmatpush2.msra.mxu0 0.0
    %3385 = vmatprep.subr.mxu0 0.0
    %3386 = vmatpush2.msra.mxu0 0.0
    %3387 = vmatprep.subr.mxu0 0.0
    %3388 = vmatpush2.msra.mxu0 0.0
    %3389 = vmatprep.subr.mxu0 0.0
    %3390 = vmatpush2.msra.mxu0 0.0
    %3391 = vmatprep.subr.mxu0 0.0
    %3392 = vmatpush2.msra.mxu0 0.0
    %3393 = vmatprep.subr.mxu0 0.0
    %3394 = vmatpush2.msra.mxu0 0.0
    %3395 = vmatprep.mubr.f32.mxu0 0.0
    %3396 = vmatmul.mubr.f32.gmra.mxu0 %v3107
    %v3397 = vpop.f32.mrf.mxu0
    %v3398 = vadd.f32 0.0, %v3397
    %v3399 = vpop.f32.mrf.mxu0
    %v3400 = vadd.f32 0.0, %v3399
    %3401 = vmatprep.mubr.f32.mxu0 0.0
    %3402 = vmatmul.mubr.f32.gmra.mxu0 %v3110
    %v3403 = vpop.f32.mrf.mxu0
    %v3404 = vadd.f32 0.0, %v3403
    %v3405 = vpop.f32.mrf.mxu0
    %v3406 = vadd.f32 0.0, %v3405
    %3407 = vmatprep.mubr.f32.mxu0 0.0
    %3408 = vmatmul.mubr.f32.gmra.mxu0 %v3113
    %v3409 = vpop.f32.mrf.mxu0
    %v3410 = vadd.f32 0.0, %v3409
    %v3411 = vpop.f32.mrf.mxu0
    %v3412 = vadd.f32 0.0, %v3411
    %3413 = vmatprep.mubr.f32.mxu0 0.0
    %3414 = vmatmul.mubr.f32.gmra.mxu0 %v3116
    %v3415 = vpop.f32.mrf.mxu0
    %v3416 = vadd.f32 0.0, %v3415
    %v3417 = vpop.f32.mrf.mxu0
    %v3418 = vadd.f32 0.0, %v3417
    %3419 = vmatprep.mubr.f32.mxu0 0.0
    %3420 = vmatmul.mubr.f32.gmra.mxu0 %v3119
    %v3421 = vpop.f32.mrf.mxu0
    %v3422 = vadd.f32 0.0, %v3421
    %v3423 = vpop.f32.mrf.mxu0
    %v3424 = vadd.f32 0.0, %v3423
    %3425 = vmatprep.mubr.f32.mxu0 0.0
    %3426 = vmatmul.mubr.f32.gmra.mxu0 %v3122
    %v3427 = vpop.f32.mrf.mxu0
    %v3428 = vadd.f32 0.0, %v3427
    %v3429 = vpop.f32.mrf.mxu0
    %v3430 = vadd.f32 0.0, %v3429
    %3431 = vmatprep.mubr.f32.mxu0 0.0
    %3432 = vmatmul.mubr.f32.gmra.mxu0 %v3125
    %v3433 = vpop.f32.mrf.mxu0
    %v3434 = vadd.f32 0.0, %v3433
    %v3435 = vpop.f32.mrf.mxu0
    %v3436 = vadd.f32 0.0, %v3435
    %3437 = vmatprep.mubr.f32.mxu0 0.0
    %3438 = vmatmul.mubr.f32.gmra.mxu0 %v3128
    %v3439 = vpop.f32.mrf.mxu0
    %v3440 = vadd.f32 0.0, %v3439
    %v3441 = vpop.f32.mrf.mxu0
    %v3442 = vadd.f32 0.0, %v3441
    %3443 = vmatprep.mubr.f32.mxu0 0.0
    %3444 = vmatmul.mubr.f32.gmra.mxu0 %v3131
    %v3445 = vpop.f32.mrf.mxu0
    %v3446 = vadd.f32 0.0, %v3445
    %v3447 = vpop.f32.mrf.mxu0
    %v3448 = vadd.f32 0.0, %v3447
    %3449 = vmatprep.mubr.f32.mxu0 0.0
    %3450 = vmatmul.mubr.f32.gmra.mxu0 %v3134
    %v3451 = vpop.f32.mrf.mxu0
    %v3452 = vadd.f32 0.0, %v3451
    %v3453 = vpop.f32.mrf.mxu0
    %v3454 = vadd.f32 0.0, %v3453
    %3455 = vmatprep.mubr.f32.mxu0 0.0
    %3456 = vmatmul.mubr.f32.gmra.mxu0 %v3326
    %v3457 = vpop.f32.mrf.mxu0
    %v3458 = vadd.f32 0.0, %v3457
    %v3459 = vpop.f32.mrf.mxu0
    %v3460 = vadd.f32 0.0, %v3459
    %3461 = vmatprep.mubr.f32.mxu0 0.0
    %3462 = vmatmul.mubr.f32.gmra.mxu0 %v3329
    %v3463 = vpop.f32.mrf.mxu0
    %v3464 = vadd.f32 0.0, %v3463
    %v3465 = vpop.f32.mrf.mxu0
    %v3466 = vadd.f32 0.0, %v3465
    %3467 = vdwg.mxu0
    %v3468 = vadd.f32 %v3284, %v3398
    %v3469 = vadd.f32 %v3285, %v3400
    %v3470 = vadd.f32 %v3286, %v3404
    %v3471 = vadd.f32 %v3287, %v3406
    %v3472 = vadd.f32 %v3288, %v3410
    %v3473 = vadd.f32 %v3289, %v3412
    %v3474 = vadd.f32 %v3290, %v3416
    %v3475 = vadd.f32 %v3291, %v3418
    %v3476 = vadd.f32 %v3292, %v3422
    %v3477 = vadd.f32 %v3293, %v3424
    %v3478 = vadd.f32 %v3294, %v3428
    %v3479 = vadd.f32 %v3295, %v3430
    %v3480 = vadd.f32 %v3296, %v3434
    %v3481 = vadd.f32 %v3297, %v3436
    %v3482 = vadd.f32 %v3298, %v3440
    %v3483 = vadd.f32 %v3299, %v3442
    %v3484 = vadd.f32 %v3300, %v3446
    %v3485 = vadd.f32 %v3301, %v3448
    %v3486 = vadd.f32 %v3302, %v3452
    %v3487 = vadd.f32 %v3303, %v3454
    %v3488 = vadd.f32 %v3304, %v3458
    %v3489 = vadd.f32 %v3305, %v3460
    %v3490 = vadd.f32 %v3306, %v3464
    %v3491 = vadd.f32 %v3307, %v3466
    %s3492 = scalar_lea.vmem %s11, 256
    %v3493 = vld [vmem:[%s3492] sm:$0xff]
    %v3494 = vld [vmem:[%s3492 + $0x8] sm:$0xff]
    %v3495 = vld [vmem:[%s3492 + $0x10] sm:$0xff]
    %v3496 = vld [vmem:[%s3492 + $0x18] sm:$0xff]
    %v3497 = vld [vmem:[%s3492 + $0x20] sm:$0xff]
    %v3498 = vld [vmem:[%s3492 + $0x28] sm:$0xff]
    %v3499 = vld [vmem:[%s3492 + $0x30] sm:$0xff]
    %v3500 = vld [vmem:[%s3492 + $0x38] sm:$0xff]
    %v3501 = vld [vmem:[%s3492 + $0x40] sm:$0xff]
    %v3502 = vld [vmem:[%s3492 + $0x48] sm:$0xff]
    %v3503 = vld [vmem:[%s3492 + $0x50] sm:$0xff]
    %v3504 = vld [vmem:[%s3492 + $0x58] sm:$0xff]
    %v3505 = vld [vmem:[%s3492 + $0x60] sm:$0xff]
    %v3506 = vld [vmem:[%s3492 + $0x68] sm:$0xff]
    %v3507 = vld [vmem:[%s3492 + $0x70] sm:$0xff]
    %v3508 = vld [vmem:[%s3492 + $0x78] sm:$0xff]
    %v3510 = vsel %vm1140, %v3081, 0
    %v3513 = vsel %vm1140, %v3082, 0
    %3515 = vmatprep.subr.mxu0 0.0
    %3516 = vmatpush1.msra.mxu0 0.0
    %3517 = vmatprep.subr.mxu0 0.0
    %3518 = vmatpush1.msra.mxu0 0.0
    %3519 = vmatprep.subr.mxu0 0.0
    %3520 = vmatpush1.msra.mxu0 0.0
    %3521 = vmatprep.subr.mxu0 0.0
    %3522 = vmatpush1.msra.mxu0 0.0
    %3523 = vmatprep.subr.mxu0 0.0
    %3524 = vmatpush1.msra.mxu0 0.0
    %3525 = vmatprep.subr.mxu0 0.0
    %3526 = vmatpush1.msra.mxu0 0.0
    %3527 = vmatprep.subr.mxu0 0.0
    %3528 = vmatpush1.msra.mxu0 0.0
    %3529 = vmatprep.subr.mxu0 0.0
    %3530 = vmatpush1.msra.mxu0 0.0
    %3531 = vmatprep.subr.mxu0 %v3508
    %3532 = vmatpush1.msra.mxu0 %v3507
    %3533 = vmatprep.subr.mxu0 %v3506
    %3534 = vmatpush1.msra.mxu0 %v3505
    %3535 = vmatprep.subr.mxu0 %v3504
    %3536 = vmatpush1.msra.mxu0 %v3503
    %3537 = vmatprep.subr.mxu0 %v3502
    %3538 = vmatpush1.msra.mxu0 %v3501
    %3539 = vmatprep.subr.mxu0 %v3500
    %3540 = vmatpush1.msra.mxu0 %v3499
    %3541 = vmatprep.subr.mxu0 %v3498
    %3542 = vmatpush1.msra.mxu0 %v3497
    %3543 = vmatprep.subr.mxu0 %v3496
    %3544 = vmatpush1.msra.mxu0 %v3495
    %3545 = vmatprep.subr.mxu0 %v3494
    %3546 = vmatpush1.msra.mxu0 %v3493
    %3547 = vmatprep.subr.mxu0 0.0
    %3548 = vmatpush2.msra.mxu0 0.0
    %3549 = vmatprep.subr.mxu0 0.0
    %3550 = vmatpush2.msra.mxu0 0.0
    %3551 = vmatprep.subr.mxu0 0.0
    %3552 = vmatpush2.msra.mxu0 0.0
    %3553 = vmatprep.subr.mxu0 0.0
    %3554 = vmatpush2.msra.mxu0 0.0
    %3555 = vmatprep.subr.mxu0 0.0
    %3556 = vmatpush2.msra.mxu0 0.0
    %3557 = vmatprep.subr.mxu0 0.0
    %3558 = vmatpush2.msra.mxu0 0.0
    %3559 = vmatprep.subr.mxu0 0.0
    %3560 = vmatpush2.msra.mxu0 0.0
    %3561 = vmatprep.subr.mxu0 0.0
    %3562 = vmatpush2.msra.mxu0 0.0
    %3563 = vmatprep.subr.mxu0 0.0
    %3564 = vmatpush2.msra.mxu0 0.0
    %3565 = vmatprep.subr.mxu0 0.0
    %3566 = vmatpush2.msra.mxu0 0.0
    %3567 = vmatprep.subr.mxu0 0.0
    %3568 = vmatpush2.msra.mxu0 0.0
    %3569 = vmatprep.subr.mxu0 0.0
    %3570 = vmatpush2.msra.mxu0 0.0
    %3571 = vmatprep.subr.mxu0 0.0
    %3572 = vmatpush2.msra.mxu0 0.0
    %3573 = vmatprep.subr.mxu0 0.0
    %3574 = vmatpush2.msra.mxu0 0.0
    %3575 = vmatprep.subr.mxu0 0.0
    %3576 = vmatpush2.msra.mxu0 0.0
    %3577 = vmatprep.subr.mxu0 0.0
    %3578 = vmatpush2.msra.mxu0 0.0
    %3579 = vmatprep.mubr.f32.mxu0 0.0
    %3580 = vmatmul.mubr.f32.gmra.mxu0 %v3113
    %v3581 = vpop.f32.mrf.mxu0
    %v3582 = vadd.f32 0.0, %v3581
    %v3583 = vpop.f32.mrf.mxu0
    %v3584 = vadd.f32 0.0, %v3583
    %3585 = vmatprep.mubr.f32.mxu0 0.0
    %3586 = vmatmul.mubr.f32.gmra.mxu0 %v3116
    %v3587 = vpop.f32.mrf.mxu0
    %v3588 = vadd.f32 0.0, %v3587
    %v3589 = vpop.f32.mrf.mxu0
    %v3590 = vadd.f32 0.0, %v3589
    %3591 = vmatprep.mubr.f32.mxu0 0.0
    %3592 = vmatmul.mubr.f32.gmra.mxu0 %v3119
    %v3593 = vpop.f32.mrf.mxu0
    %v3594 = vadd.f32 0.0, %v3593
    %v3595 = vpop.f32.mrf.mxu0
    %v3596 = vadd.f32 0.0, %v3595
    %3597 = vmatprep.mubr.f32.mxu0 0.0
    %3598 = vmatmul.mubr.f32.gmra.mxu0 %v3122
    %v3599 = vpop.f32.mrf.mxu0
    %v3600 = vadd.f32 0.0, %v3599
    %v3601 = vpop.f32.mrf.mxu0
    %v3602 = vadd.f32 0.0, %v3601
    %3603 = vmatprep.mubr.f32.mxu0 0.0
    %3604 = vmatmul.mubr.f32.gmra.mxu0 %v3125
    %v3605 = vpop.f32.mrf.mxu0
    %v3606 = vadd.f32 0.0, %v3605
    %v3607 = vpop.f32.mrf.mxu0
    %v3608 = vadd.f32 0.0, %v3607
    %3609 = vmatprep.mubr.f32.mxu0 0.0
    %3610 = vmatmul.mubr.f32.gmra.mxu0 %v3128
    %v3611 = vpop.f32.mrf.mxu0
    %v3612 = vadd.f32 0.0, %v3611
    %v3613 = vpop.f32.mrf.mxu0
    %v3614 = vadd.f32 0.0, %v3613
    %3615 = vmatprep.mubr.f32.mxu0 0.0
    %3616 = vmatmul.mubr.f32.gmra.mxu0 %v3131
    %v3617 = vpop.f32.mrf.mxu0
    %v3618 = vadd.f32 0.0, %v3617
    %v3619 = vpop.f32.mrf.mxu0
    %v3620 = vadd.f32 0.0, %v3619
    %3621 = vmatprep.mubr.f32.mxu0 0.0
    %3622 = vmatmul.mubr.f32.gmra.mxu0 %v3134
    %v3623 = vpop.f32.mrf.mxu0
    %v3624 = vadd.f32 0.0, %v3623
    %v3625 = vpop.f32.mrf.mxu0
    %v3626 = vadd.f32 0.0, %v3625
    %3627 = vmatprep.mubr.f32.mxu0 0.0
    %3628 = vmatmul.mubr.f32.gmra.mxu0 %v3326
    %v3629 = vpop.f32.mrf.mxu0
    %v3630 = vadd.f32 0.0, %v3629
    %v3631 = vpop.f32.mrf.mxu0
    %v3632 = vadd.f32 0.0, %v3631
    %3633 = vmatprep.mubr.f32.mxu0 0.0
    %3634 = vmatmul.mubr.f32.gmra.mxu0 %v3329
    %v3635 = vpop.f32.mrf.mxu0
    %v3636 = vadd.f32 0.0, %v3635
    %v3637 = vpop.f32.mrf.mxu0
    %v3638 = vadd.f32 0.0, %v3637
    %3639 = vmatprep.mubr.f32.mxu0 0.0
    %3640 = vmatmul.mubr.f32.gmra.mxu0 %v3510
    %v3641 = vpop.f32.mrf.mxu0
    %v3642 = vadd.f32 0.0, %v3641
    %v3643 = vpop.f32.mrf.mxu0
    %v3644 = vadd.f32 0.0, %v3643
    %3645 = vmatprep.mubr.f32.mxu0 0.0
    %3646 = vmatmul.mubr.f32.gmra.mxu0 %v3513
    %v3647 = vpop.f32.mrf.mxu0
    %v3648 = vadd.f32 0.0, %v3647
    %v3649 = vpop.f32.mrf.mxu0
    %v3650 = vadd.f32 0.0, %v3649
    %3651 = vdwg.mxu0
    %v3652 = vadd.f32 %v3468, %v3582
    %v3653 = vadd.f32 %v3469, %v3584
    %v3654 = vadd.f32 %v3470, %v3588
    %v3655 = vadd.f32 %v3471, %v3590
    %v3656 = vadd.f32 %v3472, %v3594
    %v3657 = vadd.f32 %v3473, %v3596
    %v3658 = vadd.f32 %v3474, %v3600
    %v3659 = vadd.f32 %v3475, %v3602
    %v3660 = vadd.f32 %v3476, %v3606
    %v3661 = vadd.f32 %v3477, %v3608
    %v3662 = vadd.f32 %v3478, %v3612
    %v3663 = vadd.f32 %v3479, %v3614
    %v3664 = vadd.f32 %v3480, %v3618
    %v3665 = vadd.f32 %v3481, %v3620
    %v3666 = vadd.f32 %v3482, %v3624
    %v3667 = vadd.f32 %v3483, %v3626
    %v3668 = vadd.f32 %v3484, %v3630
    %v3669 = vadd.f32 %v3485, %v3632
    %v3670 = vadd.f32 %v3486, %v3636
    %v3671 = vadd.f32 %v3487, %v3638
    %v3672 = vadd.f32 %v3488, %v3642
    %v3673 = vadd.f32 %v3489, %v3644
    %v3674 = vadd.f32 %v3490, %v3648
    %v3675 = vadd.f32 %v3491, %v3650
    %v3676 = vsub.f32 0.0, %v3652
    %v3677 = vsub.f32 0.0, %v3654
    %v3678 = vsub.f32 0.0, %v3656
    %v3679 = vsub.f32 0.0, %v3658
    %v3680 = vsub.f32 0.0, %v3660
    %v3681 = vsub.f32 0.0, %v3662
    %v3682 = vsub.f32 0.0, %v3664
    %v3683 = vsub.f32 0.0, %v3666
    %v3684 = vsub.f32 0.0, %v3668
    %v3685 = vsub.f32 0.0, %v3670
    %v3686 = vsub.f32 0.0, %v3672
    %v3687 = vsub.f32 0.0, %v3674
    %v3688 = vmul.f32 %v3676, 1.442695
    %v3689 = vpow.pop %v3688
    %v3690 = vmul.f32 %v3677, 1.442695
    %v3691 = vpow.pop %v3690
    %v3692 = vmul.f32 %v3678, 1.442695
    %v3693 = vpow.pop %v3692
    %v3694 = vmul.f32 %v3679, 1.442695
    %v3695 = vpow.pop %v3694
    %v3696 = vmul.f32 %v3680, 1.442695
    %v3697 = vpow.pop %v3696
    %v3698 = vmul.f32 %v3681, 1.442695
    %v3699 = vpow.pop %v3698
    %v3700 = vmul.f32 %v3682, 1.442695
    %v3701 = vpow.pop %v3700
    %v3702 = vmul.f32 %v3683, 1.442695
    %v3703 = vpow.pop %v3702
    %v3704 = vmul.f32 %v3684, 1.442695
    %v3705 = vpow.pop %v3704
    %v3706 = vmul.f32 %v3685, 1.442695
    %v3707 = vpow.pop %v3706
    %v3708 = vmul.f32 %v3686, 1.442695
    %v3709 = vpow.pop %v3708
    %v3710 = vmul.f32 %v3687, 1.442695
    %v3711 = vpow.pop %v3710
    %v3712 = vadd.f32 %v3689, 1.0
    %v3713 = vadd.f32 %v3691, 1.0
    %v3714 = vadd.f32 %v3693, 1.0
    %v3715 = vadd.f32 %v3695, 1.0
    %v3716 = vadd.f32 %v3697, 1.0
    %v3717 = vadd.f32 %v3699, 1.0
    %v3718 = vadd.f32 %v3701, 1.0
    %v3719 = vadd.f32 %v3703, 1.0
    %v3720 = vadd.f32 %v3705, 1.0
    %v3721 = vadd.f32 %v3707, 1.0
    %v3722 = vadd.f32 %v3709, 1.0
    %v3723 = vadd.f32 %v3711, 1.0
    %v3724 = vrcp.pop %v3712
    %v3725 = vrcp.pop %v3713
    %v3726 = vrcp.pop %v3714
    %v3727 = vrcp.pop %v3715
    %v3728 = vrcp.pop %v3716
    %v3729 = vrcp.pop %v3717
    %v3730 = vrcp.pop %v3718
    %v3731 = vrcp.pop %v3719
    %v3732 = vrcp.pop %v3720
    %v3733 = vrcp.pop %v3721
    %v3734 = vrcp.pop %v3722
    %v3735 = vrcp.pop %v3723
    %3748 = vrot.lane.b32.xlu0 %v3724, 64
    %v3749 = vpop.permute.xlu0 %3748
    %3750 = vrot.lane.b32.xlu0 %v3725, 64
    %v3751 = vpop.permute.xlu0 %3750
    %3752 = vrot.lane.b32.xlu0 %v3726, 64
    %v3753 = vpop.permute.xlu0 %3752
    %3754 = vrot.lane.b32.xlu0 %v3727, 64
    %v3755 = vpop.permute.xlu0 %3754
    %3756 = vrot.lane.b32.xlu0 %v3728, 64
    %v3757 = vpop.permute.xlu0 %3756
    %3758 = vrot.lane.b32.xlu0 %v3729, 64
    %v3759 = vpop.permute.xlu0 %3758
    %3760 = vrot.lane.b32.xlu0 %v3730, 64
    %v3761 = vpop.permute.xlu0 %3760
    %3762 = vrot.lane.b32.xlu0 %v3731, 64
    %v3763 = vpop.permute.xlu0 %3762
    %3764 = vrot.lane.b32.xlu0 %v3732, 64
    %v3765 = vpop.permute.xlu0 %3764
    %3766 = vrot.lane.b32.xlu0 %v3733, 64
    %v3767 = vpop.permute.xlu0 %3766
    %3768 = vrot.lane.b32.xlu0 %v3734, 64
    %v3769 = vpop.permute.xlu0 %3768
    %3770 = vrot.lane.b32.xlu0 %v3735, 64
    %v3771 = vpop.permute.xlu0 %3770
    %v3784 = vadd.f32 %v3652, %v3749
    %v3785 = vadd.f32 %v3654, %v3751
    %v3786 = vadd.f32 %v3656, %v3753
    %v3787 = vadd.f32 %v3658, %v3755
    %v3788 = vadd.f32 %v3660, %v3757
    %v3789 = vadd.f32 %v3662, %v3759
    %v3790 = vadd.f32 %v3664, %v3761
    %v3791 = vadd.f32 %v3666, %v3763
    %v3792 = vadd.f32 %v3668, %v3765
    %v3793 = vadd.f32 %v3670, %v3767
    %v3794 = vadd.f32 %v3672, %v3769
    %v3795 = vadd.f32 %v3674, %v3771
    %v3796 = vadd.f32 %v3784, %v3653
    %v3797 = vadd.f32 %v3785, %v3655
    %v3798 = vadd.f32 %v3786, %v3657
    %v3799 = vadd.f32 %v3787, %v3659
    %v3800 = vadd.f32 %v3788, %v3661
    %v3801 = vadd.f32 %v3789, %v3663
    %v3802 = vadd.f32 %v3790, %v3665
    %v3803 = vadd.f32 %v3791, %v3667
    %v3804 = vadd.f32 %v3792, %v3669
    %v3805 = vadd.f32 %v3793, %v3671
    %v3806 = vadd.f32 %v3794, %v3673
    %v3807 = vadd.f32 %v3795, %v3675
    %v3808 = vmax.f32 %v3796, 0.0
    %v3809 = vmax.f32 %v3797, 0.0
    %v3810 = vmax.f32 %v3798, 0.0
    %v3811 = vmax.f32 %v3799, 0.0
    %v3812 = vmax.f32 %v3800, 0.0
    %v3813 = vmax.f32 %v3801, 0.0
    %v3814 = vmax.f32 %v3802, 0.0
    %v3815 = vmax.f32 %v3803, 0.0
    %v3816 = vmax.f32 %v3804, 0.0
    %v3817 = vmax.f32 %v3805, 0.0
    %v3818 = vmax.f32 %v3806, 0.0
    %v3819 = vmax.f32 %v3807, 0.0
    %v3820 = vld [vmem:[%s13] sm:$0xff]
    %v3821 = vld [vmem:[%s13 + $0x8] sm:$0xff]
    %v3822 = vld [vmem:[%s13 + $0x10] sm:$0xff]
    %v3823 = vld [vmem:[%s13 + $0x18] sm:$0xff]
    %v3824 = vld [vmem:[%s13 + $0x20] sm:$0xff]
    %v3825 = vld [vmem:[%s13 + $0x28] sm:$0xff]
    %v3826 = vld [vmem:[%s13 + $0x30] sm:$0xff]
    %v3827 = vld [vmem:[%s13 + $0x38] sm:$0xff]
    %v3829 = vsel %vm1140, %v3808, 0
    %v3832 = vsel %vm1140, %v3809, 0
    %v3835 = vsel %vm1140, %v3810, 0
    %v3838 = vsel %vm1140, %v3811, 0
    %v3841 = vsel %vm1140, %v3812, 0
    %v3844 = vsel %vm1140, %v3813, 0
    %v3847 = vsel %vm1140, %v3814, 0
    %v3850 = vsel %vm1140, %v3815, 0
    %v3853 = vsel %vm1140, %v3816, 0
    %v3856 = vsel %vm1140, %v3817, 0
    %v3859 = vsel %vm1140, %v3818, 0
    %v3862 = vsel %vm1140, %v3819, 0
    %3864 = vmatprep.subr.mxu0 0.0
    %3865 = vmatpush1.msra.mxu0 0.0
    %3866 = vmatprep.subr.mxu0 0.0
    %3867 = vmatpush1.msra.mxu0 0.0
    %3868 = vmatprep.subr.mxu0 0.0
    %3869 = vmatpush1.msra.mxu0 0.0
    %3870 = vmatprep.subr.mxu0 0.0
    %3871 = vmatpush1.msra.mxu0 0.0
    %3872 = vmatprep.subr.mxu0 0.0
    %3873 = vmatpush1.msra.mxu0 0.0
    %3874 = vmatprep.subr.mxu0 0.0
    %3875 = vmatpush1.msra.mxu0 0.0
    %3876 = vmatprep.subr.mxu0 0.0
    %3877 = vmatpush1.msra.mxu0 0.0
    %3878 = vmatprep.subr.mxu0 0.0
    %3879 = vmatpush1.msra.mxu0 0.0
    %3880 = vmatprep.subr.mxu0 0.0
    %3881 = vmatpush1.msra.mxu0 %v3827
    %3882 = vmatprep.subr.mxu0 0.0
    %3883 = vmatpush1.msra.mxu0 %v3826
    %3884 = vmatprep.subr.mxu0 0.0
    %3885 = vmatpush1.msra.mxu0 %v3825
    %3886 = vmatprep.subr.mxu0 0.0
    %3887 = vmatpush1.msra.mxu0 %v3824
    %3888 = vmatprep.subr.mxu0 0.0
    %3889 = vmatpush1.msra.mxu0 %v3823
    %3890 = vmatprep.subr.mxu0 0.0
    %3891 = vmatpush1.msra.mxu0 %v3822
    %3892 = vmatprep.subr.mxu0 0.0
    %3893 = vmatpush1.msra.mxu0 %v3821
    %3894 = vmatprep.subr.mxu0 0.0
    %3895 = vmatpush1.msra.mxu0 %v3820
    %3896 = vmatprep.subr.mxu0 0.0
    %3897 = vmatpush2.msra.mxu0 0.0
    %3898 = vmatprep.subr.mxu0 0.0
    %3899 = vmatpush2.msra.mxu0 0.0
    %3900 = vmatprep.subr.mxu0 0.0
    %3901 = vmatpush2.msra.mxu0 0.0
    %3902 = vmatprep.subr.mxu0 0.0
    %3903 = vmatpush2.msra.mxu0 0.0
    %3904 = vmatprep.subr.mxu0 0.0
    %3905 = vmatpush2.msra.mxu0 0.0
    %3906 = vmatprep.subr.mxu0 0.0
    %3907 = vmatpush2.msra.mxu0 0.0
    %3908 = vmatprep.subr.mxu0 0.0
    %3909 = vmatpush2.msra.mxu0 0.0
    %3910 = vmatprep.subr.mxu0 0.0
    %3911 = vmatpush2.msra.mxu0 0.0
    %3912 = vmatprep.subr.mxu0 0.0
    %3913 = vmatpush2.msra.mxu0 0.0
    %3914 = vmatprep.subr.mxu0 0.0
    %3915 = vmatpush2.msra.mxu0 0.0
    %3916 = vmatprep.subr.mxu0 0.0
    %3917 = vmatpush2.msra.mxu0 0.0
    %3918 = vmatprep.subr.mxu0 0.0
    %3919 = vmatpush2.msra.mxu0 0.0
    %3920 = vmatprep.subr.mxu0 0.0
    %3921 = vmatpush2.msra.mxu0 0.0
    %3922 = vmatprep.subr.mxu0 0.0
    %3923 = vmatpush2.msra.mxu0 0.0
    %3924 = vmatprep.subr.mxu0 0.0
    %3925 = vmatpush2.msra.mxu0 0.0
    %3926 = vmatprep.subr.mxu0 0.0
    %3927 = vmatpush2.msra.mxu0 0.0
    %3928 = vmatprep.mubr.f32.mxu0 0.0
    %3929 = vmatmul.mubr.f32.gmra.mxu0 %v3829
    %v3930 = vpop.f32.mrf.mxu0
    %v3931 = vadd.f32 0.0, %v3930
    %v3932 = vpop.f32.mrf.mxu0
    %3933 = vmatprep.mubr.f32.mxu0 0.0
    %3934 = vmatmul.mubr.f32.gmra.mxu0 %v3832
    %v3935 = vpop.f32.mrf.mxu0
    %v3936 = vadd.f32 0.0, %v3935
    %v3937 = vpop.f32.mrf.mxu0
    %3938 = vmatprep.mubr.f32.mxu0 0.0
    %3939 = vmatmul.mubr.f32.gmra.mxu0 %v3835
    %v3940 = vpop.f32.mrf.mxu0
    %v3941 = vadd.f32 0.0, %v3940
    %v3942 = vpop.f32.mrf.mxu0
    %3943 = vmatprep.mubr.f32.mxu0 0.0
    %3944 = vmatmul.mubr.f32.gmra.mxu0 %v3838
    %v3945 = vpop.f32.mrf.mxu0
    %v3946 = vadd.f32 0.0, %v3945
    %v3947 = vpop.f32.mrf.mxu0
    %3948 = vmatprep.mubr.f32.mxu0 0.0
    %3949 = vmatmul.mubr.f32.gmra.mxu0 %v3841
    %v3950 = vpop.f32.mrf.mxu0
    %v3951 = vadd.f32 0.0, %v3950
    %v3952 = vpop.f32.mrf.mxu0
    %3953 = vmatprep.mubr.f32.mxu0 0.0
    %3954 = vmatmul.mubr.f32.gmra.mxu0 %v3844
    %v3955 = vpop.f32.mrf.mxu0
    %v3956 = vadd.f32 0.0, %v3955
    %v3957 = vpop.f32.mrf.mxu0
    %3958 = vmatprep.mubr.f32.mxu0 0.0
    %3959 = vmatmul.mubr.f32.gmra.mxu0 %v3847
    %v3960 = vpop.f32.mrf.mxu0
    %v3961 = vadd.f32 0.0, %v3960
    %v3962 = vpop.f32.mrf.mxu0
    %3963 = vmatprep.mubr.f32.mxu0 0.0
    %3964 = vmatmul.mubr.f32.gmra.mxu0 %v3850
    %v3965 = vpop.f32.mrf.mxu0
    %v3966 = vadd.f32 0.0, %v3965
    %v3967 = vpop.f32.mrf.mxu0
    %3968 = vmatprep.mubr.f32.mxu0 0.0
    %3969 = vmatmul.mubr.f32.gmra.mxu0 %v3853
    %v3970 = vpop.f32.mrf.mxu0
    %v3971 = vadd.f32 0.0, %v3970
    %v3972 = vpop.f32.mrf.mxu0
    %3973 = vmatprep.mubr.f32.mxu0 0.0
    %3974 = vmatmul.mubr.f32.gmra.mxu0 %v3856
    %v3975 = vpop.f32.mrf.mxu0
    %v3976 = vadd.f32 0.0, %v3975
    %v3977 = vpop.f32.mrf.mxu0
    %3978 = vmatprep.mubr.f32.mxu0 0.0
    %3979 = vmatmul.mubr.f32.gmra.mxu0 %v3859
    %v3980 = vpop.f32.mrf.mxu0
    %v3981 = vadd.f32 0.0, %v3980
    %v3982 = vpop.f32.mrf.mxu0
    %3983 = vmatprep.mubr.f32.mxu0 0.0
    %3984 = vmatmul.mubr.f32.gmra.mxu0 %v3862
    %v3985 = vpop.f32.mrf.mxu0
    %v3986 = vadd.f32 0.0, %v3985
    %v3987 = vpop.f32.mrf.mxu0
    %3988 = vdwg.mxu0
    %v3989 = vld [vmem:[%s14] sm:$0xff]
    %v3990 = vld [vmem:[%s14 + $0x8] sm:$0xff]
    %v3991 = vld [vmem:[%s14 + $0x10] sm:$0xff]
    %v3992 = vld [vmem:[%s14 + $0x18] sm:$0xff]
    %v3993 = vld [vmem:[%s14 + $0x20] sm:$0xff]
    %v3994 = vld [vmem:[%s14 + $0x28] sm:$0xff]
    %v3995 = vld [vmem:[%s14 + $0x30] sm:$0xff]
    %v3996 = vld [vmem:[%s14 + $0x38] sm:$0xff]
    %v3997 = vld [vmem:[%s14 + $0x40] sm:$0xff]
    %v3998 = vld [vmem:[%s14 + $0x48] sm:$0xff]
    %v3999 = vld [vmem:[%s14 + $0x50] sm:$0xff]
    %v4000 = vld [vmem:[%s14 + $0x58] sm:$0xff]
    %vm4001 = vcmask 785408
    %v4003 = vsel %vm4001, %v3989, 0
    %v4006 = vsel %vm4001, %v3990, 0
    %v4009 = vsel %vm4001, %v3991, 0
    %v4012 = vsel %vm4001, %v3992, 0
    %v4015 = vsel %vm4001, %v3993, 0
    %v4018 = vsel %vm4001, %v3994, 0
    %v4021 = vsel %vm4001, %v3995, 0
    %v4024 = vsel %vm4001, %v3996, 0
    %v4027 = vsel %vm4001, %v3997, 0
    %v4030 = vsel %vm4001, %v3998, 0
    %v4033 = vsel %vm4001, %v3999, 0
    %v4036 = vsel %vm4001, %v4000, 0
    %4038 = vmatprep.subr.mxu0 0.0
    %4039 = vmatpush1.msra.mxu0 0.0
    %4040 = vmatprep.subr.mxu0 0.0
    %4041 = vmatpush1.msra.mxu0 0.0
    %4042 = vmatprep.subr.mxu0 0.0
    %4043 = vmatpush1.msra.mxu0 0.0
    %4044 = vmatprep.subr.mxu0 0.0
    %4045 = vmatpush1.msra.mxu0 0.0
    %4046 = vmatprep.subr.mxu0 0.0
    %4047 = vmatpush1.msra.mxu0 %v3986
    %4048 = vmatprep.subr.mxu0 0.0
    %4049 = vmatpush1.msra.mxu0 %v3981
    %4050 = vmatprep.subr.mxu0 0.0
    %4051 = vmatpush1.msra.mxu0 %v3976
    %4052 = vmatprep.subr.mxu0 0.0
    %4053 = vmatpush1.msra.mxu0 %v3971
    %4054 = vmatprep.subr.mxu0 0.0
    %4055 = vmatpush1.msra.mxu0 %v3966
    %4056 = vmatprep.subr.mxu0 0.0
    %4057 = vmatpush1.msra.mxu0 %v3961
    %4058 = vmatprep.subr.mxu0 0.0
    %4059 = vmatpush1.msra.mxu0 %v3956
    %4060 = vmatprep.subr.mxu0 0.0
    %4061 = vmatpush1.msra.mxu0 %v3951
    %4062 = vmatprep.subr.mxu0 0.0
    %4063 = vmatpush1.msra.mxu0 %v3946
    %4064 = vmatprep.subr.mxu0 0.0
    %4065 = vmatpush1.msra.mxu0 %v3941
    %4066 = vmatprep.subr.mxu0 0.0
    %4067 = vmatpush1.msra.mxu0 %v3936
    %4068 = vmatprep.subr.mxu0 0.0
    %4069 = vmatpush1.msra.mxu0 %v3931
    %4070 = vmatprep.subr.mxu0 0.0
    %4071 = vmatpush2.msra.mxu0 0.0
    %4072 = vmatprep.subr.mxu0 0.0
    %4073 = vmatpush2.msra.mxu0 0.0
    %4074 = vmatprep.subr.mxu0 0.0
    %4075 = vmatpush2.msra.mxu0 0.0
    %4076 = vmatprep.subr.mxu0 0.0
    %4077 = vmatpush2.msra.mxu0 0.0
    %4078 = vmatprep.subr.mxu0 0.0
    %4079 = vmatpush2.msra.mxu0 0.0
    %4080 = vmatprep.subr.mxu0 0.0
    %4081 = vmatpush2.msra.mxu0 0.0
    %4082 = vmatprep.subr.mxu0 0.0
    %4083 = vmatpush2.msra.mxu0 0.0
    %4084 = vmatprep.subr.mxu0 0.0
    %4085 = vmatpush2.msra.mxu0 0.0
    %4086 = vmatprep.subr.mxu0 0.0
    %4087 = vmatpush2.msra.mxu0 0.0
    %4088 = vmatprep.subr.mxu0 0.0
    %4089 = vmatpush2.msra.mxu0 0.0
    %4090 = vmatprep.subr.mxu0 0.0
    %4091 = vmatpush2.msra.mxu0 0.0
    %4092 = vmatprep.subr.mxu0 0.0
    %4093 = vmatpush2.msra.mxu0 0.0
    %4094 = vmatprep.subr.mxu0 0.0
    %4095 = vmatpush2.msra.mxu0 0.0
    %4096 = vmatprep.subr.mxu0 0.0
    %4097 = vmatpush2.msra.mxu0 0.0
    %4098 = vmatprep.subr.mxu0 0.0
    %4099 = vmatpush2.msra.mxu0 0.0
    %4100 = vmatprep.subr.mxu0 0.0
    %4101 = vmatpush2.msra.mxu0 0.0
    %4102 = vmatprep.mubr.f32.mxu0 0.0
    %4103 = vmatmul.mubr.f32.gmra.mxu0 %v4003
    %v4104 = vpop.f32.mrf.mxu0
    %v4105 = vadd.f32 0.0, %v4104
    %v4106 = vpop.f32.mrf.mxu0
    %4107 = vmatprep.mubr.f32.mxu0 0.0
    %4108 = vmatmul.mubr.f32.gmra.mxu0 %v4006
    %v4109 = vpop.f32.mrf.mxu0
    %v4110 = vadd.f32 0.0, %v4109
    %v4111 = vpop.f32.mrf.mxu0
    %4112 = vmatprep.mubr.f32.mxu0 0.0
    %4113 = vmatmul.mubr.f32.gmra.mxu0 %v4009
    %v4114 = vpop.f32.mrf.mxu0
    %v4115 = vadd.f32 0.0, %v4114
    %v4116 = vpop.f32.mrf.mxu0
    %4117 = vmatprep.mubr.f32.mxu0 0.0
    %4118 = vmatmul.mubr.f32.gmra.mxu0 %v4012
    %v4119 = vpop.f32.mrf.mxu0
    %v4120 = vadd.f32 0.0, %v4119
    %v4121 = vpop.f32.mrf.mxu0
    %4122 = vmatprep.mubr.f32.mxu0 0.0
    %4123 = vmatmul.mubr.f32.gmra.mxu0 %v4015
    %v4124 = vpop.f32.mrf.mxu0
    %v4125 = vadd.f32 0.0, %v4124
    %v4126 = vpop.f32.mrf.mxu0
    %4127 = vmatprep.mubr.f32.mxu0 0.0
    %4128 = vmatmul.mubr.f32.gmra.mxu0 %v4018
    %v4129 = vpop.f32.mrf.mxu0
    %v4130 = vadd.f32 0.0, %v4129
    %v4131 = vpop.f32.mrf.mxu0
    %4132 = vmatprep.mubr.f32.mxu0 0.0
    %4133 = vmatmul.mubr.f32.gmra.mxu0 %v4021
    %v4134 = vpop.f32.mrf.mxu0
    %v4135 = vadd.f32 0.0, %v4134
    %v4136 = vpop.f32.mrf.mxu0
    %4137 = vmatprep.mubr.f32.mxu0 0.0
    %4138 = vmatmul.mubr.f32.gmra.mxu0 %v4024
    %v4139 = vpop.f32.mrf.mxu0
    %v4140 = vadd.f32 0.0, %v4139
    %v4141 = vpop.f32.mrf.mxu0
    %4142 = vmatprep.mubr.f32.mxu0 0.0
    %4143 = vmatmul.mubr.f32.gmra.mxu0 %v4027
    %v4144 = vpop.f32.mrf.mxu0
    %v4145 = vadd.f32 0.0, %v4144
    %v4146 = vpop.f32.mrf.mxu0
    %4147 = vmatprep.mubr.f32.mxu0 0.0
    %4148 = vmatmul.mubr.f32.gmra.mxu0 %v4030
    %v4149 = vpop.f32.mrf.mxu0
    %v4150 = vadd.f32 0.0, %v4149
    %v4151 = vpop.f32.mrf.mxu0
    %4152 = vmatprep.mubr.f32.mxu0 0.0
    %4153 = vmatmul.mubr.f32.gmra.mxu0 %v4033
    %v4154 = vpop.f32.mrf.mxu0
    %v4155 = vadd.f32 0.0, %v4154
    %v4156 = vpop.f32.mrf.mxu0
    %4157 = vmatprep.mubr.f32.mxu0 0.0
    %4158 = vmatmul.mubr.f32.gmra.mxu0 %v4036
    %v4159 = vpop.f32.mrf.mxu0
    %v4160 = vadd.f32 0.0, %v4159
    %v4161 = vpop.f32.mrf.mxu0
    %4162 = vdwg.mxu0
    %v4163 = vmax.f32 %v4105, 0.0
    %v4164 = vmax.f32 %v4110, 0.0
    %v4165 = vmax.f32 %v4115, 0.0
    %v4166 = vmax.f32 %v4120, 0.0
    %v4167 = vmax.f32 %v4125, 0.0
    %v4168 = vmax.f32 %v4130, 0.0
    %v4169 = vmax.f32 %v4135, 0.0
    %v4170 = vmax.f32 %v4140, 0.0
    %v4171 = vmax.f32 %v4145, 0.0
    %v4172 = vmax.f32 %v4150, 0.0
    %v4173 = vmax.f32 %v4155, 0.0
    %v4174 = vmax.f32 %v4160, 0.0
    %v4175 = vld [vmem:[%s16] sm:$0x3]
    %v4176 = vld [vmem:[%s15] sm:$0xff]
    %v4177 = vld [vmem:[%s15 + $0x8] sm:$0xff]
    %v4178 = vld [vmem:[%s15 + $0x10] sm:$0xff]
    %v4179 = vld [vmem:[%s15 + $0x18] sm:$0xff]
    %v4181 = vsel %vm1657, %v4163, 0
    %v4184 = vsel %vm1657, %v4164, 0
    %v4187 = vsel %vm1657, %v4165, 0
    %v4190 = vsel %vm1657, %v4166, 0
    %v4193 = vsel %vm1657, %v4167, 0
    %v4196 = vsel %vm1657, %v4168, 0
    %v4199 = vsel %vm1657, %v4169, 0
    %v4202 = vsel %vm1657, %v4170, 0
    %4204 = vmatprep.subr.mxu0 0.0
    %4205 = vmatpush1.msra.mxu0 0.0
    %4206 = vmatprep.subr.mxu0 0.0
    %4207 = vmatpush1.msra.mxu0 0.0
    %4208 = vmatprep.subr.mxu0 0.0
    %4209 = vmatpush1.msra.mxu0 0.0
    %4210 = vmatprep.subr.mxu0 0.0
    %4211 = vmatpush1.msra.mxu0 0.0
    %4212 = vmatprep.subr.mxu0 0.0
    %4213 = vmatpush1.msra.mxu0 0.0
    %4214 = vmatprep.subr.mxu0 0.0
    %4215 = vmatpush1.msra.mxu0 0.0
    %4216 = vmatprep.subr.mxu0 0.0
    %4217 = vmatpush1.msra.mxu0 0.0
    %4218 = vmatprep.subr.mxu0 0.0
    %4219 = vmatpush1.msra.mxu0 0.0
    %4220 = vmatprep.subr.mxu0 0.0
    %4221 = vmatpush1.msra.mxu0 0.0
    %4222 = vmatprep.subr.mxu0 0.0
    %4223 = vmatpush1.msra.mxu0 0.0
    %4224 = vmatprep.subr.mxu0 0.0
    %4225 = vmatpush1.msra.mxu0 0.0
    %4226 = vmatprep.subr.mxu0 0.0
    %4227 = vmatpush1.msra.mxu0 0.0
    %4228 = vmatprep.subr.mxu0 0.0
    %4229 = vmatpush1.msra.mxu0 0.0
    %4230 = vmatprep.subr.mxu0 0.0
    %4231 = vmatpush1.msra.mxu0 0.0
    %4232 = vmatprep.subr.mxu0 %v4179
    %4233 = vmatpush1.msra.mxu0 %v4178
    %4234 = vmatprep.subr.mxu0 %v4177
    %4235 = vmatpush1.msra.mxu0 %v4176
    %4236 = vmatprep.subr.mxu0 0.0
    %4237 = vmatpush2.msra.mxu0 0.0
    %4238 = vmatprep.subr.mxu0 0.0
    %4239 = vmatpush2.msra.mxu0 0.0
    %4240 = vmatprep.subr.mxu0 0.0
    %4241 = vmatpush2.msra.mxu0 0.0
    %4242 = vmatprep.subr.mxu0 0.0
    %4243 = vmatpush2.msra.mxu0 0.0
    %4244 = vmatprep.subr.mxu0 0.0
    %4245 = vmatpush2.msra.mxu0 0.0
    %4246 = vmatprep.subr.mxu0 0.0
    %4247 = vmatpush2.msra.mxu0 0.0
    %4248 = vmatprep.subr.mxu0 0.0
    %4249 = vmatpush2.msra.mxu0 0.0
    %4250 = vmatprep.subr.mxu0 0.0
    %4251 = vmatpush2.msra.mxu0 0.0
    %4252 = vmatprep.subr.mxu0 0.0
    %4253 = vmatpush2.msra.mxu0 0.0
    %4254 = vmatprep.subr.mxu0 0.0
    %4255 = vmatpush2.msra.mxu0 0.0
    %4256 = vmatprep.subr.mxu0 0.0
    %4257 = vmatpush2.msra.mxu0 0.0
    %4258 = vmatprep.subr.mxu0 0.0
    %4259 = vmatpush2.msra.mxu0 0.0
    %4260 = vmatprep.subr.mxu0 0.0
    %4261 = vmatpush2.msra.mxu0 0.0
    %4262 = vmatprep.subr.mxu0 0.0
    %4263 = vmatpush2.msra.mxu0 0.0
    %4264 = vmatprep.subr.mxu0 0.0
    %4265 = vmatpush2.msra.mxu0 0.0
    %4266 = vmatprep.subr.mxu0 0.0
    %4267 = vmatpush2.msra.mxu0 0.0
    %4268 = vmatprep.mubr.f32.mxu0 0.0
    %4269 = vmatmul.mubr.f32.gmra.mxu0 %v4181
    %v4270 = vpop.f32.mrf.mxu0
    %v4271 = vadd.f32 0.0, %v4270
    %v4272 = vpop.f32.mrf.mxu0
    %v4273 = vadd.f32 0.0, %v4272
    %4274 = vmatprep.mubr.f32.mxu0 0.0
    %4275 = vmatmul.mubr.f32.gmra.mxu0 %v4184
    %v4276 = vpop.f32.mrf.mxu0
    %v4277 = vadd.f32 0.0, %v4276
    %v4278 = vpop.f32.mrf.mxu0
    %v4279 = vadd.f32 0.0, %v4278
    %4280 = vmatprep.mubr.f32.mxu0 0.0
    %4281 = vmatmul.mubr.f32.gmra.mxu0 %v4187
    %v4282 = vpop.f32.mrf.mxu0
    %v4283 = vadd.f32 0.0, %v4282
    %v4284 = vpop.f32.mrf.mxu0
    %v4285 = vadd.f32 0.0, %v4284
    %4286 = vmatprep.mubr.f32.mxu0 0.0
    %4287 = vmatmul.mubr.f32.gmra.mxu0 %v4190
    %v4288 = vpop.f32.mrf.mxu0
    %v4289 = vadd.f32 0.0, %v4288
    %v4290 = vpop.f32.mrf.mxu0
    %v4291 = vadd.f32 0.0, %v4290
    %4292 = vmatprep.mubr.f32.mxu0 0.0
    %4293 = vmatmul.mubr.f32.gmra.mxu0 %v4193
    %v4294 = vpop.f32.mrf.mxu0
    %v4295 = vadd.f32 0.0, %v4294
    %v4296 = vpop.f32.mrf.mxu0
    %v4297 = vadd.f32 0.0, %v4296
    %4298 = vmatprep.mubr.f32.mxu0 0.0
    %4299 = vmatmul.mubr.f32.gmra.mxu0 %v4196
    %v4300 = vpop.f32.mrf.mxu0
    %v4301 = vadd.f32 0.0, %v4300
    %v4302 = vpop.f32.mrf.mxu0
    %v4303 = vadd.f32 0.0, %v4302
    %4304 = vmatprep.mubr.f32.mxu0 0.0
    %4305 = vmatmul.mubr.f32.gmra.mxu0 %v4199
    %v4306 = vpop.f32.mrf.mxu0
    %v4307 = vadd.f32 0.0, %v4306
    %v4308 = vpop.f32.mrf.mxu0
    %v4309 = vadd.f32 0.0, %v4308
    %4310 = vmatprep.mubr.f32.mxu0 0.0
    %4311 = vmatmul.mubr.f32.gmra.mxu0 %v4202
    %v4312 = vpop.f32.mrf.mxu0
    %v4313 = vadd.f32 0.0, %v4312
    %v4314 = vpop.f32.mrf.mxu0
    %v4315 = vadd.f32 0.0, %v4314
    %4316 = vdwg.mxu0
    %v4318 = vlaneseq
    %v4319 = vshrl.u32 %v4318, 7
    %v4320 = vsub.s32 0, %v4319
    %v4321 = vrot.slane %v4175, %v4320
    %v4322 = vlaneseq
    %v4323 = vshrl.u32 %v4322, 7
    %v4324 = vsub.s32 1, %v4323
    %v4325 = vrot.slane %v4175, %v4324
    %v4328 = vadd.f32 %v4321, %v4271
    %v4329 = vadd.f32 %v4325, %v4273
    %v4330 = vadd.f32 %v4321, %v4277
    %v4331 = vadd.f32 %v4325, %v4279
    %v4332 = vadd.f32 %v4321, %v4283
    %v4333 = vadd.f32 %v4325, %v4285
    %v4334 = vadd.f32 %v4321, %v4289
    %v4335 = vadd.f32 %v4325, %v4291
    %v4336 = vadd.f32 %v4321, %v4295
    %v4337 = vadd.f32 %v4325, %v4297
    %v4338 = vadd.f32 %v4321, %v4301
    %v4339 = vadd.f32 %v4325, %v4303
    %v4340 = vadd.f32 %v4321, %v4307
    %v4341 = vadd.f32 %v4325, %v4309
    %v4342 = vadd.f32 %v4321, %v4313
    %v4343 = vadd.f32 %v4325, %v4315
    %s4344 = scalar_lea.vmem %s15, 32
    %v4345 = vld [vmem:[%s4344] sm:$0xff]
    %v4346 = vld [vmem:[%s4344 + $0x8] sm:$0xff]
    %v4347 = vld [vmem:[%s4344 + $0x10] sm:$0xff]
    %v4348 = vld [vmem:[%s4344 + $0x18] sm:$0xff]
    %v4350 = vsel %vm1657, %v4171, 0
    %v4353 = vsel %vm1657, %v4172, 0
    %4355 = vmatprep.subr.mxu0 0.0
    %4356 = vmatpush1.msra.mxu0 0.0
    %4357 = vmatprep.subr.mxu0 0.0
    %4358 = vmatpush1.msra.mxu0 0.0
    %4359 = vmatprep.subr.mxu0 0.0
    %4360 = vmatpush1.msra.mxu0 0.0
    %4361 = vmatprep.subr.mxu0 0.0
    %4362 = vmatpush1.msra.mxu0 0.0
    %4363 = vmatprep.subr.mxu0 0.0
    %4364 = vmatpush1.msra.mxu0 0.0
    %4365 = vmatprep.subr.mxu0 0.0
    %4366 = vmatpush1.msra.mxu0 0.0
    %4367 = vmatprep.subr.mxu0 0.0
    %4368 = vmatpush1.msra.mxu0 0.0
    %4369 = vmatprep.subr.mxu0 0.0
    %4370 = vmatpush1.msra.mxu0 0.0
    %4371 = vmatprep.subr.mxu0 0.0
    %4372 = vmatpush1.msra.mxu0 0.0
    %4373 = vmatprep.subr.mxu0 0.0
    %4374 = vmatpush1.msra.mxu0 0.0
    %4375 = vmatprep.subr.mxu0 0.0
    %4376 = vmatpush1.msra.mxu0 0.0
    %4377 = vmatprep.subr.mxu0 0.0
    %4378 = vmatpush1.msra.mxu0 0.0
    %4379 = vmatprep.subr.mxu0 0.0
    %4380 = vmatpush1.msra.mxu0 0.0
    %4381 = vmatprep.subr.mxu0 0.0
    %4382 = vmatpush1.msra.mxu0 0.0
    %4383 = vmatprep.subr.mxu0 %v4348
    %4384 = vmatpush1.msra.mxu0 %v4347
    %4385 = vmatprep.subr.mxu0 %v4346
    %4386 = vmatpush1.msra.mxu0 %v4345
    %4387 = vmatprep.subr.mxu0 0.0
    %4388 = vmatpush2.msra.mxu0 0.0
    %4389 = vmatprep.subr.mxu0 0.0
    %4390 = vmatpush2.msra.mxu0 0.0
    %4391 = vmatprep.subr.mxu0 0.0
    %4392 = vmatpush2.msra.mxu0 0.0
    %4393 = vmatprep.subr.mxu0 0.0
    %4394 = vmatpush2.msra.mxu0 0.0
    %4395 = vmatprep.subr.mxu0 0.0
    %4396 = vmatpush2.msra.mxu0 0.0
    %4397 = vmatprep.subr.mxu0 0.0
    %4398 = vmatpush2.msra.mxu0 0.0
    %4399 = vmatprep.subr.mxu0 0.0
    %4400 = vmatpush2.msra.mxu0 0.0
    %4401 = vmatprep.subr.mxu0 0.0
    %4402 = vmatpush2.msra.mxu0 0.0
    %4403 = vmatprep.subr.mxu0 0.0
    %4404 = vmatpush2.msra.mxu0 0.0
    %4405 = vmatprep.subr.mxu0 0.0
    %4406 = vmatpush2.msra.mxu0 0.0
    %4407 = vmatprep.subr.mxu0 0.0
    %4408 = vmatpush2.msra.mxu0 0.0
    %4409 = vmatprep.subr.mxu0 0.0
    %4410 = vmatpush2.msra.mxu0 0.0
    %4411 = vmatprep.subr.mxu0 0.0
    %4412 = vmatpush2.msra.mxu0 0.0
    %4413 = vmatprep.subr.mxu0 0.0
    %4414 = vmatpush2.msra.mxu0 0.0
    %4415 = vmatprep.subr.mxu0 0.0
    %4416 = vmatpush2.msra.mxu0 0.0
    %4417 = vmatprep.subr.mxu0 0.0
    %4418 = vmatpush2.msra.mxu0 0.0
    %4419 = vmatprep.mubr.f32.mxu0 0.0
    %4420 = vmatmul.mubr.f32.gmra.mxu0 %v4187
    %v4421 = vpop.f32.mrf.mxu0
    %v4422 = vadd.f32 0.0, %v4421
    %v4423 = vpop.f32.mrf.mxu0
    %v4424 = vadd.f32 0.0, %v4423
    %4425 = vmatprep.mubr.f32.mxu0 0.0
    %4426 = vmatmul.mubr.f32.gmra.mxu0 %v4190
    %v4427 = vpop.f32.mrf.mxu0
    %v4428 = vadd.f32 0.0, %v4427
    %v4429 = vpop.f32.mrf.mxu0
    %v4430 = vadd.f32 0.0, %v4429
    %4431 = vmatprep.mubr.f32.mxu0 0.0
    %4432 = vmatmul.mubr.f32.gmra.mxu0 %v4193
    %v4433 = vpop.f32.mrf.mxu0
    %v4434 = vadd.f32 0.0, %v4433
    %v4435 = vpop.f32.mrf.mxu0
    %v4436 = vadd.f32 0.0, %v4435
    %4437 = vmatprep.mubr.f32.mxu0 0.0
    %4438 = vmatmul.mubr.f32.gmra.mxu0 %v4196
    %v4439 = vpop.f32.mrf.mxu0
    %v4440 = vadd.f32 0.0, %v4439
    %v4441 = vpop.f32.mrf.mxu0
    %v4442 = vadd.f32 0.0, %v4441
    %4443 = vmatprep.mubr.f32.mxu0 0.0
    %4444 = vmatmul.mubr.f32.gmra.mxu0 %v4199
    %v4445 = vpop.f32.mrf.mxu0
    %v4446 = vadd.f32 0.0, %v4445
    %v4447 = vpop.f32.mrf.mxu0
    %v4448 = vadd.f32 0.0, %v4447
    %4449 = vmatprep.mubr.f32.mxu0 0.0
    %4450 = vmatmul.mubr.f32.gmra.mxu0 %v4202
    %v4451 = vpop.f32.mrf.mxu0
    %v4452 = vadd.f32 0.0, %v4451
    %v4453 = vpop.f32.mrf.mxu0
    %v4454 = vadd.f32 0.0, %v4453
    %4455 = vmatprep.mubr.f32.mxu0 0.0
    %4456 = vmatmul.mubr.f32.gmra.mxu0 %v4350
    %v4457 = vpop.f32.mrf.mxu0
    %v4458 = vadd.f32 0.0, %v4457
    %v4459 = vpop.f32.mrf.mxu0
    %v4460 = vadd.f32 0.0, %v4459
    %4461 = vmatprep.mubr.f32.mxu0 0.0
    %4462 = vmatmul.mubr.f32.gmra.mxu0 %v4353
    %v4463 = vpop.f32.mrf.mxu0
    %v4464 = vadd.f32 0.0, %v4463
    %v4465 = vpop.f32.mrf.mxu0
    %v4466 = vadd.f32 0.0, %v4465
    %4467 = vdwg.mxu0
    %v4468 = vadd.f32 %v4328, %v4422
    %v4469 = vadd.f32 %v4329, %v4424
    %v4470 = vadd.f32 %v4330, %v4428
    %v4471 = vadd.f32 %v4331, %v4430
    %v4472 = vadd.f32 %v4332, %v4434
    %v4473 = vadd.f32 %v4333, %v4436
    %v4474 = vadd.f32 %v4334, %v4440
    %v4475 = vadd.f32 %v4335, %v4442
    %v4476 = vadd.f32 %v4336, %v4446
    %v4477 = vadd.f32 %v4337, %v4448
    %v4478 = vadd.f32 %v4338, %v4452
    %v4479 = vadd.f32 %v4339, %v4454
    %v4480 = vadd.f32 %v4340, %v4458
    %v4481 = vadd.f32 %v4341, %v4460
    %v4482 = vadd.f32 %v4342, %v4464
    %v4483 = vadd.f32 %v4343, %v4466
    %s4484 = scalar_lea.vmem %s15, 64
    %v4485 = vld [vmem:[%s4484] sm:$0xff]
    %v4486 = vld [vmem:[%s4484 + $0x8] sm:$0xff]
    %v4487 = vld [vmem:[%s4484 + $0x10] sm:$0xff]
    %v4488 = vld [vmem:[%s4484 + $0x18] sm:$0xff]
    %v4490 = vsel %vm1657, %v4173, 0
    %v4493 = vsel %vm1657, %v4174, 0
    %4495 = vmatprep.subr.mxu0 0.0
    %4496 = vmatpush1.msra.mxu0 0.0
    %4497 = vmatprep.subr.mxu0 0.0
    %4498 = vmatpush1.msra.mxu0 0.0
    %4499 = vmatprep.subr.mxu0 0.0
    %4500 = vmatpush1.msra.mxu0 0.0
    %4501 = vmatprep.subr.mxu0 0.0
    %4502 = vmatpush1.msra.mxu0 0.0
    %4503 = vmatprep.subr.mxu0 0.0
    %4504 = vmatpush1.msra.mxu0 0.0
    %4505 = vmatprep.subr.mxu0 0.0
    %4506 = vmatpush1.msra.mxu0 0.0
    %4507 = vmatprep.subr.mxu0 0.0
    %4508 = vmatpush1.msra.mxu0 0.0
    %4509 = vmatprep.subr.mxu0 0.0
    %4510 = vmatpush1.msra.mxu0 0.0
    %4511 = vmatprep.subr.mxu0 0.0
    %4512 = vmatpush1.msra.mxu0 0.0
    %4513 = vmatprep.subr.mxu0 0.0
    %4514 = vmatpush1.msra.mxu0 0.0
    %4515 = vmatprep.subr.mxu0 0.0
    %4516 = vmatpush1.msra.mxu0 0.0
    %4517 = vmatprep.subr.mxu0 0.0
    %4518 = vmatpush1.msra.mxu0 0.0
    %4519 = vmatprep.subr.mxu0 0.0
    %4520 = vmatpush1.msra.mxu0 0.0
    %4521 = vmatprep.subr.mxu0 0.0
    %4522 = vmatpush1.msra.mxu0 0.0
    %4523 = vmatprep.subr.mxu0 %v4488
    %4524 = vmatpush1.msra.mxu0 %v4487
    %4525 = vmatprep.subr.mxu0 %v4486
    %4526 = vmatpush1.msra.mxu0 %v4485
    %4527 = vmatprep.subr.mxu0 0.0
    %4528 = vmatpush2.msra.mxu0 0.0
    %4529 = vmatprep.subr.mxu0 0.0
    %4530 = vmatpush2.msra.mxu0 0.0
    %4531 = vmatprep.subr.mxu0 0.0
    %4532 = vmatpush2.msra.mxu0 0.0
    %4533 = vmatprep.subr.mxu0 0.0
    %4534 = vmatpush2.msra.mxu0 0.0
    %4535 = vmatprep.subr.mxu0 0.0
    %4536 = vmatpush2.msra.mxu0 0.0
    %4537 = vmatprep.subr.mxu0 0.0
    %4538 = vmatpush2.msra.mxu0 0.0
    %4539 = vmatprep.subr.mxu0 0.0
    %4540 = vmatpush2.msra.mxu0 0.0
    %4541 = vmatprep.subr.mxu0 0.0
    %4542 = vmatpush2.msra.mxu0 0.0
    %4543 = vmatprep.subr.mxu0 0.0
    %4544 = vmatpush2.msra.mxu0 0.0
    %4545 = vmatprep.subr.mxu0 0.0
    %4546 = vmatpush2.msra.mxu0 0.0
    %4547 = vmatprep.subr.mxu0 0.0
    %4548 = vmatpush2.msra.mxu0 0.0
    %4549 = vmatprep.subr.mxu0 0.0
    %4550 = vmatpush2.msra.mxu0 0.0
    %4551 = vmatprep.subr.mxu0 0.0
    %4552 = vmatpush2.msra.mxu0 0.0
    %4553 = vmatprep.subr.mxu0 0.0
    %4554 = vmatpush2.msra.mxu0 0.0
    %4555 = vmatprep.subr.mxu0 0.0
    %4556 = vmatpush2.msra.mxu0 0.0
    %4557 = vmatprep.subr.mxu0 0.0
    %4558 = vmatpush2.msra.mxu0 0.0
    %4559 = vmatprep.mubr.f32.mxu0 0.0
    %4560 = vmatmul.mubr.f32.gmra.mxu0 %v4193
    %v4561 = vpop.f32.mrf.mxu0
    %v4562 = vadd.f32 0.0, %v4561
    %v4563 = vpop.f32.mrf.mxu0
    %v4564 = vadd.f32 0.0, %v4563
    %4565 = vmatprep.mubr.f32.mxu0 0.0
    %4566 = vmatmul.mubr.f32.gmra.mxu0 %v4196
    %v4567 = vpop.f32.mrf.mxu0
    %v4568 = vadd.f32 0.0, %v4567
    %v4569 = vpop.f32.mrf.mxu0
    %v4570 = vadd.f32 0.0, %v4569
    %4571 = vmatprep.mubr.f32.mxu0 0.0
    %4572 = vmatmul.mubr.f32.gmra.mxu0 %v4199
    %v4573 = vpop.f32.mrf.mxu0
    %v4574 = vadd.f32 0.0, %v4573
    %v4575 = vpop.f32.mrf.mxu0
    %v4576 = vadd.f32 0.0, %v4575
    %4577 = vmatprep.mubr.f32.mxu0 0.0
    %4578 = vmatmul.mubr.f32.gmra.mxu0 %v4202
    %v4579 = vpop.f32.mrf.mxu0
    %v4580 = vadd.f32 0.0, %v4579
    %v4581 = vpop.f32.mrf.mxu0
    %v4582 = vadd.f32 0.0, %v4581
    %4583 = vmatprep.mubr.f32.mxu0 0.0
    %4584 = vmatmul.mubr.f32.gmra.mxu0 %v4350
    %v4585 = vpop.f32.mrf.mxu0
    %v4586 = vadd.f32 0.0, %v4585
    %v4587 = vpop.f32.mrf.mxu0
    %v4588 = vadd.f32 0.0, %v4587
    %4589 = vmatprep.mubr.f32.mxu0 0.0
    %4590 = vmatmul.mubr.f32.gmra.mxu0 %v4353
    %v4591 = vpop.f32.mrf.mxu0
    %v4592 = vadd.f32 0.0, %v4591
    %v4593 = vpop.f32.mrf.mxu0
    %v4594 = vadd.f32 0.0, %v4593
    %4595 = vmatprep.mubr.f32.mxu0 0.0
    %4596 = vmatmul.mubr.f32.gmra.mxu0 %v4490
    %v4597 = vpop.f32.mrf.mxu0
    %v4598 = vadd.f32 0.0, %v4597
    %v4599 = vpop.f32.mrf.mxu0
    %v4600 = vadd.f32 0.0, %v4599
    %4601 = vmatprep.mubr.f32.mxu0 0.0
    %4602 = vmatmul.mubr.f32.gmra.mxu0 %v4493
    %v4603 = vpop.f32.mrf.mxu0
    %v4604 = vadd.f32 0.0, %v4603
    %v4605 = vpop.f32.mrf.mxu0
    %v4606 = vadd.f32 0.0, %v4605
    %4607 = vdwg.mxu0
    %v4608 = vadd.f32 %v4468, %v4562
    %v4609 = vadd.f32 %v4469, %v4564
    %v4610 = vadd.f32 %v4470, %v4568
    %v4611 = vadd.f32 %v4471, %v4570
    %v4612 = vadd.f32 %v4472, %v4574
    %v4613 = vadd.f32 %v4473, %v4576
    %v4614 = vadd.f32 %v4474, %v4580
    %v4615 = vadd.f32 %v4475, %v4582
    %v4616 = vadd.f32 %v4476, %v4586
    %v4617 = vadd.f32 %v4477, %v4588
    %v4618 = vadd.f32 %v4478, %v4592
    %v4619 = vadd.f32 %v4479, %v4594
    %v4620 = vadd.f32 %v4480, %v4598
    %v4621 = vadd.f32 %v4481, %v4600
    %v4622 = vadd.f32 %v4482, %v4604
    %v4623 = vadd.f32 %v4483, %v4606
    %v4624 = vsub.f32 0.0, %v4608
    %v4625 = vsub.f32 0.0, %v4610
    %v4626 = vsub.f32 0.0, %v4612
    %v4627 = vsub.f32 0.0, %v4614
    %v4628 = vsub.f32 0.0, %v4616
    %v4629 = vsub.f32 0.0, %v4618
    %v4630 = vsub.f32 0.0, %v4620
    %v4631 = vsub.f32 0.0, %v4622
    %v4632 = vmul.f32 %v4624, 1.442695
    %v4633 = vpow.pop %v4632
    %v4634 = vmul.f32 %v4625, 1.442695
    %v4635 = vpow.pop %v4634
    %v4636 = vmul.f32 %v4626, 1.442695
    %v4637 = vpow.pop %v4636
    %v4638 = vmul.f32 %v4627, 1.442695
    %v4639 = vpow.pop %v4638
    %v4640 = vmul.f32 %v4628, 1.442695
    %v4641 = vpow.pop %v4640
    %v4642 = vmul.f32 %v4629, 1.442695
    %v4643 = vpow.pop %v4642
    %v4644 = vmul.f32 %v4630, 1.442695
    %v4645 = vpow.pop %v4644
    %v4646 = vmul.f32 %v4631, 1.442695
    %v4647 = vpow.pop %v4646
    %v4648 = vadd.f32 %v4633, 1.0
    %v4649 = vadd.f32 %v4635, 1.0
    %v4650 = vadd.f32 %v4637, 1.0
    %v4651 = vadd.f32 %v4639, 1.0
    %v4652 = vadd.f32 %v4641, 1.0
    %v4653 = vadd.f32 %v4643, 1.0
    %v4654 = vadd.f32 %v4645, 1.0
    %v4655 = vadd.f32 %v4647, 1.0
    %v4656 = vrcp.pop %v4648
    %v4657 = vrcp.pop %v4649
    %v4658 = vrcp.pop %v4650
    %v4659 = vrcp.pop %v4651
    %v4660 = vrcp.pop %v4652
    %v4661 = vrcp.pop %v4653
    %v4662 = vrcp.pop %v4654
    %v4663 = vrcp.pop %v4655
    %4672 = vrot.lane.b32.xlu0 %v4656, 64
    %v4673 = vpop.permute.xlu0 %4672
    %4674 = vrot.lane.b32.xlu0 %v4657, 64
    %v4675 = vpop.permute.xlu0 %4674
    %4676 = vrot.lane.b32.xlu0 %v4658, 64
    %v4677 = vpop.permute.xlu0 %4676
    %4678 = vrot.lane.b32.xlu0 %v4659, 64
    %v4679 = vpop.permute.xlu0 %4678
    %4680 = vrot.lane.b32.xlu0 %v4660, 64
    %v4681 = vpop.permute.xlu0 %4680
    %4682 = vrot.lane.b32.xlu0 %v4661, 64
    %v4683 = vpop.permute.xlu0 %4682
    %4684 = vrot.lane.b32.xlu0 %v4662, 64
    %v4685 = vpop.permute.xlu0 %4684
    %4686 = vrot.lane.b32.xlu0 %v4663, 64
    %v4687 = vpop.permute.xlu0 %4686
    %v4696 = vadd.f32 %v4608, %v4673
    %v4697 = vadd.f32 %v4610, %v4675
    %v4698 = vadd.f32 %v4612, %v4677
    %v4699 = vadd.f32 %v4614, %v4679
    %v4700 = vadd.f32 %v4616, %v4681
    %v4701 = vadd.f32 %v4618, %v4683
    %v4702 = vadd.f32 %v4620, %v4685
    %v4703 = vadd.f32 %v4622, %v4687
    %v4704 = vadd.f32 %v4696, %v4609
    %v4705 = vadd.f32 %v4697, %v4611
    %v4706 = vadd.f32 %v4698, %v4613
    %v4707 = vadd.f32 %v4699, %v4615
    %v4708 = vadd.f32 %v4700, %v4617
    %v4709 = vadd.f32 %v4701, %v4619
    %v4710 = vadd.f32 %v4702, %v4621
    %v4711 = vadd.f32 %v4703, %v4623
    %v4712 = vmax.f32 %v4704, 0.0
    %v4713 = vmax.f32 %v4705, 0.0
    %v4714 = vmax.f32 %v4706, 0.0
    %v4715 = vmax.f32 %v4707, 0.0
    %v4716 = vmax.f32 %v4708, 0.0
    %v4717 = vmax.f32 %v4709, 0.0
    %v4718 = vmax.f32 %v4710, 0.0
    %v4719 = vmax.f32 %v4711, 0.0
    %v4720 = vld [vmem:[%s18] sm:$0xff]
    %v4722 = vsel %vm1140, %v4720, 0
    %4724 = vmatprep.subr.mxu0 0.0
    %4725 = vmatpush1.msra.mxu0 0.0
    %4726 = vmatprep.subr.mxu0 0.0
    %4727 = vmatpush1.msra.mxu0 0.0
    %4728 = vmatprep.subr.mxu0 0.0
    %4729 = vmatpush1.msra.mxu0 0.0
    %4730 = vmatprep.subr.mxu0 0.0
    %4731 = vmatpush1.msra.mxu0 0.0
    %4732 = vmatprep.subr.mxu0 0.0
    %4733 = vmatpush1.msra.mxu0 0.0
    %4734 = vmatprep.subr.mxu0 0.0
    %4735 = vmatpush1.msra.mxu0 0.0
    %4736 = vmatprep.subr.mxu0 0.0
    %4737 = vmatpush1.msra.mxu0 0.0
    %4738 = vmatprep.subr.mxu0 0.0
    %4739 = vmatpush1.msra.mxu0 0.0
    %4740 = vmatprep.subr.mxu0 0.0
    %4741 = vmatpush1.msra.mxu0 %v4719
    %4742 = vmatprep.subr.mxu0 0.0
    %4743 = vmatpush1.msra.mxu0 %v4718
    %4744 = vmatprep.subr.mxu0 0.0
    %4745 = vmatpush1.msra.mxu0 %v4717
    %4746 = vmatprep.subr.mxu0 0.0
    %4747 = vmatpush1.msra.mxu0 %v4716
    %4748 = vmatprep.subr.mxu0 0.0
    %4749 = vmatpush1.msra.mxu0 %v4715
    %4750 = vmatprep.subr.mxu0 0.0
    %4751 = vmatpush1.msra.mxu0 %v4714
    %4752 = vmatprep.subr.mxu0 0.0
    %4753 = vmatpush1.msra.mxu0 %v4713
    %4754 = vmatprep.subr.mxu0 0.0
    %4755 = vmatpush1.msra.mxu0 %v4712
    %4756 = vmatprep.subr.mxu0 0.0
    %4757 = vmatpush2.msra.mxu0 0.0
    %4758 = vmatprep.subr.mxu0 0.0
    %4759 = vmatpush2.msra.mxu0 0.0
    %4760 = vmatprep.subr.mxu0 0.0
    %4761 = vmatpush2.msra.mxu0 0.0
    %4762 = vmatprep.subr.mxu0 0.0
    %4763 = vmatpush2.msra.mxu0 0.0
    %4764 = vmatprep.subr.mxu0 0.0
    %4765 = vmatpush2.msra.mxu0 0.0
    %4766 = vmatprep.subr.mxu0 0.0
    %4767 = vmatpush2.msra.mxu0 0.0
    %4768 = vmatprep.subr.mxu0 0.0
    %4769 = vmatpush2.msra.mxu0 0.0
    %4770 = vmatprep.subr.mxu0 0.0
    %4771 = vmatpush2.msra.mxu0 0.0
    %4772 = vmatprep.subr.mxu0 0.0
    %4773 = vmatpush2.msra.mxu0 0.0
    %4774 = vmatprep.subr.mxu0 0.0
    %4775 = vmatpush2.msra.mxu0 0.0
    %4776 = vmatprep.subr.mxu0 0.0
    %4777 = vmatpush2.msra.mxu0 0.0
    %4778 = vmatprep.subr.mxu0 0.0
    %4779 = vmatpush2.msra.mxu0 0.0
    %4780 = vmatprep.subr.mxu0 0.0
    %4781 = vmatpush2.msra.mxu0 0.0
    %4782 = vmatprep.subr.mxu0 0.0
    %4783 = vmatpush2.msra.mxu0 0.0
    %4784 = vmatprep.subr.mxu0 0.0
    %4785 = vmatpush2.msra.mxu0 0.0
    %4786 = vmatprep.subr.mxu0 0.0
    %4787 = vmatpush2.msra.mxu0 0.0
    %4788 = vmatprep.mubr.f32.mxu0 0.0
    %4789 = vmatmul.mubr.f32.gmra.mxu0 %v4722
    %v4790 = vpop.f32.mrf.mxu0
    %v4791 = vadd.f32 0.0, %v4790
    %v4792 = vpop.f32.mrf.mxu0
    %4793 = vdwg.mxu0
    %v4794 = vmul.f32 %v4712, %v4712
    %v4795 = vmul.f32 %v4713, %v4713
    %v4796 = vmul.f32 %v4714, %v4714
    %v4797 = vmul.f32 %v4715, %v4715
    %v4798 = vmul.f32 %v4716, %v4716
    %v4799 = vmul.f32 %v4717, %v4717
    %v4800 = vmul.f32 %v4718, %v4718
    %v4801 = vmul.f32 %v4719, %v4719
    %4802 = vmatprep.subr.mxu0 0.0
    %4803 = vmatpush1.msra.mxu0 0.0
    %4804 = vmatprep.subr.mxu0 0.0
    %4805 = vmatpush1.msra.mxu0 0.0
    %4806 = vmatprep.subr.mxu0 0.0
    %4807 = vmatpush1.msra.mxu0 0.0
    %4808 = vmatprep.subr.mxu0 0.0
    %4809 = vmatpush1.msra.mxu0 0.0
    %4810 = vmatprep.subr.mxu0 0.0
    %4811 = vmatpush1.msra.mxu0 0.0
    %4812 = vmatprep.subr.mxu0 0.0
    %4813 = vmatpush1.msra.mxu0 0.0
    %4814 = vmatprep.subr.mxu0 0.0
    %4815 = vmatpush1.msra.mxu0 0.0
    %4816 = vmatprep.subr.mxu0 0.0
    %4817 = vmatpush1.msra.mxu0 0.0
    %4818 = vmatprep.subr.mxu0 0.0
    %4819 = vmatpush1.msra.mxu0 %v4801
    %4820 = vmatprep.subr.mxu0 0.0
    %4821 = vmatpush1.msra.mxu0 %v4800
    %4822 = vmatprep.subr.mxu0 0.0
    %4823 = vmatpush1.msra.mxu0 %v4799
    %4824 = vmatprep.subr.mxu0 0.0
    %4825 = vmatpush1.msra.mxu0 %v4798
    %4826 = vmatprep.subr.mxu0 0.0
    %4827 = vmatpush1.msra.mxu0 %v4797
    %4828 = vmatprep.subr.mxu0 0.0
    %4829 = vmatpush1.msra.mxu0 %v4796
    %4830 = vmatprep.subr.mxu0 0.0
    %4831 = vmatpush1.msra.mxu0 %v4795
    %4832 = vmatprep.subr.mxu0 0.0
    %4833 = vmatpush1.msra.mxu0 %v4794
    %4834 = vmatprep.subr.mxu0 0.0
    %4835 = vmatpush2.msra.mxu0 0.0
    %4836 = vmatprep.subr.mxu0 0.0
    %4837 = vmatpush2.msra.mxu0 0.0
    %4838 = vmatprep.subr.mxu0 0.0
    %4839 = vmatpush2.msra.mxu0 0.0
    %4840 = vmatprep.subr.mxu0 0.0
    %4841 = vmatpush2.msra.mxu0 0.0
    %4842 = vmatprep.subr.mxu0 0.0
    %4843 = vmatpush2.msra.mxu0 0.0
    %4844 = vmatprep.subr.mxu0 0.0
    %4845 = vmatpush2.msra.mxu0 0.0
    %4846 = vmatprep.subr.mxu0 0.0
    %4847 = vmatpush2.msra.mxu0 0.0
    %4848 = vmatprep.subr.mxu0 0.0
    %4849 = vmatpush2.msra.mxu0 0.0
    %4850 = vmatprep.subr.mxu0 0.0
    %4851 = vmatpush2.msra.mxu0 0.0
    %4852 = vmatprep.subr.mxu0 0.0
    %4853 = vmatpush2.msra.mxu0 0.0
    %4854 = vmatprep.subr.mxu0 0.0
    %4855 = vmatpush2.msra.mxu0 0.0
    %4856 = vmatprep.subr.mxu0 0.0
    %4857 = vmatpush2.msra.mxu0 0.0
    %4858 = vmatprep.subr.mxu0 0.0
    %4859 = vmatpush2.msra.mxu0 0.0
    %4860 = vmatprep.subr.mxu0 0.0
    %4861 = vmatpush2.msra.mxu0 0.0
    %4862 = vmatprep.subr.mxu0 0.0
    %4863 = vmatpush2.msra.mxu0 0.0
    %4864 = vmatprep.subr.mxu0 0.0
    %4865 = vmatpush2.msra.mxu0 0.0
    %4866 = vmatprep.mubr.f32.mxu0 0.0
    %4867 = vmatmul.mubr.f32.gmra.mxu0 %v4722
    %v4868 = vpop.f32.mrf.mxu0
    %v4869 = vadd.f32 0.0, %v4868
    %v4870 = vpop.f32.mrf.mxu0
    %4871 = vdwg.mxu0
    %v4872 = vsel %vm1140, %v4791, 0.0
    %4873 = vadd.xlane.f32.xlu0 %v4872
    %v4874 = vpop.xlane.xlu0 %4873
    %v4875 = vrcp.pop 512.0
    %v4876 = vmul.f32 %v4874, %v4875
    %v4877 = vsel %vm1140, %v4869, 0.0
    %4878 = vadd.xlane.f32.xlu0 %v4877
    %v4879 = vpop.xlane.xlu0 %4878
    %v4880 = vmul.f32 %v4879, %v4875
    %v4881 = vmul.f32 %v4876, %v4876
    %v4882 = vsub.f32 %v4880, %v4881
    %v4883 = vmax.f32 %v4882, 0.0
    %v4884 = vadd.f32 %v4883, 1e-05
    %v4885 = vrsqrt.pop %v4884
    %v4886 = vld [vmem:[%s19] sm:$0xff]
    %v4887 = vmul.f32 %v4885, %v4886
    %v4888 = vld [vmem:[%s20] sm:$0xff]
    %v4889 = vmul.f32 %v4876, %v4887
    %v4890 = vsub.f32 %v4888, %v4889
    %4892 = vset.pattern.permute.xlu0 0
    %4893 = vperm.xlu0 %4892, %v4887
    %v4894 = vpop.permute.xlu0 %4893
    %4897 = vset.pattern.permute.xlu0 0
    %4898 = vperm.xlu0 %4897, %v4890
    %v4899 = vpop.permute.xlu0 %4898
    %v4901 = vld [vmem:[%s17] sm:$0xff]
    %v4902 = vld [vmem:[%s17 + $0x8] sm:$0xff]
    %v4903 = vld [vmem:[%s17 + $0x10] sm:$0xff]
    %v4904 = vld [vmem:[%s17 + $0x18] sm:$0xff]
    %v4905 = vld [vmem:[%s17 + $0x20] sm:$0xff]
    %v4906 = vld [vmem:[%s17 + $0x28] sm:$0xff]
    %v4907 = vld [vmem:[%s17 + $0x30] sm:$0xff]
    %v4908 = vld [vmem:[%s17 + $0x38] sm:$0xff]
    %v4910 = vsel %vm2712, %v4901, 0
    %v4913 = vsel %vm2712, %v4902, 0
    %v4916 = vsel %vm2712, %v4903, 0
    %v4919 = vsel %vm2712, %v4904, 0
    %v4922 = vsel %vm2712, %v4905, 0
    %v4925 = vsel %vm2712, %v4906, 0
    %v4928 = vsel %vm2712, %v4907, 0
    %v4931 = vsel %vm2712, %v4908, 0
    %4933 = vmatprep.subr.mxu0 0.0
    %4934 = vmatpush1.msra.mxu0 0.0
    %4935 = vmatprep.subr.mxu0 0.0
    %4936 = vmatpush1.msra.mxu0 0.0
    %4937 = vmatprep.subr.mxu0 0.0
    %4938 = vmatpush1.msra.mxu0 0.0
    %4939 = vmatprep.subr.mxu0 0.0
    %4940 = vmatpush1.msra.mxu0 0.0
    %4941 = vmatprep.subr.mxu0 0.0
    %4942 = vmatpush1.msra.mxu0 0.0
    %4943 = vmatprep.subr.mxu0 0.0
    %4944 = vmatpush1.msra.mxu0 0.0
    %4945 = vmatprep.subr.mxu0 0.0
    %4946 = vmatpush1.msra.mxu0 0.0
    %4947 = vmatprep.subr.mxu0 0.0
    %4948 = vmatpush1.msra.mxu0 0.0
    %4949 = vmatprep.subr.mxu0 0.0
    %4950 = vmatpush1.msra.mxu0 0.0
    %4951 = vmatprep.subr.mxu0 0.0
    %4952 = vmatpush1.msra.mxu0 0.0
    %4953 = vmatprep.subr.mxu0 0.0
    %4954 = vmatpush1.msra.mxu0 0.0
    %4955 = vmatprep.subr.mxu0 0.0
    %4956 = vmatpush1.msra.mxu0 0.0
    %4957 = vmatprep.subr.mxu0 0.0
    %4958 = vmatpush1.msra.mxu0 0.0
    %4959 = vmatprep.subr.mxu0 0.0
    %4960 = vmatpush1.msra.mxu0 0.0
    %4961 = vmatprep.subr.mxu0 0.0
    %4962 = vmatpush1.msra.mxu0 0.0
    %4963 = vmatprep.subr.mxu0 0.0
    %4964 = vmatpush1.msra.mxu0 %v4894
    %4965 = vmatprep.subr.mxu0 0.0
    %4966 = vmatpush2.msra.mxu0 0.0
    %4967 = vmatprep.subr.mxu0 0.0
    %4968 = vmatpush2.msra.mxu0 0.0
    %4969 = vmatprep.subr.mxu0 0.0
    %4970 = vmatpush2.msra.mxu0 0.0
    %4971 = vmatprep.subr.mxu0 0.0
    %4972 = vmatpush2.msra.mxu0 0.0
    %4973 = vmatprep.subr.mxu0 0.0
    %4974 = vmatpush2.msra.mxu0 0.0
    %4975 = vmatprep.subr.mxu0 0.0
    %4976 = vmatpush2.msra.mxu0 0.0
    %4977 = vmatprep.subr.mxu0 0.0
    %4978 = vmatpush2.msra.mxu0 0.0
    %4979 = vmatprep.subr.mxu0 0.0
    %4980 = vmatpush2.msra.mxu0 0.0
    %4981 = vmatprep.subr.mxu0 0.0
    %4982 = vmatpush2.msra.mxu0 0.0
    %4983 = vmatprep.subr.mxu0 0.0
    %4984 = vmatpush2.msra.mxu0 0.0
    %4985 = vmatprep.subr.mxu0 0.0
    %4986 = vmatpush2.msra.mxu0 0.0
    %4987 = vmatprep.subr.mxu0 0.0
    %4988 = vmatpush2.msra.mxu0 0.0
    %4989 = vmatprep.subr.mxu0 0.0
    %4990 = vmatpush2.msra.mxu0 0.0
    %4991 = vmatprep.subr.mxu0 0.0
    %4992 = vmatpush2.msra.mxu0 0.0
    %4993 = vmatprep.subr.mxu0 0.0
    %4994 = vmatpush2.msra.mxu0 0.0
    %4995 = vmatprep.subr.mxu0 0.0
    %4996 = vmatpush2.msra.mxu0 0.0
    %4997 = vmatprep.mubr.f32.mxu0 0.0
    %4998 = vmatmul.mubr.f32.gmra.mxu0 %v4910
    %v4999 = vpop.f32.mrf.mxu0
    %v5000 = vadd.f32 0.0, %v4999
    %v5001 = vpop.f32.mrf.mxu0
    %5002 = vmatprep.mubr.f32.mxu0 0.0
    %5003 = vmatmul.mubr.f32.gmra.mxu0 %v4913
    %v5004 = vpop.f32.mrf.mxu0
    %v5005 = vadd.f32 0.0, %v5004
    %v5006 = vpop.f32.mrf.mxu0
    %5007 = vmatprep.mubr.f32.mxu0 0.0
    %5008 = vmatmul.mubr.f32.gmra.mxu0 %v4916
    %v5009 = vpop.f32.mrf.mxu0
    %v5010 = vadd.f32 0.0, %v5009
    %v5011 = vpop.f32.mrf.mxu0
    %5012 = vmatprep.mubr.f32.mxu0 0.0
    %5013 = vmatmul.mubr.f32.gmra.mxu0 %v4919
    %v5014 = vpop.f32.mrf.mxu0
    %v5015 = vadd.f32 0.0, %v5014
    %v5016 = vpop.f32.mrf.mxu0
    %5017 = vmatprep.mubr.f32.mxu0 0.0
    %5018 = vmatmul.mubr.f32.gmra.mxu0 %v4922
    %v5019 = vpop.f32.mrf.mxu0
    %v5020 = vadd.f32 0.0, %v5019
    %v5021 = vpop.f32.mrf.mxu0
    %5022 = vmatprep.mubr.f32.mxu0 0.0
    %5023 = vmatmul.mubr.f32.gmra.mxu0 %v4925
    %v5024 = vpop.f32.mrf.mxu0
    %v5025 = vadd.f32 0.0, %v5024
    %v5026 = vpop.f32.mrf.mxu0
    %5027 = vmatprep.mubr.f32.mxu0 0.0
    %5028 = vmatmul.mubr.f32.gmra.mxu0 %v4928
    %v5029 = vpop.f32.mrf.mxu0
    %v5030 = vadd.f32 0.0, %v5029
    %v5031 = vpop.f32.mrf.mxu0
    %5032 = vmatprep.mubr.f32.mxu0 0.0
    %5033 = vmatmul.mubr.f32.gmra.mxu0 %v4931
    %v5034 = vpop.f32.mrf.mxu0
    %v5035 = vadd.f32 0.0, %v5034
    %v5036 = vpop.f32.mrf.mxu0
    %5037 = vdwg.mxu0
    %5038 = vmatprep.subr.mxu0 0.0
    %5039 = vmatpush1.msra.mxu0 0.0
    %5040 = vmatprep.subr.mxu0 0.0
    %5041 = vmatpush1.msra.mxu0 0.0
    %5042 = vmatprep.subr.mxu0 0.0
    %5043 = vmatpush1.msra.mxu0 0.0
    %5044 = vmatprep.subr.mxu0 0.0
    %5045 = vmatpush1.msra.mxu0 0.0
    %5046 = vmatprep.subr.mxu0 0.0
    %5047 = vmatpush1.msra.mxu0 0.0
    %5048 = vmatprep.subr.mxu0 0.0
    %5049 = vmatpush1.msra.mxu0 0.0
    %5050 = vmatprep.subr.mxu0 0.0
    %5051 = vmatpush1.msra.mxu0 0.0
    %5052 = vmatprep.subr.mxu0 0.0
    %5053 = vmatpush1.msra.mxu0 0.0
    %5054 = vmatprep.subr.mxu0 0.0
    %5055 = vmatpush1.msra.mxu0 0.0
    %5056 = vmatprep.subr.mxu0 0.0
    %5057 = vmatpush1.msra.mxu0 0.0
    %5058 = vmatprep.subr.mxu0 0.0
    %5059 = vmatpush1.msra.mxu0 0.0
    %5060 = vmatprep.subr.mxu0 0.0
    %5061 = vmatpush1.msra.mxu0 0.0
    %5062 = vmatprep.subr.mxu0 0.0
    %5063 = vmatpush1.msra.mxu0 0.0
    %5064 = vmatprep.subr.mxu0 0.0
    %5065 = vmatpush1.msra.mxu0 0.0
    %5066 = vmatprep.subr.mxu0 0.0
    %5067 = vmatpush1.msra.mxu0 0.0
    %5068 = vmatprep.subr.mxu0 0.0
    %5069 = vmatpush1.msra.mxu0 %v4899
    %5070 = vmatprep.subr.mxu0 0.0
    %5071 = vmatpush2.msra.mxu0 0.0
    %5072 = vmatprep.subr.mxu0 0.0
    %5073 = vmatpush2.msra.mxu0 0.0
    %5074 = vmatprep.subr.mxu0 0.0
    %5075 = vmatpush2.msra.mxu0 0.0
    %5076 = vmatprep.subr.mxu0 0.0
    %5077 = vmatpush2.msra.mxu0 0.0
    %5078 = vmatprep.subr.mxu0 0.0
    %5079 = vmatpush2.msra.mxu0 0.0
    %5080 = vmatprep.subr.mxu0 0.0
    %5081 = vmatpush2.msra.mxu0 0.0
    %5082 = vmatprep.subr.mxu0 0.0
    %5083 = vmatpush2.msra.mxu0 0.0
    %5084 = vmatprep.subr.mxu0 0.0
    %5085 = vmatpush2.msra.mxu0 0.0
    %5086 = vmatprep.subr.mxu0 0.0
    %5087 = vmatpush2.msra.mxu0 0.0
    %5088 = vmatprep.subr.mxu0 0.0
    %5089 = vmatpush2.msra.mxu0 0.0
    %5090 = vmatprep.subr.mxu0 0.0
    %5091 = vmatpush2.msra.mxu0 0.0
    %5092 = vmatprep.subr.mxu0 0.0
    %5093 = vmatpush2.msra.mxu0 0.0
    %5094 = vmatprep.subr.mxu0 0.0
    %5095 = vmatpush2.msra.mxu0 0.0
    %5096 = vmatprep.subr.mxu0 0.0
    %5097 = vmatpush2.msra.mxu0 0.0
    %5098 = vmatprep.subr.mxu0 0.0
    %5099 = vmatpush2.msra.mxu0 0.0
    %5100 = vmatprep.subr.mxu0 0.0
    %5101 = vmatpush2.msra.mxu0 0.0
    %5102 = vmatprep.mubr.f32.mxu0 0.0
    %5103 = vmatmul.mubr.f32.gmra.mxu0 %v4910
    %v5104 = vpop.f32.mrf.mxu0
    %v5105 = vadd.f32 0.0, %v5104
    %v5106 = vpop.f32.mrf.mxu0
    %5107 = vmatprep.mubr.f32.mxu0 0.0
    %5108 = vmatmul.mubr.f32.gmra.mxu0 %v4913
    %v5109 = vpop.f32.mrf.mxu0
    %v5110 = vadd.f32 0.0, %v5109
    %v5111 = vpop.f32.mrf.mxu0
    %5112 = vmatprep.mubr.f32.mxu0 0.0
    %5113 = vmatmul.mubr.f32.gmra.mxu0 %v4916
    %v5114 = vpop.f32.mrf.mxu0
    %v5115 = vadd.f32 0.0, %v5114
    %v5116 = vpop.f32.mrf.mxu0
    %5117 = vmatprep.mubr.f32.mxu0 0.0
    %5118 = vmatmul.mubr.f32.gmra.mxu0 %v4919
    %v5119 = vpop.f32.mrf.mxu0
    %v5120 = vadd.f32 0.0, %v5119
    %v5121 = vpop.f32.mrf.mxu0
    %5122 = vmatprep.mubr.f32.mxu0 0.0
    %5123 = vmatmul.mubr.f32.gmra.mxu0 %v4922
    %v5124 = vpop.f32.mrf.mxu0
    %v5125 = vadd.f32 0.0, %v5124
    %v5126 = vpop.f32.mrf.mxu0
    %5127 = vmatprep.mubr.f32.mxu0 0.0
    %5128 = vmatmul.mubr.f32.gmra.mxu0 %v4925
    %v5129 = vpop.f32.mrf.mxu0
    %v5130 = vadd.f32 0.0, %v5129
    %v5131 = vpop.f32.mrf.mxu0
    %5132 = vmatprep.mubr.f32.mxu0 0.0
    %5133 = vmatmul.mubr.f32.gmra.mxu0 %v4928
    %v5134 = vpop.f32.mrf.mxu0
    %v5135 = vadd.f32 0.0, %v5134
    %v5136 = vpop.f32.mrf.mxu0
    %5137 = vmatprep.mubr.f32.mxu0 0.0
    %5138 = vmatmul.mubr.f32.gmra.mxu0 %v4931
    %v5139 = vpop.f32.mrf.mxu0
    %v5140 = vadd.f32 0.0, %v5139
    %v5141 = vpop.f32.mrf.mxu0
    %5142 = vdwg.mxu0
    %v5143 = vmul.f32 %v4712, %v5000
    %v5144 = vmul.f32 %v4713, %v5005
    %v5145 = vmul.f32 %v4714, %v5010
    %v5146 = vmul.f32 %v4715, %v5015
    %v5147 = vmul.f32 %v4716, %v5020
    %v5148 = vmul.f32 %v4717, %v5025
    %v5149 = vmul.f32 %v4718, %v5030
    %v5150 = vmul.f32 %v4719, %v5035
    %v5151 = vadd.f32 %v5143, %v5105
    %v5152 = vadd.f32 %v5144, %v5110
    %v5153 = vadd.f32 %v5145, %v5115
    %v5154 = vadd.f32 %v5146, %v5120
    %v5155 = vadd.f32 %v5147, %v5125
    %v5156 = vadd.f32 %v5148, %v5130
    %v5157 = vadd.f32 %v5149, %v5135
    %v5158 = vadd.f32 %v5150, %v5140
    %v5159 = vld [vmem:[%s22] sm:$0x3]
    %v5160 = vld [vmem:[%s21] sm:$0xff]
    %v5161 = vld [vmem:[%s21 + $0x8] sm:$0xff]
    %v5162 = vld [vmem:[%s21 + $0x10] sm:$0xff]
    %v5163 = vld [vmem:[%s21 + $0x18] sm:$0xff]
    %v5164 = vld [vmem:[%s21 + $0x20] sm:$0xff]
    %v5165 = vld [vmem:[%s21 + $0x28] sm:$0xff]
    %v5166 = vld [vmem:[%s21 + $0x30] sm:$0xff]
    %v5167 = vld [vmem:[%s21 + $0x38] sm:$0xff]
    %v5168 = vld [vmem:[%s21 + $0x40] sm:$0xff]
    %v5169 = vld [vmem:[%s21 + $0x48] sm:$0xff]
    %v5170 = vld [vmem:[%s21 + $0x50] sm:$0xff]
    %v5171 = vld [vmem:[%s21 + $0x58] sm:$0xff]
    %v5172 = vld [vmem:[%s21 + $0x60] sm:$0xff]
    %v5173 = vld [vmem:[%s21 + $0x68] sm:$0xff]
    %v5174 = vld [vmem:[%s21 + $0x70] sm:$0xff]
    %v5175 = vld [vmem:[%s21 + $0x78] sm:$0xff]
    %v5177 = vsel %vm1140, %v5151, 0
    %v5180 = vsel %vm1140, %v5152, 0
    %v5183 = vsel %vm1140, %v5153, 0
    %v5186 = vsel %vm1140, %v5154, 0
    %5188 = vmatprep.subr.mxu0 0.0
    %5189 = vmatpush1.msra.mxu0 0.0
    %5190 = vmatprep.subr.mxu0 0.0
    %5191 = vmatpush1.msra.mxu0 0.0
    %5192 = vmatprep.subr.mxu0 0.0
    %5193 = vmatpush1.msra.mxu0 0.0
    %5194 = vmatprep.subr.mxu0 0.0
    %5195 = vmatpush1.msra.mxu0 0.0
    %5196 = vmatprep.subr.mxu0 0.0
    %5197 = vmatpush1.msra.mxu0 0.0
    %5198 = vmatprep.subr.mxu0 0.0
    %5199 = vmatpush1.msra.mxu0 0.0
    %5200 = vmatprep.subr.mxu0 0.0
    %5201 = vmatpush1.msra.mxu0 0.0
    %5202 = vmatprep.subr.mxu0 0.0
    %5203 = vmatpush1.msra.mxu0 0.0
    %5204 = vmatprep.subr.mxu0 %v5175
    %5205 = vmatpush1.msra.mxu0 %v5174
    %5206 = vmatprep.subr.mxu0 %v5173
    %5207 = vmatpush1.msra.mxu0 %v5172
    %5208 = vmatprep.subr.mxu0 %v5171
    %5209 = vmatpush1.msra.mxu0 %v5170
    %5210 = vmatprep.subr.mxu0 %v5169
    %5211 = vmatpush1.msra.mxu0 %v5168
    %5212 = vmatprep.subr.mxu0 %v5167
    %5213 = vmatpush1.msra.mxu0 %v5166
    %5214 = vmatprep.subr.mxu0 %v5165
    %5215 = vmatpush1.msra.mxu0 %v5164
    %5216 = vmatprep.subr.mxu0 %v5163
    %5217 = vmatpush1.msra.mxu0 %v5162
    %5218 = vmatprep.subr.mxu0 %v5161
    %5219 = vmatpush1.msra.mxu0 %v5160
    %5220 = vmatprep.subr.mxu0 0.0
    %5221 = vmatpush2.msra.mxu0 0.0
    %5222 = vmatprep.subr.mxu0 0.0
    %5223 = vmatpush2.msra.mxu0 0.0
    %5224 = vmatprep.subr.mxu0 0.0
    %5225 = vmatpush2.msra.mxu0 0.0
    %5226 = vmatprep.subr.mxu0 0.0
    %5227 = vmatpush2.msra.mxu0 0.0
    %5228 = vmatprep.subr.mxu0 0.0
    %5229 = vmatpush2.msra.mxu0 0.0
    %5230 = vmatprep.subr.mxu0 0.0
    %5231 = vmatpush2.msra.mxu0 0.0
    %5232 = vmatprep.subr.mxu0 0.0
    %5233 = vmatpush2.msra.mxu0 0.0
    %5234 = vmatprep.subr.mxu0 0.0
    %5235 = vmatpush2.msra.mxu0 0.0
    %5236 = vmatprep.subr.mxu0 0.0
    %5237 = vmatpush2.msra.mxu0 0.0
    %5238 = vmatprep.subr.mxu0 0.0
    %5239 = vmatpush2.msra.mxu0 0.0
    %5240 = vmatprep.subr.mxu0 0.0
    %5241 = vmatpush2.msra.mxu0 0.0
    %5242 = vmatprep.subr.mxu0 0.0
    %5243 = vmatpush2.msra.mxu0 0.0
    %5244 = vmatprep.subr.mxu0 0.0
    %5245 = vmatpush2.msra.mxu0 0.0
    %5246 = vmatprep.subr.mxu0 0.0
    %5247 = vmatpush2.msra.mxu0 0.0
    %5248 = vmatprep.subr.mxu0 0.0
    %5249 = vmatpush2.msra.mxu0 0.0
    %5250 = vmatprep.subr.mxu0 0.0
    %5251 = vmatpush2.msra.mxu0 0.0
    %5252 = vmatprep.mubr.f32.mxu0 0.0
    %5253 = vmatmul.mubr.f32.gmra.mxu0 %v5177
    %v5254 = vpop.f32.mrf.mxu0
    %v5255 = vadd.f32 0.0, %v5254
    %v5256 = vpop.f32.mrf.mxu0
    %v5257 = vadd.f32 0.0, %v5256
    %5258 = vmatprep.mubr.f32.mxu0 0.0
    %5259 = vmatmul.mubr.f32.gmra.mxu0 %v5180
    %v5260 = vpop.f32.mrf.mxu0
    %v5261 = vadd.f32 0.0, %v5260
    %v5262 = vpop.f32.mrf.mxu0
    %v5263 = vadd.f32 0.0, %v5262
    %5264 = vmatprep.mubr.f32.mxu0 0.0
    %5265 = vmatmul.mubr.f32.gmra.mxu0 %v5183
    %v5266 = vpop.f32.mrf.mxu0
    %v5267 = vadd.f32 0.0, %v5266
    %v5268 = vpop.f32.mrf.mxu0
    %v5269 = vadd.f32 0.0, %v5268
    %5270 = vmatprep.mubr.f32.mxu0 0.0
    %5271 = vmatmul.mubr.f32.gmra.mxu0 %v5186
    %v5272 = vpop.f32.mrf.mxu0
    %v5273 = vadd.f32 0.0, %v5272
    %v5274 = vpop.f32.mrf.mxu0
    %v5275 = vadd.f32 0.0, %v5274
    %5276 = vdwg.mxu0
    %v5278 = vlaneseq
    %v5279 = vshrl.u32 %v5278, 7
    %v5280 = vsub.s32 0, %v5279
    %v5281 = vrot.slane %v5159, %v5280
    %v5282 = vlaneseq
    %v5283 = vshrl.u32 %v5282, 7
    %v5284 = vsub.s32 1, %v5283
    %v5285 = vrot.slane %v5159, %v5284
    %v5288 = vadd.f32 %v5281, %v5255
    %v5289 = vadd.f32 %v5285, %v5257
    %v5290 = vadd.f32 %v5281, %v5261
    %v5291 = vadd.f32 %v5285, %v5263
    %v5292 = vadd.f32 %v5281, %v5267
    %v5293 = vadd.f32 %v5285, %v5269
    %v5294 = vadd.f32 %v5281, %v5273
    %v5295 = vadd.f32 %v5285, %v5275
    %s5296 = scalar_lea.vmem %s21, 128
    %v5297 = vld [vmem:[%s5296] sm:$0xff]
    %v5298 = vld [vmem:[%s5296 + $0x8] sm:$0xff]
    %v5299 = vld [vmem:[%s5296 + $0x10] sm:$0xff]
    %v5300 = vld [vmem:[%s5296 + $0x18] sm:$0xff]
    %v5301 = vld [vmem:[%s5296 + $0x20] sm:$0xff]
    %v5302 = vld [vmem:[%s5296 + $0x28] sm:$0xff]
    %v5303 = vld [vmem:[%s5296 + $0x30] sm:$0xff]
    %v5304 = vld [vmem:[%s5296 + $0x38] sm:$0xff]
    %v5305 = vld [vmem:[%s5296 + $0x40] sm:$0xff]
    %v5306 = vld [vmem:[%s5296 + $0x48] sm:$0xff]
    %v5307 = vld [vmem:[%s5296 + $0x50] sm:$0xff]
    %v5308 = vld [vmem:[%s5296 + $0x58] sm:$0xff]
    %v5309 = vld [vmem:[%s5296 + $0x60] sm:$0xff]
    %v5310 = vld [vmem:[%s5296 + $0x68] sm:$0xff]
    %v5311 = vld [vmem:[%s5296 + $0x70] sm:$0xff]
    %v5312 = vld [vmem:[%s5296 + $0x78] sm:$0xff]
    %v5314 = vsel %vm1140, %v5155, 0
    %v5317 = vsel %vm1140, %v5156, 0
    %5319 = vmatprep.subr.mxu0 0.0
    %5320 = vmatpush1.msra.mxu0 0.0
    %5321 = vmatprep.subr.mxu0 0.0
    %5322 = vmatpush1.msra.mxu0 0.0
    %5323 = vmatprep.subr.mxu0 0.0
    %5324 = vmatpush1.msra.mxu0 0.0
    %5325 = vmatprep.subr.mxu0 0.0
    %5326 = vmatpush1.msra.mxu0 0.0
    %5327 = vmatprep.subr.mxu0 0.0
    %5328 = vmatpush1.msra.mxu0 0.0
    %5329 = vmatprep.subr.mxu0 0.0
    %5330 = vmatpush1.msra.mxu0 0.0
    %5331 = vmatprep.subr.mxu0 0.0
    %5332 = vmatpush1.msra.mxu0 0.0
    %5333 = vmatprep.subr.mxu0 0.0
    %5334 = vmatpush1.msra.mxu0 0.0
    %5335 = vmatprep.subr.mxu0 %v5312
    %5336 = vmatpush1.msra.mxu0 %v5311
    %5337 = vmatprep.subr.mxu0 %v5310
    %5338 = vmatpush1.msra.mxu0 %v5309
    %5339 = vmatprep.subr.mxu0 %v5308
    %5340 = vmatpush1.msra.mxu0 %v5307
    %5341 = vmatprep.subr.mxu0 %v5306
    %5342 = vmatpush1.msra.mxu0 %v5305
    %5343 = vmatprep.subr.mxu0 %v5304
    %5344 = vmatpush1.msra.mxu0 %v5303
    %5345 = vmatprep.subr.mxu0 %v5302
    %5346 = vmatpush1.msra.mxu0 %v5301
    %5347 = vmatprep.subr.mxu0 %v5300
    %5348 = vmatpush1.msra.mxu0 %v5299
    %5349 = vmatprep.subr.mxu0 %v5298
    %5350 = vmatpush1.msra.mxu0 %v5297
    %5351 = vmatprep.subr.mxu0 0.0
    %5352 = vmatpush2.msra.mxu0 0.0
    %5353 = vmatprep.subr.mxu0 0.0
    %5354 = vmatpush2.msra.mxu0 0.0
    %5355 = vmatprep.subr.mxu0 0.0
    %5356 = vmatpush2.msra.mxu0 0.0
    %5357 = vmatprep.subr.mxu0 0.0
    %5358 = vmatpush2.msra.mxu0 0.0
    %5359 = vmatprep.subr.mxu0 0.0
    %5360 = vmatpush2.msra.mxu0 0.0
    %5361 = vmatprep.subr.mxu0 0.0
    %5362 = vmatpush2.msra.mxu0 0.0
    %5363 = vmatprep.subr.mxu0 0.0
    %5364 = vmatpush2.msra.mxu0 0.0
    %5365 = vmatprep.subr.mxu0 0.0
    %5366 = vmatpush2.msra.mxu0 0.0
    %5367 = vmatprep.subr.mxu0 0.0
    %5368 = vmatpush2.msra.mxu0 0.0
    %5369 = vmatprep.subr.mxu0 0.0
    %5370 = vmatpush2.msra.mxu0 0.0
    %5371 = vmatprep.subr.mxu0 0.0
    %5372 = vmatpush2.msra.mxu0 0.0
    %5373 = vmatprep.subr.mxu0 0.0
    %5374 = vmatpush2.msra.mxu0 0.0
    %5375 = vmatprep.subr.mxu0 0.0
    %5376 = vmatpush2.msra.mxu0 0.0
    %5377 = vmatprep.subr.mxu0 0.0
    %5378 = vmatpush2.msra.mxu0 0.0
    %5379 = vmatprep.subr.mxu0 0.0
    %5380 = vmatpush2.msra.mxu0 0.0
    %5381 = vmatprep.subr.mxu0 0.0
    %5382 = vmatpush2.msra.mxu0 0.0
    %5383 = vmatprep.mubr.f32.mxu0 0.0
    %5384 = vmatmul.mubr.f32.gmra.mxu0 %v5183
    %v5385 = vpop.f32.mrf.mxu0
    %v5386 = vadd.f32 0.0, %v5385
    %v5387 = vpop.f32.mrf.mxu0
    %v5388 = vadd.f32 0.0, %v5387
    %5389 = vmatprep.mubr.f32.mxu0 0.0
    %5390 = vmatmul.mubr.f32.gmra.mxu0 %v5186
    %v5391 = vpop.f32.mrf.mxu0
    %v5392 = vadd.f32 0.0, %v5391
    %v5393 = vpop.f32.mrf.mxu0
    %v5394 = vadd.f32 0.0, %v5393
    %5395 = vmatprep.mubr.f32.mxu0 0.0
    %5396 = vmatmul.mubr.f32.gmra.mxu0 %v5314
    %v5397 = vpop.f32.mrf.mxu0
    %v5398 = vadd.f32 0.0, %v5397
    %v5399 = vpop.f32.mrf.mxu0
    %v5400 = vadd.f32 0.0, %v5399
    %5401 = vmatprep.mubr.f32.mxu0 0.0
    %5402 = vmatmul.mubr.f32.gmra.mxu0 %v5317
    %v5403 = vpop.f32.mrf.mxu0
    %v5404 = vadd.f32 0.0, %v5403
    %v5405 = vpop.f32.mrf.mxu0
    %v5406 = vadd.f32 0.0, %v5405
    %5407 = vdwg.mxu0
    %v5408 = vadd.f32 %v5288, %v5386
    %v5409 = vadd.f32 %v5289, %v5388
    %v5410 = vadd.f32 %v5290, %v5392
    %v5411 = vadd.f32 %v5291, %v5394
    %v5412 = vadd.f32 %v5292, %v5398
    %v5413 = vadd.f32 %v5293, %v5400
    %v5414 = vadd.f32 %v5294, %v5404
    %v5415 = vadd.f32 %v5295, %v5406
    %s5416 = scalar_lea.vmem %s21, 256
    %v5417 = vld [vmem:[%s5416] sm:$0xff]
    %v5418 = vld [vmem:[%s5416 + $0x8] sm:$0xff]
    %v5419 = vld [vmem:[%s5416 + $0x10] sm:$0xff]
    %v5420 = vld [vmem:[%s5416 + $0x18] sm:$0xff]
    %v5421 = vld [vmem:[%s5416 + $0x20] sm:$0xff]
    %v5422 = vld [vmem:[%s5416 + $0x28] sm:$0xff]
    %v5423 = vld [vmem:[%s5416 + $0x30] sm:$0xff]
    %v5424 = vld [vmem:[%s5416 + $0x38] sm:$0xff]
    %v5425 = vld [vmem:[%s5416 + $0x40] sm:$0xff]
    %v5426 = vld [vmem:[%s5416 + $0x48] sm:$0xff]
    %v5427 = vld [vmem:[%s5416 + $0x50] sm:$0xff]
    %v5428 = vld [vmem:[%s5416 + $0x58] sm:$0xff]
    %v5429 = vld [vmem:[%s5416 + $0x60] sm:$0xff]
    %v5430 = vld [vmem:[%s5416 + $0x68] sm:$0xff]
    %v5431 = vld [vmem:[%s5416 + $0x70] sm:$0xff]
    %v5432 = vld [vmem:[%s5416 + $0x78] sm:$0xff]
    %v5434 = vsel %vm1140, %v5157, 0
    %v5437 = vsel %vm1140, %v5158, 0
    %5439 = vmatprep.subr.mxu0 0.0
    %5440 = vmatpush1.msra.mxu0 0.0
    %5441 = vmatprep.subr.mxu0 0.0
    %5442 = vmatpush1.msra.mxu0 0.0
    %5443 = vmatprep.subr.mxu0 0.0
    %5444 = vmatpush1.msra.mxu0 0.0
    %5445 = vmatprep.subr.mxu0 0.0
    %5446 = vmatpush1.msra.mxu0 0.0
    %5447 = vmatprep.subr.mxu0 0.0
    %5448 = vmatpush1.msra.mxu0 0.0
    %5449 = vmatprep.subr.mxu0 0.0
    %5450 = vmatpush1.msra.mxu0 0.0
    %5451 = vmatprep.subr.mxu0 0.0
    %5452 = vmatpush1.msra.mxu0 0.0
    %5453 = vmatprep.subr.mxu0 0.0
    %5454 = vmatpush1.msra.mxu0 0.0
    %5455 = vmatprep.subr.mxu0 %v5432
    %5456 = vmatpush1.msra.mxu0 %v5431
    %5457 = vmatprep.subr.mxu0 %v5430
    %5458 = vmatpush1.msra.mxu0 %v5429
    %5459 = vmatprep.subr.mxu0 %v5428
    %5460 = vmatpush1.msra.mxu0 %v5427
    %5461 = vmatprep.subr.mxu0 %v5426
    %5462 = vmatpush1.msra.mxu0 %v5425
    %5463 = vmatprep.subr.mxu0 %v5424
    %5464 = vmatpush1.msra.mxu0 %v5423
    %5465 = vmatprep.subr.mxu0 %v5422
    %5466 = vmatpush1.msra.mxu0 %v5421
    %5467 = vmatprep.subr.mxu0 %v5420
    %5468 = vmatpush1.msra.mxu0 %v5419
    %5469 = vmatprep.subr.mxu0 %v5418
    %5470 = vmatpush1.msra.mxu0 %v5417
    %5471 = vmatprep.subr.mxu0 0.0
    %5472 = vmatpush2.msra.mxu0 0.0
    %5473 = vmatprep.subr.mxu0 0.0
    %5474 = vmatpush2.msra.mxu0 0.0
    %5475 = vmatprep.subr.mxu0 0.0
    %5476 = vmatpush2.msra.mxu0 0.0
    %5477 = vmatprep.subr.mxu0 0.0
    %5478 = vmatpush2.msra.mxu0 0.0
    %5479 = vmatprep.subr.mxu0 0.0
    %5480 = vmatpush2.msra.mxu0 0.0
    %5481 = vmatprep.subr.mxu0 0.0
    %5482 = vmatpush2.msra.mxu0 0.0
    %5483 = vmatprep.subr.mxu0 0.0
    %5484 = vmatpush2.msra.mxu0 0.0
    %5485 = vmatprep.subr.mxu0 0.0
    %5486 = vmatpush2.msra.mxu0 0.0
    %5487 = vmatprep.subr.mxu0 0.0
    %5488 = vmatpush2.msra.mxu0 0.0
    %5489 = vmatprep.subr.mxu0 0.0
    %5490 = vmatpush2.msra.mxu0 0.0
    %5491 = vmatprep.subr.mxu0 0.0
    %5492 = vmatpush2.msra.mxu0 0.0
    %5493 = vmatprep.subr.mxu0 0.0
    %5494 = vmatpush2.msra.mxu0 0.0
    %5495 = vmatprep.subr.mxu0 0.0
    %5496 = vmatpush2.msra.mxu0 0.0
    %5497 = vmatprep.subr.mxu0 0.0
    %5498 = vmatpush2.msra.mxu0 0.0
    %5499 = vmatprep.subr.mxu0 0.0
    %5500 = vmatpush2.msra.mxu0 0.0
    %5501 = vmatprep.subr.mxu0 0.0
    %5502 = vmatpush2.msra.mxu0 0.0
    %5503 = vmatprep.mubr.f32.mxu0 0.0
    %5504 = vmatmul.mubr.f32.gmra.mxu0 %v5314
    %v5505 = vpop.f32.mrf.mxu0
    %v5506 = vadd.f32 0.0, %v5505
    %v5507 = vpop.f32.mrf.mxu0
    %v5508 = vadd.f32 0.0, %v5507
    %5509 = vmatprep.mubr.f32.mxu0 0.0
    %5510 = vmatmul.mubr.f32.gmra.mxu0 %v5317
    %v5511 = vpop.f32.mrf.mxu0
    %v5512 = vadd.f32 0.0, %v5511
    %v5513 = vpop.f32.mrf.mxu0
    %v5514 = vadd.f32 0.0, %v5513
    %5515 = vmatprep.mubr.f32.mxu0 0.0
    %5516 = vmatmul.mubr.f32.gmra.mxu0 %v5434
    %v5517 = vpop.f32.mrf.mxu0
    %v5518 = vadd.f32 0.0, %v5517
    %v5519 = vpop.f32.mrf.mxu0
    %v5520 = vadd.f32 0.0, %v5519
    %5521 = vmatprep.mubr.f32.mxu0 0.0
    %5522 = vmatmul.mubr.f32.gmra.mxu0 %v5437
    %v5523 = vpop.f32.mrf.mxu0
    %v5524 = vadd.f32 0.0, %v5523
    %v5525 = vpop.f32.mrf.mxu0
    %v5526 = vadd.f32 0.0, %v5525
    %5527 = vdwg.mxu0
    %v5528 = vadd.f32 %v5408, %v5506
    %v5529 = vadd.f32 %v5409, %v5508
    %v5530 = vadd.f32 %v5410, %v5512
    %v5531 = vadd.f32 %v5411, %v5514
    %v5532 = vadd.f32 %v5412, %v5518
    %v5533 = vadd.f32 %v5413, %v5520
    %v5534 = vadd.f32 %v5414, %v5524
    %v5535 = vadd.f32 %v5415, %v5526
    %v5536 = vsub.f32 0.0, %v5528
    %v5537 = vsub.f32 0.0, %v5530
    %v5538 = vsub.f32 0.0, %v5532
    %v5539 = vsub.f32 0.0, %v5534
    %v5540 = vmul.f32 %v5536, 1.442695
    %v5541 = vpow.pop %v5540
    %v5542 = vmul.f32 %v5537, 1.442695
    %v5543 = vpow.pop %v5542
    %v5544 = vmul.f32 %v5538, 1.442695
    %v5545 = vpow.pop %v5544
    %v5546 = vmul.f32 %v5539, 1.442695
    %v5547 = vpow.pop %v5546
    %v5548 = vadd.f32 %v5541, 1.0
    %v5549 = vadd.f32 %v5543, 1.0
    %v5550 = vadd.f32 %v5545, 1.0
    %v5551 = vadd.f32 %v5547, 1.0
    %v5552 = vrcp.pop %v5548
    %v5553 = vrcp.pop %v5549
    %v5554 = vrcp.pop %v5550
    %v5555 = vrcp.pop %v5551
    %5560 = vrot.lane.b32.xlu0 %v5552, 64
    %v5561 = vpop.permute.xlu0 %5560
    %5562 = vrot.lane.b32.xlu0 %v5553, 64
    %v5563 = vpop.permute.xlu0 %5562
    %5564 = vrot.lane.b32.xlu0 %v5554, 64
    %v5565 = vpop.permute.xlu0 %5564
    %5566 = vrot.lane.b32.xlu0 %v5555, 64
    %v5567 = vpop.permute.xlu0 %5566
    %v5572 = vadd.f32 %v5528, %v5561
    %v5573 = vadd.f32 %v5530, %v5563
    %v5574 = vadd.f32 %v5532, %v5565
    %v5575 = vadd.f32 %v5534, %v5567
    %v5576 = vadd.f32 %v5572, %v5529
    %v5577 = vadd.f32 %v5573, %v5531
    %v5578 = vadd.f32 %v5574, %v5533
    %v5579 = vadd.f32 %v5575, %v5535
    %v5580 = vmax.f32 %v5576, 0.0
    %v5581 = vmax.f32 %v5577, 0.0
    %v5582 = vmax.f32 %v5578, 0.0
    %v5583 = vmax.f32 %v5579, 0.0
    %v5584 = vld [vmem:[%s23] sm:$0x3]
    %v5586 = vsel %vm1406, %v5584, 0
    %5588 = vmatprep.subr.mxu0 0.0
    %5589 = vmatpush1.msra.mxu0 0.0
    %5590 = vmatprep.subr.mxu0 0.0
    %5591 = vmatpush1.msra.mxu0 0.0
    %5592 = vmatprep.subr.mxu0 0.0
    %5593 = vmatpush1.msra.mxu0 0.0
    %5594 = vmatprep.subr.mxu0 0.0
    %5595 = vmatpush1.msra.mxu0 0.0
    %5596 = vmatprep.subr.mxu0 0.0
    %5597 = vmatpush1.msra.mxu0 0.0
    %5598 = vmatprep.subr.mxu0 0.0
    %5599 = vmatpush1.msra.mxu0 0.0
    %5600 = vmatprep.subr.mxu0 0.0
    %5601 = vmatpush1.msra.mxu0 0.0
    %5602 = vmatprep.subr.mxu0 0.0
    %5603 = vmatpush1.msra.mxu0 0.0
    %5604 = vmatprep.subr.mxu0 0.0
    %5605 = vmatpush1.msra.mxu0 0.0
    %5606 = vmatprep.subr.mxu0 0.0
    %5607 = vmatpush1.msra.mxu0 0.0
    %5608 = vmatprep.subr.mxu0 0.0
    %5609 = vmatpush1.msra.mxu0 0.0
    %5610 = vmatprep.subr.mxu0 0.0
    %5611 = vmatpush1.msra.mxu0 0.0
    %5612 = vmatprep.subr.mxu0 0.0
    %5613 = vmatpush1.msra.mxu0 %v5583
    %5614 = vmatprep.subr.mxu0 0.0
    %5615 = vmatpush1.msra.mxu0 %v5582
    %5616 = vmatprep.subr.mxu0 0.0
    %5617 = vmatpush1.msra.mxu0 %v5581
    %5618 = vmatprep.subr.mxu0 0.0
    %5619 = vmatpush1.msra.mxu0 %v5580
    %5620 = vmatprep.subr.mxu0 0.0
    %5621 = vmatpush2.msra.mxu0 0.0
    %5622 = vmatprep.subr.mxu0 0.0
    %5623 = vmatpush2.msra.mxu0 0.0
    %5624 = vmatprep.subr.mxu0 0.0
    %5625 = vmatpush2.msra.mxu0 0.0
    %5626 = vmatprep.subr.mxu0 0.0
    %5627 = vmatpush2.msra.mxu0 0.0
    %5628 = vmatprep.subr.mxu0 0.0
    %5629 = vmatpush2.msra.mxu0 0.0
    %5630 = vmatprep.subr.mxu0 0.0
    %5631 = vmatpush2.msra.mxu0 0.0
    %5632 = vmatprep.subr.mxu0 0.0
    %5633 = vmatpush2.msra.mxu0 0.0
    %5634 = vmatprep.subr.mxu0 0.0
    %5635 = vmatpush2.msra.mxu0 0.0
    %5636 = vmatprep.subr.mxu0 0.0
    %5637 = vmatpush2.msra.mxu0 0.0
    %5638 = vmatprep.subr.mxu0 0.0
    %5639 = vmatpush2.msra.mxu0 0.0
    %5640 = vmatprep.subr.mxu0 0.0
    %5641 = vmatpush2.msra.mxu0 0.0
    %5642 = vmatprep.subr.mxu0 0.0
    %5643 = vmatpush2.msra.mxu0 0.0
    %5644 = vmatprep.subr.mxu0 0.0
    %5645 = vmatpush2.msra.mxu0 0.0
    %5646 = vmatprep.subr.mxu0 0.0
    %5647 = vmatpush2.msra.mxu0 0.0
    %5648 = vmatprep.subr.mxu0 0.0
    %5649 = vmatpush2.msra.mxu0 0.0
    %5650 = vmatprep.subr.mxu0 0.0
    %5651 = vmatpush2.msra.mxu0 0.0
    %5652 = vmatprep.mubr.f32.mxu0 0.0
    %5653 = vmatmul.mubr.f32.gmra.mxu0 %v5586
    %v5654 = vpop.f32.mrf.mxu0
    %v5655 = vadd.f32 0.0, %v5654
    %v5656 = vpop.f32.mrf.mxu0
    %5657 = vdwg.mxu0
    %v5658 = vld [vmem:[%s24] sm:$0xff]
    %v5659 = vld [vmem:[%s24 + $0x8] sm:$0xff]
    %v5660 = vld [vmem:[%s24 + $0x10] sm:$0xff]
    %v5661 = vld [vmem:[%s24 + $0x18] sm:$0xff]
    %v5662 = vld [vmem:[%s24 + $0x20] sm:$0xff]
    %v5663 = vld [vmem:[%s24 + $0x28] sm:$0xff]
    %v5664 = vld [vmem:[%s24 + $0x30] sm:$0xff]
    %v5665 = vld [vmem:[%s24 + $0x38] sm:$0xff]
    %s5666 = scalar_lea.vmem %s23, 2
    %v5667 = vld [vmem:[%s5666] sm:$0x3]
    %v5669 = vsel %vm1406, %v5667, 0
    %5671 = vmatprep.subr.mxu0 0.0
    %5672 = vmatpush1.msra.mxu0 0.0
    %5673 = vmatprep.subr.mxu0 0.0
    %5674 = vmatpush1.msra.mxu0 0.0
    %5675 = vmatprep.subr.mxu0 0.0
    %5676 = vmatpush1.msra.mxu0 0.0
    %5677 = vmatprep.subr.mxu0 0.0
    %5678 = vmatpush1.msra.mxu0 0.0
    %5679 = vmatprep.subr.mxu0 0.0
    %5680 = vmatpush1.msra.mxu0 0.0
    %5681 = vmatprep.subr.mxu0 0.0
    %5682 = vmatpush1.msra.mxu0 0.0
    %5683 = vmatprep.subr.mxu0 0.0
    %5684 = vmatpush1.msra.mxu0 0.0
    %5685 = vmatprep.subr.mxu0 0.0
    %5686 = vmatpush1.msra.mxu0 0.0
    %5687 = vmatprep.subr.mxu0 0.0
    %5688 = vmatpush1.msra.mxu0 0.0
    %5689 = vmatprep.subr.mxu0 0.0
    %5690 = vmatpush1.msra.mxu0 0.0
    %5691 = vmatprep.subr.mxu0 0.0
    %5692 = vmatpush1.msra.mxu0 0.0
    %5693 = vmatprep.subr.mxu0 0.0
    %5694 = vmatpush1.msra.mxu0 0.0
    %5695 = vmatprep.subr.mxu0 0.0
    %5696 = vmatpush1.msra.mxu0 %v5583
    %5697 = vmatprep.subr.mxu0 0.0
    %5698 = vmatpush1.msra.mxu0 %v5582
    %5699 = vmatprep.subr.mxu0 0.0
    %5700 = vmatpush1.msra.mxu0 %v5581
    %5701 = vmatprep.subr.mxu0 0.0
    %5702 = vmatpush1.msra.mxu0 %v5580
    %5703 = vmatprep.subr.mxu0 0.0
    %5704 = vmatpush2.msra.mxu0 0.0
    %5705 = vmatprep.subr.mxu0 0.0
    %5706 = vmatpush2.msra.mxu0 0.0
    %5707 = vmatprep.subr.mxu0 0.0
    %5708 = vmatpush2.msra.mxu0 0.0
    %5709 = vmatprep.subr.mxu0 0.0
    %5710 = vmatpush2.msra.mxu0 0.0
    %5711 = vmatprep.subr.mxu0 0.0
    %5712 = vmatpush2.msra.mxu0 0.0
    %5713 = vmatprep.subr.mxu0 0.0
    %5714 = vmatpush2.msra.mxu0 0.0
    %5715 = vmatprep.subr.mxu0 0.0
    %5716 = vmatpush2.msra.mxu0 0.0
    %5717 = vmatprep.subr.mxu0 0.0
    %5718 = vmatpush2.msra.mxu0 0.0
    %5719 = vmatprep.subr.mxu0 0.0
    %5720 = vmatpush2.msra.mxu0 0.0
    %5721 = vmatprep.subr.mxu0 0.0
    %5722 = vmatpush2.msra.mxu0 0.0
    %5723 = vmatprep.subr.mxu0 0.0
    %5724 = vmatpush2.msra.mxu0 0.0
    %5725 = vmatprep.subr.mxu0 0.0
    %5726 = vmatpush2.msra.mxu0 0.0
    %5727 = vmatprep.subr.mxu0 0.0
    %5728 = vmatpush2.msra.mxu0 0.0
    %5729 = vmatprep.subr.mxu0 0.0
    %5730 = vmatpush2.msra.mxu0 0.0
    %5731 = vmatprep.subr.mxu0 0.0
    %5732 = vmatpush2.msra.mxu0 0.0
    %5733 = vmatprep.subr.mxu0 0.0
    %5734 = vmatpush2.msra.mxu0 0.0
    %5735 = vmatprep.mubr.f32.mxu0 0.0
    %5736 = vmatmul.mubr.f32.gmra.mxu0 %v5669
    %v5737 = vpop.f32.mrf.mxu0
    %v5738 = vadd.f32 0.0, %v5737
    %v5739 = vpop.f32.mrf.mxu0
    %5740 = vdwg.mxu0
    %s5741 = scalar_lea.vmem %s24, 64
    %v5742 = vld [vmem:[%s5741] sm:$0xff]
    %v5743 = vld [vmem:[%s5741 + $0x8] sm:$0xff]
    %v5744 = vld [vmem:[%s5741 + $0x10] sm:$0xff]
    %v5745 = vld [vmem:[%s5741 + $0x18] sm:$0xff]
    %v5746 = vld [vmem:[%s5741 + $0x20] sm:$0xff]
    %v5747 = vld [vmem:[%s5741 + $0x28] sm:$0xff]
    %v5748 = vld [vmem:[%s5741 + $0x30] sm:$0xff]
    %v5749 = vld [vmem:[%s5741 + $0x38] sm:$0xff]
    %v5751 = vsel %vm1140, %v5738, 0
    %5753 = vmatprep.subr.mxu0 0.0
    %5754 = vmatpush1.msra.mxu0 0.0
    %5755 = vmatprep.subr.mxu0 0.0
    %5756 = vmatpush1.msra.mxu0 0.0
    %5757 = vmatprep.subr.mxu0 0.0
    %5758 = vmatpush1.msra.mxu0 0.0
    %5759 = vmatprep.subr.mxu0 0.0
    %5760 = vmatpush1.msra.mxu0 0.0
    %5761 = vmatprep.subr.mxu0 0.0
    %5762 = vmatpush1.msra.mxu0 0.0
    %5763 = vmatprep.subr.mxu0 0.0
    %5764 = vmatpush1.msra.mxu0 0.0
    %5765 = vmatprep.subr.mxu0 0.0
    %5766 = vmatpush1.msra.mxu0 0.0
    %5767 = vmatprep.subr.mxu0 0.0
    %5768 = vmatpush1.msra.mxu0 0.0
    %5769 = vmatprep.subr.mxu0 0.0
    %5770 = vmatpush1.msra.mxu0 %v5749
    %5771 = vmatprep.subr.mxu0 0.0
    %5772 = vmatpush1.msra.mxu0 %v5748
    %5773 = vmatprep.subr.mxu0 0.0
    %5774 = vmatpush1.msra.mxu0 %v5747
    %5775 = vmatprep.subr.mxu0 0.0
    %5776 = vmatpush1.msra.mxu0 %v5746
    %5777 = vmatprep.subr.mxu0 0.0
    %5778 = vmatpush1.msra.mxu0 %v5745
    %5779 = vmatprep.subr.mxu0 0.0
    %5780 = vmatpush1.msra.mxu0 %v5744
    %5781 = vmatprep.subr.mxu0 0.0
    %5782 = vmatpush1.msra.mxu0 %v5743
    %5783 = vmatprep.subr.mxu0 0.0
    %5784 = vmatpush1.msra.mxu0 %v5742
    %5785 = vmatprep.subr.mxu0 0.0
    %5786 = vmatpush2.msra.mxu0 0.0
    %5787 = vmatprep.subr.mxu0 0.0
    %5788 = vmatpush2.msra.mxu0 0.0
    %5789 = vmatprep.subr.mxu0 0.0
    %5790 = vmatpush2.msra.mxu0 0.0
    %5791 = vmatprep.subr.mxu0 0.0
    %5792 = vmatpush2.msra.mxu0 0.0
    %5793 = vmatprep.subr.mxu0 0.0
    %5794 = vmatpush2.msra.mxu0 0.0
    %5795 = vmatprep.subr.mxu0 0.0
    %5796 = vmatpush2.msra.mxu0 0.0
    %5797 = vmatprep.subr.mxu0 0.0
    %5798 = vmatpush2.msra.mxu0 0.0
    %5799 = vmatprep.subr.mxu0 0.0
    %5800 = vmatpush2.msra.mxu0 0.0
    %5801 = vmatprep.subr.mxu0 0.0
    %5802 = vmatpush2.msra.mxu0 0.0
    %5803 = vmatprep.subr.mxu0 0.0
    %5804 = vmatpush2.msra.mxu0 0.0
    %5805 = vmatprep.subr.mxu0 0.0
    %5806 = vmatpush2.msra.mxu0 0.0
    %5807 = vmatprep.subr.mxu0 0.0
    %5808 = vmatpush2.msra.mxu0 0.0
    %5809 = vmatprep.subr.mxu0 0.0
    %5810 = vmatpush2.msra.mxu0 0.0
    %5811 = vmatprep.subr.mxu0 0.0
    %5812 = vmatpush2.msra.mxu0 0.0
    %5813 = vmatprep.subr.mxu0 0.0
    %5814 = vmatpush2.msra.mxu0 0.0
    %5815 = vmatprep.subr.mxu0 0.0
    %5816 = vmatpush2.msra.mxu0 0.0
    %5817 = vmatprep.mubr.f32.mxu0 0.0
    %5818 = vmatmul.mubr.f32.gmra.mxu0 %v5751
    %v5819 = vpop.f32.mrf.mxu0
    %v5820 = vadd.f32 0.0, %v5819
    %v5821 = vpop.f32.mrf.mxu0
    %5822 = vdwg.mxu0
    %v5824 = vsel %vm1140, %v5655, 0
    %5826 = vmatprep.subr.mxu0 0.0
    %5827 = vmatpush1.msra.mxu0 0.0
    %5828 = vmatprep.subr.mxu0 0.0
    %5829 = vmatpush1.msra.mxu0 0.0
    %5830 = vmatprep.subr.mxu0 0.0
    %5831 = vmatpush1.msra.mxu0 0.0
    %5832 = vmatprep.subr.mxu0 0.0
    %5833 = vmatpush1.msra.mxu0 0.0
    %5834 = vmatprep.subr.mxu0 0.0
    %5835 = vmatpush1.msra.mxu0 0.0
    %5836 = vmatprep.subr.mxu0 0.0
    %5837 = vmatpush1.msra.mxu0 0.0
    %5838 = vmatprep.subr.mxu0 0.0
    %5839 = vmatpush1.msra.mxu0 0.0
    %5840 = vmatprep.subr.mxu0 0.0
    %5841 = vmatpush1.msra.mxu0 0.0
    %5842 = vmatprep.subr.mxu0 0.0
    %5843 = vmatpush1.msra.mxu0 %v5665
    %5844 = vmatprep.subr.mxu0 0.0
    %5845 = vmatpush1.msra.mxu0 %v5664
    %5846 = vmatprep.subr.mxu0 0.0
    %5847 = vmatpush1.msra.mxu0 %v5663
    %5848 = vmatprep.subr.mxu0 0.0
    %5849 = vmatpush1.msra.mxu0 %v5662
    %5850 = vmatprep.subr.mxu0 0.0
    %5851 = vmatpush1.msra.mxu0 %v5661
    %5852 = vmatprep.subr.mxu0 0.0
    %5853 = vmatpush1.msra.mxu0 %v5660
    %5854 = vmatprep.subr.mxu0 0.0
    %5855 = vmatpush1.msra.mxu0 %v5659
    %5856 = vmatprep.subr.mxu0 0.0
    %5857 = vmatpush1.msra.mxu0 %v5658
    %5858 = vmatprep.subr.mxu0 0.0
    %5859 = vmatpush2.msra.mxu0 0.0
    %5860 = vmatprep.subr.mxu0 0.0
    %5861 = vmatpush2.msra.mxu0 0.0
    %5862 = vmatprep.subr.mxu0 0.0
    %5863 = vmatpush2.msra.mxu0 0.0
    %5864 = vmatprep.subr.mxu0 0.0
    %5865 = vmatpush2.msra.mxu0 0.0
    %5866 = vmatprep.subr.mxu0 0.0
    %5867 = vmatpush2.msra.mxu0 0.0
    %5868 = vmatprep.subr.mxu0 0.0
    %5869 = vmatpush2.msra.mxu0 0.0
    %5870 = vmatprep.subr.mxu0 0.0
    %5871 = vmatpush2.msra.mxu0 0.0
    %5872 = vmatprep.subr.mxu0 0.0
    %5873 = vmatpush2.msra.mxu0 0.0
    %5874 = vmatprep.subr.mxu0 0.0
    %5875 = vmatpush2.msra.mxu0 0.0
    %5876 = vmatprep.subr.mxu0 0.0
    %5877 = vmatpush2.msra.mxu0 0.0
    %5878 = vmatprep.subr.mxu0 0.0
    %5879 = vmatpush2.msra.mxu0 0.0
    %5880 = vmatprep.subr.mxu0 0.0
    %5881 = vmatpush2.msra.mxu0 0.0
    %5882 = vmatprep.subr.mxu0 0.0
    %5883 = vmatpush2.msra.mxu0 0.0
    %5884 = vmatprep.subr.mxu0 0.0
    %5885 = vmatpush2.msra.mxu0 0.0
    %5886 = vmatprep.subr.mxu0 0.0
    %5887 = vmatpush2.msra.mxu0 0.0
    %5888 = vmatprep.subr.mxu0 0.0
    %5889 = vmatpush2.msra.mxu0 0.0
    %5890 = vmatprep.mubr.f32.mxu0 0.0
    %5891 = vmatmul.mubr.f32.gmra.mxu0 %v5824
    %v5892 = vpop.f32.mrf.mxu0
    %v5893 = vadd.f32 %v5820, %v5892
    %v5894 = vpop.f32.mrf.mxu0
    %5895 = vdwg.mxu0
    %v5896 = vld [vmem:[%s25] sm:$0x1]
    %v5898 = vlaneseq
    %v5899 = vshrl.u32 %v5898, 7
    %v5900 = vsub.s32 0, %v5899
    %v5901 = vrot.slane %v5896, %v5900
    %v5903 = vadd.f32 %v5893, %v5901
    %vm5904 = vcmask 33792
    %5905 = vst.msk [vmem:[#allocation2] sm:$0x3] %vm5904, %v5903
    // Predicated region
    $region106: #{asl_stgcn_forward.1} parent=1 // pred_check
      _
    $region107: #{asl_stgcn_forward.1} parent=1 // pred_check_branch
      %5907 = sbr.rel (0) target = $region109
    $region108: #{asl_stgcn_forward.1} parent=1 // pred_region
      %s5909 = ssub.s32 32, 32
      %5910 = vsyncadd [#allocation3], %s5909
      %s5912 = sshll.u32 [#allocation2], 4
      %s5913 = int_to_ptr.vmem [resolvable:$true] %s5912
      %5915 = dma.vmem_to_hbm [thread:$0]  %s5913, 32, %s26, [#allocation3]
    $region109: #{asl_stgcn_forward.1} parent=1 // pred_fallthru
      _
    // Predicated region
    $region110: #{asl_stgcn_forward.1} parent=1 // pred_check
      _
    $region111: #{asl_stgcn_forward.1} parent=1 // pred_check_branch
      %5917 = sbr.rel (0) target = $region113
    $region112: #{asl_stgcn_forward.1} parent=1 // pred_region
      %5918 = dma.done [#allocation3], 32
    $region113: #{asl_stgcn_forward.1} parent=1 // pred_fallthru
      _
    %5919 = vsyncpa [#allocation3], 1

</llo_original>
